<compile_context>
chip_gen: v7x
topology: tpu7x:2x2x1
jax: 0.10.0
libtpu: 0.0.40
codegen_flags: <defaults>
</compile_context>

<pallas_src>
import jax
import jax.numpy as jnp
from jax.experimental import pallas as pl
from jax.experimental.pallas import tpu as pltpu


def _round_up(n, m):
    return -(-n // m) * m


def _rnn_selfconfid_kernel(x_ref, pw_ref, pb_ref, wx_ref, uh_ref, bx_ref,
                           bhn_ref, fcw_ref, fcb_ref,
                           fc_out_ref, h_out_ref,
                           xg_scr, seq_scr):
    """One batch-tile of the whole forward.

    x_ref   : (T, TB, D)    time-major inputs for this batch tile
    pw_ref  : (D, GP)       projection weight (lane-padded)   pb_ref: (1, GP)
    wx_ref  : (L, GP, 3GP)  fused input->hidden GRU weights, gates (r|z|n),
                            one 128-lane group per gate
    uh_ref  : (L, GP, 3GP)  fused hidden->hidden GRU weights
    bx_ref  : (L, 1, 3GP)   fused input-side biases (b_ir+b_hr, b_iz+b_hz, b_in)
    bhn_ref : (L, 1, GP)    hidden-side n-gate bias (stays inside r * (.))
    fcw_ref : (GP, 1)       fc weight (zero rows beyond H)    fcb_ref: (1, 1)
    outputs : fc_out (TB, 1), h_out (TB, H)
    scratch : xg_scr (T, TB, 3GP), seq_scr (T, TB, GP)   [VMEM]
    """
    T, TB, D = x_ref.shape
    GP = pw_ref.shape[1]           # per-gate width, padded to a 128-lane group
    L = wx_ref.shape[0]
    G = 3 * GP
    H = h_out_ref.shape[1]
    cdt = pw_ref.dtype             # MXU operand dtype (bf16 or f32)

    # ---- Linear projection + ReLU: ONE MXU matmul over all T*TB rows. ----
    # Input is already time-major, so every later per-step read is a
    # contiguous row slab; padded lanes [H:GP) are exactly 0 everywhere.
    x2d = x_ref[...].reshape(T * TB, D)
    seq = jnp.maximum(
        jnp.dot(x2d.astype(cdt), pw_ref[...],
                preferred_element_type=jnp.float32) + pb_ref[...], 0.0)

    h = jnp.zeros((TB, GP), jnp.float32)
    for l in range(L):                                  # static layer loop
        last_layer = l == L - 1

        # Hoisted input-side gate matmul for the whole sequence (+ fused
        # biases), off the serial chain, parked in VMEM scratch.
        src = seq if l == 0 else seq_scr[...].reshape(T * TB, GP)
        xg_scr[...] = (jnp.dot(src.astype(cdt), wx_ref[l],
                               preferred_element_type=jnp.float32)
                       + bx_ref[l]).reshape(T, TB, G)

        bhn_l = jnp.broadcast_to(bhn_ref[l], (TB, GP))  # broadcast hoisted

        def step(t, h, l=l, last=last_layer, bhn=bhn_l):
            xg_t = xg_scr[t]                            # (TB, 3GP) contiguous
            # Single fused hidden-side matmul: the only MXU op on the chain.
            hg = jnp.dot(h.astype(cdt), uh_ref[l],
                         preferred_element_type=jnp.float32)
            # Gates live in their own 128-lane groups -> slices are vreg
            # selects; r and z share one sigmoid (EUP) issue.
            rz = jax.nn.sigmoid(xg_t[:, :2 * GP] + hg[:, :2 * GP])
            r = rz[:, :GP]
            z = rz[:, GP:]
            n = jnp.tanh(xg_t[:, 2 * GP:] + r * (hg[:, 2 * GP:] + bhn))
            h_new = (1.0 - z) * n + z * h
            if not last:
                seq_scr[t] = h_new                      # next layer's input
            return h_new

        # Recurrence: modest unroll keeps LLO scheduler visibility while
        # bounding live ranges / code size at realistic T.
        h = jax.lax.fori_loop(0, T, step,
                              jnp.zeros((TB, GP), jnp.float32),
                              unroll=min(T, 8))

    # ---- fc head + sigmoid on the last time step (prediction_index = -1) ----
    # fcw has zero rows beyond H, so no gate slicing is needed for the head.
    logits = (jnp.dot(h, fcw_ref[...], preferred_element_type=jnp.float32)
              + fcb_ref[...])
    fc_out_ref[...] = jax.nn.sigmoid(logits)            # (TB, 1)
    h_out_ref[...] = h[:, :H]                           # one-time slice


def fuse_params(params, mxu_dtype=jnp.bfloat16):
    """One-time parameter preprocessing — call once and cache, NOT per forward.

    * fuses per-gate GRU weights/biases into (r|z|n) blocks
    * pads every gate to its own 128-lane group so in-kernel gate slices are
      vreg selects (no padding when H is already a multiple of 128)
    * combines b_ir+b_hr and b_iz+b_hz; keeps b_hn separate (inside r*(.))
    * casts MXU-operand weights to `mxu_dtype` (bf16 default); biases and all
      in-kernel accumulation / VPU / EUP math stay f32.
    """
    pw, pb, wih, whh, bih, bhh, fcw, fcb = params
    D, H = pw.shape
    L = wih.shape[0] // 3
    # Layer-0 GRU input dim must equal the projection output dim.
    assert wih.shape[1] == H and whh.shape[1] == H
    GP = _round_up(H, 128)

    def pad(a, shape):
        return jnp.pad(a, [(0, s - d) for d, s in zip(a.shape, shape)])

    def fuse_w(w3):                       # 3 x (H, H) -> (GP, 3*GP)
        return pad(jnp.concatenate([pad(w, (H, GP)) for w in w3], axis=1),
                   (GP, 3 * GP))

    wx = jnp.stack([fuse_w([wih[3 * l + g] for g in range(3)])
                    for l in range(L)])                           # (L, GP, 3GP)
    uh = jnp.stack([fuse_w([whh[3 * l + g] for g in range(3)])
                    for l in range(L)])                           # (L, GP, 3GP)
    bx = jnp.stack([
        jnp.concatenate([pad(bih[3 * l] + bhh[3 * l], (1, GP)),          # r
                         pad(bih[3 * l + 1] + bhh[3 * l + 1], (1, GP)),  # z
                         pad(bih[3 * l + 2], (1, GP))], axis=1)          # n (x)
        for l in range(L)])                                       # (L, 1, 3GP)
    bhn = jnp.stack([pad(bhh[3 * l + 2], (1, GP)) for l in range(L)])

    return dict(
        pw=pad(pw, (D, GP)).astype(mxu_dtype),
        pb=pad(pb, (1, GP)),
        wx=wx.astype(mxu_dtype),
        uh=uh.astype(mxu_dtype),
        bx=bx,
        bhn=bhn,
        fcw=pad(fcw, (GP, 1)),
        fcb=fcb,
        hidden_dim=H,
    )


def rnn_selfconfid_forward(x, fused, *, batch_tile=None):
    """x: (B, T, D) batch-first, like the PyTorch module (batch_first=True).

    `fused` is the cached output of fuse_params().
    """
    B, T, D = x.shape
    H = fused["hidden_dim"]
    pw, pb, wx, uh, bx, bhn, fcw, fcb = (fused[k] for k in
                                         ("pw", "pb", "wx", "uh", "bx",
                                          "bhn", "fcw", "fcb"))
    GP = pw.shape[1]
    L = wx.shape[0]
    G = 3 * GP

    # One-time batch-first -> time-major re-order OUTSIDE the recurrence so
    # every per-step gate read in the kernel is a contiguous row slab.
    x_tbd = jnp.transpose(x, (1, 0, 2))                        # (T, B, D)

    # Batch-parallel grid: rows of the recurrence are independent, so tiling
    # the batch axis is exact; on v7x this spreads programs over both
    # TensorCores (single program at tiny B, harmless on v5e/v6e).
    if batch_tile is None:
        batch_tile = B if B <= 8 else (8 if B % 8 == 0 else B)
    tb = batch_tile
    assert B % tb == 0, "batch size must be divisible by the batch tile"
    grid = (B // tb,)

    rep2 = lambda b: (0, 0)
    rep3 = lambda b: (0, 0, 0)
    in_specs = [
        pl.BlockSpec((T, tb, D), lambda b: (0, b, 0)),         # x (time-major)
        pl.BlockSpec((D, GP), rep2),                           # projection W
        pl.BlockSpec((1, GP), rep2),                           # projection b
        pl.BlockSpec((L, GP, G), rep3),                        # fused W_ix
        pl.BlockSpec((L, GP, G), rep3),                        # fused W_hx
        pl.BlockSpec((L, 1, G), rep3),                         # fused input biases
        pl.BlockSpec((L, 1, GP), rep3),                        # b_hn
        pl.BlockSpec((GP, 1), rep2),                           # fc W (row-padded)
        pl.BlockSpec((1, 1), rep2),                            # fc b
    ]
    # TODO(synk): fc_out last dim is 1 (masked partial store) — fold into a
    # lane-dense slab if the head ever widens (multioutput=True path).
    out_specs = (pl.BlockSpec((tb, 1), lambda b: (b, 0)),      # sigmoid(fc(h_T))
                 pl.BlockSpec((tb, H), lambda b: (b, 0)))      # h_T

    flops = (2 * B * T * D * GP                                # projection
             + L * 2 * B * T * GP * G                          # hoisted x-gates
             + L * T * 2 * B * GP * G                          # recurrent h-gates
             + 2 * B * GP)                                     # fc head
    transcendentals = L * T * B * G + B
    bytes_accessed = int(sum(a.size * a.dtype.itemsize
                             for a in (x, pw, pb, wx, uh, bx, bhn, fcw, fcb))
                         + 4 * (B + B * H))

    fc_out, h_out = pl.pallas_call(
        _rnn_selfconfid_kernel,
        grid=grid,
        out_shape=(jax.ShapeDtypeStruct((B, 1), jnp.float32),
                   jax.ShapeDtypeStruct((B, H), jnp.float32)),
        in_specs=in_specs,
        out_specs=out_specs,
        scratch_shapes=[pltpu.VMEM((T, tb, G), jnp.float32),   # hoisted x-gates
                        pltpu.VMEM((T, tb, GP), jnp.float32)], # layer output seq
        compiler_params=pltpu.CompilerParams(
            dimension_semantics=("parallel",)),
        cost_estimate=pl.CostEstimate(flops=flops,
                                      transcendentals=transcendentals,
                                      bytes_accessed=bytes_accessed),
    )(x_tbd, pw, pb, wx, uh, bx, bhn, fcw, fcb)
    return fc_out, h_out


def init_params(key, input_dim, hidden_dim, num_layers):
    """Deterministic synthetic parameters (PyTorch-style uniform ranges)."""
    ks = jax.random.split(key, 8)

    def uni(k, shape, fan_in):
        bound = float(fan_in) ** -0.5
        return jax.random.uniform(k, shape, jnp.float32, -bound, bound)

    pw = uni(ks[0], (input_dim, hidden_dim), input_dim)            # projection
    pb = uni(ks[1], (1, hidden_dim), input_dim)
    wih = uni(ks[2], (3 * num_layers, hidden_dim, hidden_dim), hidden_dim)
    whh = uni(ks[3], (3 * num_layers, hidden_dim, hidden_dim), hidden_dim)
    bih = uni(ks[4], (3 * num_layers, 1, hidden_dim), hidden_dim)
    bhh = uni(ks[5], (3 * num_layers, 1, hidden_dim), hidden_dim)
    fcw = uni(ks[6], (hidden_dim, 1), hidden_dim)                  # fc head
    fcb = uni(ks[7], (1, 1), hidden_dim)
    return pw, pb, wih, whh, bih, bhh, fcw, fcb


def reference_forward(x, params):
    """Pure-JAX reference mirroring the PyTorch forward (default args, f32)."""
    pw, pb, wih, whh, bih, bhh, fcw, fcb = params
    B, T, _ = x.shape
    H = pw.shape[1]
    L = wih.shape[0] // 3
    seq = jax.nn.relu(jnp.einsum('btd,dh->bth', x, pw) + pb[None])
    seq = jnp.transpose(seq, (1, 0, 2))                            # (T, B, H)
    for l in range(L):
        h = jnp.zeros((B, H), jnp.float32)
        outs = []
        for t in range(T):
            xt = seq[t]
            r = jax.nn.sigmoid(xt @ wih[3 * l + 0] + bih[3 * l + 0]
                               + h @ whh[3 * l + 0] + bhh[3 * l + 0])
            z = jax.nn.sigmoid(xt @ wih[3 * l + 1] + bih[3 * l + 1]
                               + h @ whh[3 * l + 1] + bhh[3 * l + 1])
            n = jnp.tanh(xt @ wih[3 * l + 2] + bih[3 * l + 2]
                         + r * (h @ whh[3 * l + 2] + bhh[3 * l + 2]))
            h = (1.0 - z) * n + z * h
            outs.append(h)
        seq = jnp.stack(outs, 0)
    h_final = seq[-1]
    fc = jax.nn.sigmoid(h_final @ fcw + fcb)
    return fc, h_final


if __name__ == "__main__":
    # Small shapes consistent with the module: batch=2, seq=8,
    # input_dim=32, hidden_dim=32, num_layers=2, GRU cell.
    B, T, D, H, L = 2, 8, 32, 32, 2
    key = jax.random.PRNGKey(0)
    kx, kp = jax.random.split(key)
    x = jax.random.normal(kx, (B, T, D), jnp.float32)
    params = init_params(kp, D, H, L)

    fc_ref, h_ref = reference_forward(x, params)

    # f32 MXU operands: tight correctness check against the reference.
    fused_f32 = fuse_params(params, mxu_dtype=jnp.float32)     # done once, cached
    fc32, h32 = rnn_selfconfid_forward(x, fused_f32)
    jax.block_until_ready((fc32, h32))
    assert fc32.shape == (B, 1) and h32.shape == (B, H)
    assert jnp.allclose(fc32, fc_ref, atol=1e-5, rtol=1e-5)
    assert jnp.allclose(h32, h_ref, atol=1e-5, rtol=1e-5)

    # bf16 MXU operands (default perf path on v5e/v6e/v7x): f32 accumulation,
    # f32 gate math — loose sanity check against the f32 reference.
    fused_bf16 = fuse_params(params)                           # mxu_dtype=bf16
    fc16, h16 = rnn_selfconfid_forward(x, fused_bf16)
    jax.block_until_ready((fc16, h16))
    assert fc16.shape == (B, 1) and h16.shape == (B, H)
    assert jnp.allclose(fc16, fc_ref, atol=5e-2, rtol=5e-2)
    assert jnp.allclose(h16, h_ref, atol=5e-2, rtol=5e-2)

    print("KERNEL_OK")
</pallas_src>

<mosaic_0001>
module attributes {stable_mosaic.version = 11 : i64} {
  func.func @_rnn_selfconfid_kernel(%arg0: i32, %arg1: memref<8x2x32xf32, #tpu.memory_space<vmem>>, %arg2: memref<32x128xf32, #tpu.memory_space<vmem>>, %arg3: memref<1x128xf32, #tpu.memory_space<vmem>>, %arg4: memref<2x128x384xf32, #tpu.memory_space<vmem>>, %arg5: memref<2x128x384xf32, #tpu.memory_space<vmem>>, %arg6: memref<2x1x384xf32, #tpu.memory_space<vmem>>, %arg7: memref<2x1x128xf32, #tpu.memory_space<vmem>>, %arg8: memref<128x1xf32, #tpu.memory_space<vmem>>, %arg9: memref<1x1xf32, #tpu.memory_space<vmem>>, %arg10: memref<2x1xf32, #tpu.memory_space<vmem>>, %arg11: memref<2x32xf32, #tpu.memory_space<vmem>>, %arg12: memref<8x2x384xf32, #tpu.memory_space<vmem>>, %arg13: memref<8x2x128xf32, #tpu.memory_space<vmem>>) attributes {dimension_semantics = [#tpu.dimension_semantics<parallel>], iteration_bounds = array<i64: 1>, scalar_prefetch = 0 : i64, scratch_operands = 2 : i64, tpu.core_type = #tpu.core_type<tc>, window_params = [{transform_indices = @transform_0, window_bounds = array<i64: 8, 2, 32>}, {pipeline_mode = #tpu.pipeline_mode<synchronous>, transform_indices = @transform_1, window_bounds = array<i64: 32, 128>}, {pipeline_mode = #tpu.pipeline_mode<synchronous>, transform_indices = @transform_2, window_bounds = array<i64: 1, 128>}, {pipeline_mode = #tpu.pipeline_mode<synchronous>, transform_indices = @transform_3, window_bounds = array<i64: 2, 128, 384>}, {pipeline_mode = #tpu.pipeline_mode<synchronous>, transform_indices = @transform_4, window_bounds = array<i64: 2, 128, 384>}, {pipeline_mode = #tpu.pipeline_mode<synchronous>, transform_indices = @transform_5, window_bounds = array<i64: 2, 1, 384>}, {pipeline_mode = #tpu.pipeline_mode<synchronous>, transform_indices = @transform_6, window_bounds = array<i64: 2, 1, 128>}, {pipeline_mode = #tpu.pipeline_mode<synchronous>, transform_indices = @transform_7, window_bounds = array<i64: 128, 1>}, {pipeline_mode = #tpu.pipeline_mode<synchronous>, transform_indices = @transform_8, window_bounds = array<i64: 1, 1>}, {transform_indices = @transform_9, window_bounds = array<i64: 2, 1>}, {transform_indices = @transform_10, window_bounds = array<i64: 2, 32>}]} {
    %c0 = arith.constant 0 : index
    %c0_0 = arith.constant 0 : index
    %c0_1 = arith.constant 0 : index
    %0 = vector.load %arg1[%c0, %c0_0, %c0_1] : memref<8x2x32xf32, #tpu.memory_space<vmem>>, vector<8x2x32xf32>
    %1 = vector.shape_cast %0 : vector<8x2x32xf32> to vector<16x32xf32>
    %c0_2 = arith.constant 0 : index
    %c0_3 = arith.constant 0 : index
    %2 = vector.load %arg2[%c0_2, %c0_3] : memref<32x128xf32, #tpu.memory_space<vmem>>, vector<32x128xf32>
    %cst = arith.constant dense<0.000000e+00> : vector<16x128xf32>
    %3 = tpu.matmul %1, %2, %cst {dimension_numbers = #tpu.dot_dimension_numbers<[1], [0], [0], [1], [0, 0, 1, 1], [], []>} : vector<16x32xf32>, vector<32x128xf32>, vector<16x128xf32> -> vector<16x128xf32>
    %c0_4 = arith.constant 0 : index
    %c0_5 = arith.constant 0 : index
    %4 = vector.load %arg3[%c0_4, %c0_5] : memref<1x128xf32, #tpu.memory_space<vmem>>, vector<1x128xf32>
    %5 = vector.broadcast %4 : vector<1x128xf32> to vector<16x128xf32>
    %6 = arith.addf %3, %5 : vector<16x128xf32>
    %cst_6 = arith.constant 0.000000e+00 : f32
    %7 = vector.broadcast %cst_6 : f32 to vector<16x128xf32>
    %8 = arith.maximumf %6, %7 : vector<16x128xf32>
    %c0_7 = arith.constant 0 : index
    %c0_8 = arith.constant 0 : index
    %c0_9 = arith.constant 0 : index
    %9 = vector.load %arg4[%c0_7, %c0_8, %c0_9] : memref<2x128x384xf32, #tpu.memory_space<vmem>>, vector<1x128x384xf32>
    %10 = vector.shape_cast %9 : vector<1x128x384xf32> to vector<128x384xf32>
    %cst_10 = arith.constant dense<0.000000e+00> : vector<16x384xf32>
    %11 = tpu.matmul %8, %10, %cst_10 {dimension_numbers = #tpu.dot_dimension_numbers<[1], [0], [0], [1], [0, 0, 1, 1], [], []>} : vector<16x128xf32>, vector<128x384xf32>, vector<16x384xf32> -> vector<16x384xf32>
    %c0_11 = arith.constant 0 : index
    %c0_12 = arith.constant 0 : index
    %c0_13 = arith.constant 0 : index
    %12 = vector.load %arg6[%c0_11, %c0_12, %c0_13] : memref<2x1x384xf32, #tpu.memory_space<vmem>>, vector<1x1x384xf32>
    %13 = vector.shape_cast %12 : vector<1x1x384xf32> to vector<1x384xf32>
    %14 = vector.broadcast %13 : vector<1x384xf32> to vector<16x384xf32>
    %15 = arith.addf %11, %14 : vector<16x384xf32>
    %16 = vector.shape_cast %15 : vector<16x384xf32> to vector<8x2x384xf32>
    %c0_14 = arith.constant 0 : index
    %c0_15 = arith.constant 0 : index
    %c0_16 = arith.constant 0 : index
    %17 = vector.load %arg12[%c0_14, %c0_15, %c0_16] : memref<8x2x384xf32, #tpu.memory_space<vmem>>, vector<8x2x384xf32>
    tpu.vector_store %arg12[%c0_14, %c0_15, %c0_16], %16 {strides = array<i32>} : memref<8x2x384xf32, #tpu.memory_space<vmem>>, vector<8x2x384xf32>,
    %c0_17 = arith.constant 0 : index
    %c0_18 = arith.constant 0 : index
    %c0_19 = arith.constant 0 : index
    %18 = vector.load %arg7[%c0_17, %c0_18, %c0_19] : memref<2x1x128xf32, #tpu.memory_space<vmem>>, vector<1x1x128xf32>
    %19 = vector.shape_cast %18 : vector<1x1x128xf32> to vector<1x128xf32>
    %20 = vector.shape_cast %19 : vector<1x128xf32> to vector<1x128xf32>
    %21 = vector.broadcast %20 : vector<1x128xf32> to vector<2x128xf32>
    %cst_20 = arith.constant 0.000000e+00 : f32
    %22 = vector.broadcast %cst_20 : f32 to vector<2x128xf32>
    %c0_i32 = arith.constant 0 : i32
    %23 = arith.index_cast %c0_i32 : i32 to index
    %c0_21 = arith.constant 0 : index
    %c0_22 = arith.constant 0 : index
    %24 = vector.load %arg12[%23, %c0_21, %c0_22] : memref<8x2x384xf32, #tpu.memory_space<vmem>>, vector<1x2x384xf32>
    %25 = vector.shape_cast %24 : vector<1x2x384xf32> to vector<2x384xf32>
    %c0_23 = arith.constant 0 : index
    %c0_24 = arith.constant 0 : index
    %c0_25 = arith.constant 0 : index
    %26 = vector.load %arg5[%c0_23, %c0_24, %c0_25] : memref<2x128x384xf32, #tpu.memory_space<vmem>>, vector<1x128x384xf32>
    %27 = vector.shape_cast %26 : vector<1x128x384xf32> to vector<128x384xf32>
    %cst_26 = arith.constant dense<0.000000e+00> : vector<2x384xf32>
    %28 = tpu.matmul %22, %27, %cst_26 {dimension_numbers = #tpu.dot_dimension_numbers<[1], [0], [0], [1], [0, 0, 1, 1], [], []>} : vector<2x128xf32>, vector<128x384xf32>, vector<2x384xf32> -> vector<2x384xf32>
    %29 = vector.extract_strided_slice %25 {offsets = [0, 0], sizes = [2, 256], strides = [1, 1]} : vector<2x384xf32> to vector<2x256xf32>
    %30 = vector.extract_strided_slice %28 {offsets = [0, 0], sizes = [2, 256], strides = [1, 1]} : vector<2x384xf32> to vector<2x256xf32>
    %31 = arith.addf %29, %30 : vector<2x256xf32>
    %32 = arith.negf %31 : vector<2x256xf32>
    %33 = math.exp %32 : vector<2x256xf32>
    %cst_27 = arith.constant 1.000000e+00 : f32
    %34 = vector.broadcast %cst_27 : f32 to vector<2x256xf32>
    %35 = arith.addf %34, %33 : vector<2x256xf32>
    %36 = arith.divf %34, %35 : vector<2x256xf32>
    %37 = vector.extract_strided_slice %36 {offsets = [0, 0], sizes = [2, 128], strides = [1, 1]} : vector<2x256xf32> to vector<2x128xf32>
    %38 = vector.extract_strided_slice %36 {offsets = [0, 128], sizes = [2, 128], strides = [1, 1]} : vector<2x256xf32> to vector<2x128xf32>
    %39 = vector.extract_strided_slice %25 {offsets = [0, 256], sizes = [2, 128], strides = [1, 1]} : vector<2x384xf32> to vector<2x128xf32>
    %40 = vector.extract_strided_slice %28 {offsets = [0, 256], sizes = [2, 128], strides = [1, 1]} : vector<2x384xf32> to vector<2x128xf32>
    %41 = arith.addf %40, %21 : vector<2x128xf32>
    %42 = arith.mulf %37, %41 : vector<2x128xf32>
    %43 = arith.addf %39, %42 : vector<2x128xf32>
    %44 = math.tanh %43 : vector<2x128xf32>
    %cst_28 = arith.constant 1.000000e+00 : f32
    %45 = vector.broadcast %cst_28 : f32 to vector<2x128xf32>
    %46 = arith.subf %45, %38 : vector<2x128xf32>
    %47 = arith.mulf %46, %44 : vector<2x128xf32>
    %48 = arith.mulf %38, %22 : vector<2x128xf32>
    %49 = arith.addf %47, %48 : vector<2x128xf32>
    %50 = arith.index_cast %c0_i32 : i32 to index
    %c0_29 = arith.constant 0 : index
    %c0_30 = arith.constant 0 : index
    %51 = vector.load %arg13[%50, %c0_29, %c0_30] : memref<8x2x128xf32, #tpu.memory_space<vmem>>, vector<1x2x128xf32>
    %52 = vector.shape_cast %51 : vector<1x2x128xf32> to vector<2x128xf32>
    %53 = vector.shape_cast %49 : vector<2x128xf32> to vector<1x2x128xf32>
    tpu.vector_store %arg13[%50, %c0_29, %c0_30], %53 {strides = array<i32>} : memref<8x2x128xf32, #tpu.memory_space<vmem>>, vector<1x2x128xf32>,
    %c1_i32 = arith.constant 1 : i32
    %54 = arith.index_cast %c1_i32 : i32 to index
    %c0_31 = arith.constant 0 : index
    %c0_32 = arith.constant 0 : index
    %55 = vector.load %arg12[%54, %c0_31, %c0_32] : memref<8x2x384xf32, #tpu.memory_space<vmem>>, vector<1x2x384xf32>
    %56 = vector.shape_cast %55 : vector<1x2x384xf32> to vector<2x384xf32>
    %c0_33 = arith.constant 0 : index
    %c0_34 = arith.constant 0 : index
    %c0_35 = arith.constant 0 : index
    %57 = vector.load %arg5[%c0_33, %c0_34, %c0_35] : memref<2x128x384xf32, #tpu.memory_space<vmem>>, vector<1x128x384xf32>
    %58 = vector.shape_cast %57 : vector<1x128x384xf32> to vector<128x384xf32>
    %cst_36 = arith.constant dense<0.000000e+00> : vector<2x384xf32>
    %59 = tpu.matmul %49, %58, %cst_36 {dimension_numbers = #tpu.dot_dimension_numbers<[1], [0], [0], [1], [0, 0, 1, 1], [], []>} : vector<2x128xf32>, vector<128x384xf32>, vector<2x384xf32> -> vector<2x384xf32>
    %60 = vector.extract_strided_slice %56 {offsets = [0, 0], sizes = [2, 256], strides = [1, 1]} : vector<2x384xf32> to vector<2x256xf32>
    %61 = vector.extract_strided_slice %59 {offsets = [0, 0], sizes = [2, 256], strides = [1, 1]} : vector<2x384xf32> to vector<2x256xf32>
    %62 = arith.addf %60, %61 : vector<2x256xf32>
    %63 = arith.negf %62 : vector<2x256xf32>
    %64 = math.exp %63 : vector<2x256xf32>
    %cst_37 = arith.constant 1.000000e+00 : f32
    %65 = vector.broadcast %cst_37 : f32 to vector<2x256xf32>
    %66 = arith.addf %65, %64 : vector<2x256xf32>
    %67 = arith.divf %65, %66 : vector<2x256xf32>
    %68 = vector.extract_strided_slice %67 {offsets = [0, 0], sizes = [2, 128], strides = [1, 1]} : vector<2x256xf32> to vector<2x128xf32>
    %69 = vector.extract_strided_slice %67 {offsets = [0, 128], sizes = [2, 128], strides = [1, 1]} : vector<2x256xf32> to vector<2x128xf32>
    %70 = vector.extract_strided_slice %56 {offsets = [0, 256], sizes = [2, 128], strides = [1, 1]} : vector<2x384xf32> to vector<2x128xf32>
    %71 = vector.extract_strided_slice %59 {offsets = [0, 256], sizes = [2, 128], strides = [1, 1]} : vector<2x384xf32> to vector<2x128xf32>
    %72 = arith.addf %71, %21 : vector<2x128xf32>
    %73 = arith.mulf %68, %72 : vector<2x128xf32>
    %74 = arith.addf %70, %73 : vector<2x128xf32>
    %75 = math.tanh %74 : vector<2x128xf32>
    %cst_38 = arith.constant 1.000000e+00 : f32
    %76 = vector.broadcast %cst_38 : f32 to vector<2x128xf32>
    %77 = arith.subf %76, %69 : vector<2x128xf32>
    %78 = arith.mulf %77, %75 : vector<2x128xf32>
    %79 = arith.mulf %69, %49 : vector<2x128xf32>
    %80 = arith.addf %78, %79 : vector<2x128xf32>
    %81 = arith.index_cast %c1_i32 : i32 to index
    %c0_39 = arith.constant 0 : index
    %c0_40 = arith.constant 0 : index
    %82 = vector.load %arg13[%81, %c0_39, %c0_40] : memref<8x2x128xf32, #tpu.memory_space<vmem>>, vector<1x2x128xf32>
    %83 = vector.shape_cast %82 : vector<1x2x128xf32> to vector<2x128xf32>
    %84 = vector.shape_cast %80 : vector<2x128xf32> to vector<1x2x128xf32>
    tpu.vector_store %arg13[%81, %c0_39, %c0_40], %84 {strides = array<i32>} : memref<8x2x128xf32, #tpu.memory_space<vmem>>, vector<1x2x128xf32>,
    %c2_i32 = arith.constant 2 : i32
    %85 = arith.index_cast %c2_i32 : i32 to index
    %c0_41 = arith.constant 0 : index
    %c0_42 = arith.constant 0 : index
    %86 = vector.load %arg12[%85, %c0_41, %c0_42] : memref<8x2x384xf32, #tpu.memory_space<vmem>>, vector<1x2x384xf32>
    %87 = vector.shape_cast %86 : vector<1x2x384xf32> to vector<2x384xf32>
    %c0_43 = arith.constant 0 : index
    %c0_44 = arith.constant 0 : index
    %c0_45 = arith.constant 0 : index
    %88 = vector.load %arg5[%c0_43, %c0_44, %c0_45] : memref<2x128x384xf32, #tpu.memory_space<vmem>>, vector<1x128x384xf32>
    %89 = vector.shape_cast %88 : vector<1x128x384xf32> to vector<128x384xf32>
    %cst_46 = arith.constant dense<0.000000e+00> : vector<2x384xf32>
    %90 = tpu.matmul %80, %89, %cst_46 {dimension_numbers = #tpu.dot_dimension_numbers<[1], [0], [0], [1], [0, 0, 1, 1], [], []>} : vector<2x128xf32>, vector<128x384xf32>, vector<2x384xf32> -> vector<2x384xf32>
    %91 = vector.extract_strided_slice %87 {offsets = [0, 0], sizes = [2, 256], strides = [1, 1]} : vector<2x384xf32> to vector<2x256xf32>
    %92 = vector.extract_strided_slice %90 {offsets = [0, 0], sizes = [2, 256], strides = [1, 1]} : vector<2x384xf32> to vector<2x256xf32>
    %93 = arith.addf %91, %92 : vector<2x256xf32>
    %94 = arith.negf %93 : vector<2x256xf32>
    %95 = math.exp %94 : vector<2x256xf32>
    %cst_47 = arith.constant 1.000000e+00 : f32
    %96 = vector.broadcast %cst_47 : f32 to vector<2x256xf32>
    %97 = arith.addf %96, %95 : vector<2x256xf32>
    %98 = arith.divf %96, %97 : vector<2x256xf32>
    %99 = vector.extract_strided_slice %98 {offsets = [0, 0], sizes = [2, 128], strides = [1, 1]} : vector<2x256xf32> to vector<2x128xf32>
    %100 = vector.extract_strided_slice %98 {offsets = [0, 128], sizes = [2, 128], strides = [1, 1]} : vector<2x256xf32> to vector<2x128xf32>
    %101 = vector.extract_strided_slice %87 {offsets = [0, 256], sizes = [2, 128], strides = [1, 1]} : vector<2x384xf32> to vector<2x128xf32>
    %102 = vector.extract_strided_slice %90 {offsets = [0, 256], sizes = [2, 128], strides = [1, 1]} : vector<2x384xf32> to vector<2x128xf32>
    %103 = arith.addf %102, %21 : vector<2x128xf32>
    %104 = arith.mulf %99, %103 : vector<2x128xf32>
    %105 = arith.addf %101, %104 : vector<2x128xf32>
    %106 = math.tanh %105 : vector<2x128xf32>
    %cst_48 = arith.constant 1.000000e+00 : f32
    %107 = vector.broadcast %cst_48 : f32 to vector<2x128xf32>
    %108 = arith.subf %107, %100 : vector<2x128xf32>
    %109 = arith.mulf %108, %106 : vector<2x128xf32>
    %110 = arith.mulf %100, %80 : vector<2x128xf32>
    %111 = arith.addf %109, %110 : vector<2x128xf32>
    %112 = arith.index_cast %c2_i32 : i32 to index
    %c0_49 = arith.constant 0 : index
    %c0_50 = arith.constant 0 : index
    %113 = vector.load %arg13[%112, %c0_49, %c0_50] : memref<8x2x128xf32, #tpu.memory_space<vmem>>, vector<1x2x128xf32>
    %114 = vector.shape_cast %113 : vector<1x2x128xf32> to vector<2x128xf32>
    %115 = vector.shape_cast %111 : vector<2x128xf32> to vector<1x2x128xf32>
    tpu.vector_store %arg13[%112, %c0_49, %c0_50], %115 {strides = array<i32>} : memref<8x2x128xf32, #tpu.memory_space<vmem>>, vector<1x2x128xf32>,
    %c3_i32 = arith.constant 3 : i32
    %116 = arith.index_cast %c3_i32 : i32 to index
    %c0_51 = arith.constant 0 : index
    %c0_52 = arith.constant 0 : index
    %117 = vector.load %arg12[%116, %c0_51, %c0_52] : memref<8x2x384xf32, #tpu.memory_space<vmem>>, vector<1x2x384xf32>
    %118 = vector.shape_cast %117 : vector<1x2x384xf32> to vector<2x384xf32>
    %c0_53 = arith.constant 0 : index
    %c0_54 = arith.constant 0 : index
    %c0_55 = arith.constant 0 : index
    %119 = vector.load %arg5[%c0_53, %c0_54, %c0_55] : memref<2x128x384xf32, #tpu.memory_space<vmem>>, vector<1x128x384xf32>
    %120 = vector.shape_cast %119 : vector<1x128x384xf32> to vector<128x384xf32>
    %cst_56 = arith.constant dense<0.000000e+00> : vector<2x384xf32>
    %121 = tpu.matmul %111, %120, %cst_56 {dimension_numbers = #tpu.dot_dimension_numbers<[1], [0], [0], [1], [0, 0, 1, 1], [], []>} : vector<2x128xf32>, vector<128x384xf32>, vector<2x384xf32> -> vector<2x384xf32>
    %122 = vector.extract_strided_slice %118 {offsets = [0, 0], sizes = [2, 256], strides = [1, 1]} : vector<2x384xf32> to vector<2x256xf32>
    %123 = vector.extract_strided_slice %121 {offsets = [0, 0], sizes = [2, 256], strides = [1, 1]} : vector<2x384xf32> to vector<2x256xf32>
    %124 = arith.addf %122, %123 : vector<2x256xf32>
    %125 = arith.negf %124 : vector<2x256xf32>
    %126 = math.exp %125 : vector<2x256xf32>
    %cst_57 = arith.constant 1.000000e+00 : f32
    %127 = vector.broadcast %cst_57 : f32 to vector<2x256xf32>
    %128 = arith.addf %127, %126 : vector<2x256xf32>
    %129 = arith.divf %127, %128 : vector<2x256xf32>
    %130 = vector.extract_strided_slice %129 {offsets = [0, 0], sizes = [2, 128], strides = [1, 1]} : vector<2x256xf32> to vector<2x128xf32>
    %131 = vector.extract_strided_slice %129 {offsets = [0, 128], sizes = [2, 128], strides = [1, 1]} : vector<2x256xf32> to vector<2x128xf32>
    %132 = vector.extract_strided_slice %118 {offsets = [0, 256], sizes = [2, 128], strides = [1, 1]} : vector<2x384xf32> to vector<2x128xf32>
    %133 = vector.extract_strided_slice %121 {offsets = [0, 256], sizes = [2, 128], strides = [1, 1]} : vector<2x384xf32> to vector<2x128xf32>
    %134 = arith.addf %133, %21 : vector<2x128xf32>
    %135 = arith.mulf %130, %134 : vector<2x128xf32>
    %136 = arith.addf %132, %135 : vector<2x128xf32>
    %137 = math.tanh %136 : vector<2x128xf32>
    %cst_58 = arith.constant 1.000000e+00 : f32
    %138 = vector.broadcast %cst_58 : f32 to vector<2x128xf32>
    %139 = arith.subf %138, %131 : vector<2x128xf32>
    %140 = arith.mulf %139, %137 : vector<2x128xf32>
    %141 = arith.mulf %131, %111 : vector<2x128xf32>
    %142 = arith.addf %140, %141 : vector<2x128xf32>
    %143 = arith.index_cast %c3_i32 : i32 to index
    %c0_59 = arith.constant 0 : index
    %c0_60 = arith.constant 0 : index
    %144 = vector.load %arg13[%143, %c0_59, %c0_60] : memref<8x2x128xf32, #tpu.memory_space<vmem>>, vector<1x2x128xf32>
    %145 = vector.shape_cast %144 : vector<1x2x128xf32> to vector<2x128xf32>
    %146 = vector.shape_cast %142 : vector<2x128xf32> to vector<1x2x128xf32>
    tpu.vector_store %arg13[%143, %c0_59, %c0_60], %146 {strides = array<i32>} : memref<8x2x128xf32, #tpu.memory_space<vmem>>, vector<1x2x128xf32>,
    %c4_i32 = arith.constant 4 : i32
    %147 = arith.index_cast %c4_i32 : i32 to index
    %c0_61 = arith.constant 0 : index
    %c0_62 = arith.constant 0 : index
    %148 = vector.load %arg12[%147, %c0_61, %c0_62] : memref<8x2x384xf32, #tpu.memory_space<vmem>>, vector<1x2x384xf32>
    %149 = vector.shape_cast %148 : vector<1x2x384xf32> to vector<2x384xf32>
    %c0_63 = arith.constant 0 : index
    %c0_64 = arith.constant 0 : index
    %c0_65 = arith.constant 0 : index
    %150 = vector.load %arg5[%c0_63, %c0_64, %c0_65] : memref<2x128x384xf32, #tpu.memory_space<vmem>>, vector<1x128x384xf32>
    %151 = vector.shape_cast %150 : vector<1x128x384xf32> to vector<128x384xf32>
    %cst_66 = arith.constant dense<0.000000e+00> : vector<2x384xf32>
    %152 = tpu.matmul %142, %151, %cst_66 {dimension_numbers = #tpu.dot_dimension_numbers<[1], [0], [0], [1], [0, 0, 1, 1], [], []>} : vector<2x128xf32>, vector<128x384xf32>, vector<2x384xf32> -> vector<2x384xf32>
    %153 = vector.extract_strided_slice %149 {offsets = [0, 0], sizes = [2, 256], strides = [1, 1]} : vector<2x384xf32> to vector<2x256xf32>
    %154 = vector.extract_strided_slice %152 {offsets = [0, 0], sizes = [2, 256], strides = [1, 1]} : vector<2x384xf32> to vector<2x256xf32>
    %155 = arith.addf %153, %154 : vector<2x256xf32>
    %156 = arith.negf %155 : vector<2x256xf32>
    %157 = math.exp %156 : vector<2x256xf32>
    %cst_67 = arith.constant 1.000000e+00 : f32
    %158 = vector.broadcast %cst_67 : f32 to vector<2x256xf32>
    %159 = arith.addf %158, %157 : vector<2x256xf32>
    %160 = arith.divf %158, %159 : vector<2x256xf32>
    %161 = vector.extract_strided_slice %160 {offsets = [0, 0], sizes = [2, 128], strides = [1, 1]} : vector<2x256xf32> to vector<2x128xf32>
    %162 = vector.extract_strided_slice %160 {offsets = [0, 128], sizes = [2, 128], strides = [1, 1]} : vector<2x256xf32> to vector<2x128xf32>
    %163 = vector.extract_strided_slice %149 {offsets = [0, 256], sizes = [2, 128], strides = [1, 1]} : vector<2x384xf32> to vector<2x128xf32>
    %164 = vector.extract_strided_slice %152 {offsets = [0, 256], sizes = [2, 128], strides = [1, 1]} : vector<2x384xf32> to vector<2x128xf32>
    %165 = arith.addf %164, %21 : vector<2x128xf32>
    %166 = arith.mulf %161, %165 : vector<2x128xf32>
    %167 = arith.addf %163, %166 : vector<2x128xf32>
    %168 = math.tanh %167 : vector<2x128xf32>
    %cst_68 = arith.constant 1.000000e+00 : f32
    %169 = vector.broadcast %cst_68 : f32 to vector<2x128xf32>
    %170 = arith.subf %169, %162 : vector<2x128xf32>
    %171 = arith.mulf %170, %168 : vector<2x128xf32>
    %172 = arith.mulf %162, %142 : vector<2x128xf32>
    %173 = arith.addf %171, %172 : vector<2x128xf32>
    %174 = arith.index_cast %c4_i32 : i32 to index
    %c0_69 = arith.constant 0 : index
    %c0_70 = arith.constant 0 : index
    %175 = vector.load %arg13[%174, %c0_69, %c0_70] : memref<8x2x128xf32, #tpu.memory_space<vmem>>, vector<1x2x128xf32>
    %176 = vector.shape_cast %175 : vector<1x2x128xf32> to vector<2x128xf32>
    %177 = vector.shape_cast %173 : vector<2x128xf32> to vector<1x2x128xf32>
    tpu.vector_store %arg13[%174, %c0_69, %c0_70], %177 {strides = array<i32>} : memref<8x2x128xf32, #tpu.memory_space<vmem>>, vector<1x2x128xf32>,
    %c5_i32 = arith.constant 5 : i32
    %178 = arith.index_cast %c5_i32 : i32 to index
    %c0_71 = arith.constant 0 : index
    %c0_72 = arith.constant 0 : index
    %179 = vector.load %arg12[%178, %c0_71, %c0_72] : memref<8x2x384xf32, #tpu.memory_space<vmem>>, vector<1x2x384xf32>
    %180 = vector.shape_cast %179 : vector<1x2x384xf32> to vector<2x384xf32>
    %c0_73 = arith.constant 0 : index
    %c0_74 = arith.constant 0 : index
    %c0_75 = arith.constant 0 : index
    %181 = vector.load %arg5[%c0_73, %c0_74, %c0_75] : memref<2x128x384xf32, #tpu.memory_space<vmem>>, vector<1x128x384xf32>
    %182 = vector.shape_cast %181 : vector<1x128x384xf32> to vector<128x384xf32>
    %cst_76 = arith.constant dense<0.000000e+00> : vector<2x384xf32>
    %183 = tpu.matmul %173, %182, %cst_76 {dimension_numbers = #tpu.dot_dimension_numbers<[1], [0], [0], [1], [0, 0, 1, 1], [], []>} : vector<2x128xf32>, vector<128x384xf32>, vector<2x384xf32> -> vector<2x384xf32>
    %184 = vector.extract_strided_slice %180 {offsets = [0, 0], sizes = [2, 256], strides = [1, 1]} : vector<2x384xf32> to vector<2x256xf32>
    %185 = vector.extract_strided_slice %183 {offsets = [0, 0], sizes = [2, 256], strides = [1, 1]} : vector<2x384xf32> to vector<2x256xf32>
    %186 = arith.addf %184, %185 : vector<2x256xf32>
    %187 = arith.negf %186 : vector<2x256xf32>
    %188 = math.exp %187 : vector<2x256xf32>
    %cst_77 = arith.constant 1.000000e+00 : f32
    %189 = vector.broadcast %cst_77 : f32 to vector<2x256xf32>
    %190 = arith.addf %189, %188 : vector<2x256xf32>
    %191 = arith.divf %189, %190 : vector<2x256xf32>
    %192 = vector.extract_strided_slice %191 {offsets = [0, 0], sizes = [2, 128], strides = [1, 1]} : vector<2x256xf32> to vector<2x128xf32>
    %193 = vector.extract_strided_slice %191 {offsets = [0, 128], sizes = [2, 128], strides = [1, 1]} : vector<2x256xf32> to vector<2x128xf32>
    %194 = vector.extract_strided_slice %180 {offsets = [0, 256], sizes = [2, 128], strides = [1, 1]} : vector<2x384xf32> to vector<2x128xf32>
    %195 = vector.extract_strided_slice %183 {offsets = [0, 256], sizes = [2, 128], strides = [1, 1]} : vector<2x384xf32> to vector<2x128xf32>
    %196 = arith.addf %195, %21 : vector<2x128xf32>
    %197 = arith.mulf %192, %196 : vector<2x128xf32>
    %198 = arith.addf %194, %197 : vector<2x128xf32>
    %199 = math.tanh %198 : vector<2x128xf32>
    %cst_78 = arith.constant 1.000000e+00 : f32
    %200 = vector.broadcast %cst_78 : f32 to vector<2x128xf32>
    %201 = arith.subf %200, %193 : vector<2x128xf32>
    %202 = arith.mulf %201, %199 : vector<2x128xf32>
    %203 = arith.mulf %193, %173 : vector<2x128xf32>
    %204 = arith.addf %202, %203 : vector<2x128xf32>
    %205 = arith.index_cast %c5_i32 : i32 to index
    %c0_79 = arith.constant 0 : index
    %c0_80 = arith.constant 0 : index
    %206 = vector.load %arg13[%205, %c0_79, %c0_80] : memref<8x2x128xf32, #tpu.memory_space<vmem>>, vector<1x2x128xf32>
    %207 = vector.shape_cast %206 : vector<1x2x128xf32> to vector<2x128xf32>
    %208 = vector.shape_cast %204 : vector<2x128xf32> to vector<1x2x128xf32>
    tpu.vector_store %arg13[%205, %c0_79, %c0_80], %208 {strides = array<i32>} : memref<8x2x128xf32, #tpu.memory_space<vmem>>, vector<1x2x128xf32>,
    %c6_i32 = arith.constant 6 : i32
    %209 = arith.index_cast %c6_i32 : i32 to index
    %c0_81 = arith.constant 0 : index
    %c0_82 = arith.constant 0 : index
    %210 = vector.load %arg12[%209, %c0_81, %c0_82] : memref<8x2x384xf32, #tpu.memory_space<vmem>>, vector<1x2x384xf32>
    %211 = vector.shape_cast %210 : vector<1x2x384xf32> to vector<2x384xf32>
    %c0_83 = arith.constant 0 : index
    %c0_84 = arith.constant 0 : index
    %c0_85 = arith.constant 0 : index
    %212 = vector.load %arg5[%c0_83, %c0_84, %c0_85] : memref<2x128x384xf32, #tpu.memory_space<vmem>>, vector<1x128x384xf32>
    %213 = vector.shape_cast %212 : vector<1x128x384xf32> to vector<128x384xf32>
    %cst_86 = arith.constant dense<0.000000e+00> : vector<2x384xf32>
    %214 = tpu.matmul %204, %213, %cst_86 {dimension_numbers = #tpu.dot_dimension_numbers<[1], [0], [0], [1], [0, 0, 1, 1], [], []>} : vector<2x128xf32>, vector<128x384xf32>, vector<2x384xf32> -> vector<2x384xf32>
    %215 = vector.extract_strided_slice %211 {offsets = [0, 0], sizes = [2, 256], strides = [1, 1]} : vector<2x384xf32> to vector<2x256xf32>
    %216 = vector.extract_strided_slice %214 {offsets = [0, 0], sizes = [2, 256], strides = [1, 1]} : vector<2x384xf32> to vector<2x256xf32>
    %217 = arith.addf %215, %216 : vector<2x256xf32>
    %218 = arith.negf %217 : vector<2x256xf32>
    %219 = math.exp %218 : vector<2x256xf32>
    %cst_87 = arith.constant 1.000000e+00 : f32
    %220 = vector.broadcast %cst_87 : f32 to vector<2x256xf32>
    %221 = arith.addf %220, %219 : vector<2x256xf32>
    %222 = arith.divf %220, %221 : vector<2x256xf32>
    %223 = vector.extract_strided_slice %222 {offsets = [0, 0], sizes = [2, 128], strides = [1, 1]} : vector<2x256xf32> to vector<2x128xf32>
    %224 = vector.extract_strided_slice %222 {offsets = [0, 128], sizes = [2, 128], strides = [1, 1]} : vector<2x256xf32> to vector<2x128xf32>
    %225 = vector.extract_strided_slice %211 {offsets = [0, 256], sizes = [2, 128], strides = [1, 1]} : vector<2x384xf32> to vector<2x128xf32>
    %226 = vector.extract_strided_slice %214 {offsets = [0, 256], sizes = [2, 128], strides = [1, 1]} : vector<2x384xf32> to vector<2x128xf32>
    %227 = arith.addf %226, %21 : vector<2x128xf32>
    %228 = arith.mulf %223, %227 : vector<2x128xf32>
    %229 = arith.addf %225, %228 : vector<2x128xf32>
    %230 = math.tanh %229 : vector<2x128xf32>
    %cst_88 = arith.constant 1.000000e+00 : f32
    %231 = vector.broadcast %cst_88 : f32 to vector<2x128xf32>
    %232 = arith.subf %231, %224 : vector<2x128xf32>
    %233 = arith.mulf %232, %230 : vector<2x128xf32>
    %234 = arith.mulf %224, %204 : vector<2x128xf32>
    %235 = arith.addf %233, %234 : vector<2x128xf32>
    %236 = arith.index_cast %c6_i32 : i32 to index
    %c0_89 = arith.constant 0 : index
    %c0_90 = arith.constant 0 : index
    %237 = vector.load %arg13[%236, %c0_89, %c0_90] : memref<8x2x128xf32, #tpu.memory_space<vmem>>, vector<1x2x128xf32>
    %238 = vector.shape_cast %237 : vector<1x2x128xf32> to vector<2x128xf32>
    %239 = vector.shape_cast %235 : vector<2x128xf32> to vector<1x2x128xf32>
    tpu.vector_store %arg13[%236, %c0_89, %c0_90], %239 {strides = array<i32>} : memref<8x2x128xf32, #tpu.memory_space<vmem>>, vector<1x2x128xf32>,
    %c7_i32 = arith.constant 7 : i32
    %240 = arith.index_cast %c7_i32 : i32 to index
    %c0_91 = arith.constant 0 : index
    %c0_92 = arith.constant 0 : index
    %241 = vector.load %arg12[%240, %c0_91, %c0_92] : memref<8x2x384xf32, #tpu.memory_space<vmem>>, vector<1x2x384xf32>
    %242 = vector.shape_cast %241 : vector<1x2x384xf32> to vector<2x384xf32>
    %c0_93 = arith.constant 0 : index
    %c0_94 = arith.constant 0 : index
    %c0_95 = arith.constant 0 : index
    %243 = vector.load %arg5[%c0_93, %c0_94, %c0_95] : memref<2x128x384xf32, #tpu.memory_space<vmem>>, vector<1x128x384xf32>
    %244 = vector.shape_cast %243 : vector<1x128x384xf32> to vector<128x384xf32>
    %cst_96 = arith.constant dense<0.000000e+00> : vector<2x384xf32>
    %245 = tpu.matmul %235, %244, %cst_96 {dimension_numbers = #tpu.dot_dimension_numbers<[1], [0], [0], [1], [0, 0, 1, 1], [], []>} : vector<2x128xf32>, vector<128x384xf32>, vector<2x384xf32> -> vector<2x384xf32>
    %246 = vector.extract_strided_slice %242 {offsets = [0, 0], sizes = [2, 256], strides = [1, 1]} : vector<2x384xf32> to vector<2x256xf32>
    %247 = vector.extract_strided_slice %245 {offsets = [0, 0], sizes = [2, 256], strides = [1, 1]} : vector<2x384xf32> to vector<2x256xf32>
    %248 = arith.addf %246, %247 : vector<2x256xf32>
    %249 = arith.negf %248 : vector<2x256xf32>
    %250 = math.exp %249 : vector<2x256xf32>
    %cst_97 = arith.constant 1.000000e+00 : f32
    %251 = vector.broadcast %cst_97 : f32 to vector<2x256xf32>
    %252 = arith.addf %251, %250 : vector<2x256xf32>
    %253 = arith.divf %251, %252 : vector<2x256xf32>
    %254 = vector.extract_strided_slice %253 {offsets = [0, 0], sizes = [2, 128], strides = [1, 1]} : vector<2x256xf32> to vector<2x128xf32>
    %255 = vector.extract_strided_slice %253 {offsets = [0, 128], sizes = [2, 128], strides = [1, 1]} : vector<2x256xf32> to vector<2x128xf32>
    %256 = vector.extract_strided_slice %242 {offsets = [0, 256], sizes = [2, 128], strides = [1, 1]} : vector<2x384xf32> to vector<2x128xf32>
    %257 = vector.extract_strided_slice %245 {offsets = [0, 256], sizes = [2, 128], strides = [1, 1]} : vector<2x384xf32> to vector<2x128xf32>
    %258 = arith.addf %257, %21 : vector<2x128xf32>
    %259 = arith.mulf %254, %258 : vector<2x128xf32>
    %260 = arith.addf %256, %259 : vector<2x128xf32>
    %261 = math.tanh %260 : vector<2x128xf32>
    %cst_98 = arith.constant 1.000000e+00 : f32
    %262 = vector.broadcast %cst_98 : f32 to vector<2x128xf32>
    %263 = arith.subf %262, %255 : vector<2x128xf32>
    %264 = arith.mulf %263, %261 : vector<2x128xf32>
    %265 = arith.mulf %255, %235 : vector<2x128xf32>
    %266 = arith.addf %264, %265 : vector<2x128xf32>
    %267 = arith.index_cast %c7_i32 : i32 to index
    %c0_99 = arith.constant 0 : index
    %c0_100 = arith.constant 0 : index
    %268 = vector.load %arg13[%267, %c0_99, %c0_100] : memref<8x2x128xf32, #tpu.memory_space<vmem>>, vector<1x2x128xf32>
    %269 = vector.shape_cast %268 : vector<1x2x128xf32> to vector<2x128xf32>
    %270 = vector.shape_cast %266 : vector<2x128xf32> to vector<1x2x128xf32>
    tpu.vector_store %arg13[%267, %c0_99, %c0_100], %270 {strides = array<i32>} : memref<8x2x128xf32, #tpu.memory_space<vmem>>, vector<1x2x128xf32>,
    %c8_i32 = arith.constant 8 : i32
    %c0_101 = arith.constant 0 : index
    %c0_102 = arith.constant 0 : index
    %c0_103 = arith.constant 0 : index
    %271 = vector.load %arg13[%c0_101, %c0_102, %c0_103] : memref<8x2x128xf32, #tpu.memory_space<vmem>>, vector<8x2x128xf32>
    %272 = vector.shape_cast %271 : vector<8x2x128xf32> to vector<16x128xf32>
    %c1 = arith.constant 1 : index
    %c0_104 = arith.constant 0 : index
    %c0_105 = arith.constant 0 : index
    %273 = vector.load %arg4[%c1, %c0_104, %c0_105] : memref<2x128x384xf32, #tpu.memory_space<vmem>>, vector<1x128x384xf32>
    %274 = vector.shape_cast %273 : vector<1x128x384xf32> to vector<128x384xf32>
    %cst_106 = arith.constant dense<0.000000e+00> : vector<16x384xf32>
    %275 = tpu.matmul %272, %274, %cst_106 {dimension_numbers = #tpu.dot_dimension_numbers<[1], [0], [0], [1], [0, 0, 1, 1], [], []>} : vector<16x128xf32>, vector<128x384xf32>, vector<16x384xf32> -> vector<16x384xf32>
    %c1_107 = arith.constant 1 : index
    %c0_108 = arith.constant 0 : index
    %c0_109 = arith.constant 0 : index
    %276 = vector.load %arg6[%c1_107, %c0_108, %c0_109] : memref<2x1x384xf32, #tpu.memory_space<vmem>>, vector<1x1x384xf32>
    %277 = vector.shape_cast %276 : vector<1x1x384xf32> to vector<1x384xf32>
    %278 = vector.broadcast %277 : vector<1x384xf32> to vector<16x384xf32>
    %279 = arith.addf %275, %278 : vector<16x384xf32>
    %280 = vector.shape_cast %279 : vector<16x384xf32> to vector<8x2x384xf32>
    %c0_110 = arith.constant 0 : index
    %c0_111 = arith.constant 0 : index
    %c0_112 = arith.constant 0 : index
    %281 = vector.load %arg12[%c0_110, %c0_111, %c0_112] : memref<8x2x384xf32, #tpu.memory_space<vmem>>, vector<8x2x384xf32>
    tpu.vector_store %arg12[%c0_110, %c0_111, %c0_112], %280 {strides = array<i32>} : memref<8x2x384xf32, #tpu.memory_space<vmem>>, vector<8x2x384xf32>,
    %c1_113 = arith.constant 1 : index
    %c0_114 = arith.constant 0 : index
    %c0_115 = arith.constant 0 : index
    %282 = vector.load %arg7[%c1_113, %c0_114, %c0_115] : memref<2x1x128xf32, #tpu.memory_space<vmem>>, vector<1x1x128xf32>
    %283 = vector.shape_cast %282 : vector<1x1x128xf32> to vector<1x128xf32>
    %284 = vector.shape_cast %283 : vector<1x128xf32> to vector<1x128xf32>
    %285 = vector.broadcast %284 : vector<1x128xf32> to vector<2x128xf32>
    %cst_116 = arith.constant 0.000000e+00 : f32
    %286 = vector.broadcast %cst_116 : f32 to vector<2x128xf32>
    %c0_i32_117 = arith.constant 0 : i32
    %287 = arith.index_cast %c0_i32_117 : i32 to index
    %c0_118 = arith.constant 0 : index
    %c0_119 = arith.constant 0 : index
    %288 = vector.load %arg12[%287, %c0_118, %c0_119] : memref<8x2x384xf32, #tpu.memory_space<vmem>>, vector<1x2x384xf32>
    %289 = vector.shape_cast %288 : vector<1x2x384xf32> to vector<2x384xf32>
    %c1_120 = arith.constant 1 : index
    %c0_121 = arith.constant 0 : index
    %c0_122 = arith.constant 0 : index
    %290 = vector.load %arg5[%c1_120, %c0_121, %c0_122] : memref<2x128x384xf32, #tpu.memory_space<vmem>>, vector<1x128x384xf32>
    %291 = vector.shape_cast %290 : vector<1x128x384xf32> to vector<128x384xf32>
    %cst_123 = arith.constant dense<0.000000e+00> : vector<2x384xf32>
    %292 = tpu.matmul %286, %291, %cst_123 {dimension_numbers = #tpu.dot_dimension_numbers<[1], [0], [0], [1], [0, 0, 1, 1], [], []>} : vector<2x128xf32>, vector<128x384xf32>, vector<2x384xf32> -> vector<2x384xf32>
    %293 = vector.extract_strided_slice %289 {offsets = [0, 0], sizes = [2, 256], strides = [1, 1]} : vector<2x384xf32> to vector<2x256xf32>
    %294 = vector.extract_strided_slice %292 {offsets = [0, 0], sizes = [2, 256], strides = [1, 1]} : vector<2x384xf32> to vector<2x256xf32>
    %295 = arith.addf %293, %294 : vector<2x256xf32>
    %296 = arith.negf %295 : vector<2x256xf32>
    %297 = math.exp %296 : vector<2x256xf32>
    %cst_124 = arith.constant 1.000000e+00 : f32
    %298 = vector.broadcast %cst_124 : f32 to vector<2x256xf32>
    %299 = arith.addf %298, %297 : vector<2x256xf32>
    %300 = arith.divf %298, %299 : vector<2x256xf32>
    %301 = vector.extract_strided_slice %300 {offsets = [0, 0], sizes = [2, 128], strides = [1, 1]} : vector<2x256xf32> to vector<2x128xf32>
    %302 = vector.extract_strided_slice %300 {offsets = [0, 128], sizes = [2, 128], strides = [1, 1]} : vector<2x256xf32> to vector<2x128xf32>
    %303 = vector.extract_strided_slice %289 {offsets = [0, 256], sizes = [2, 128], strides = [1, 1]} : vector<2x384xf32> to vector<2x128xf32>
    %304 = vector.extract_strided_slice %292 {offsets = [0, 256], sizes = [2, 128], strides = [1, 1]} : vector<2x384xf32> to vector<2x128xf32>
    %305 = arith.addf %304, %285 : vector<2x128xf32>
    %306 = arith.mulf %301, %305 : vector<2x128xf32>
    %307 = arith.addf %303, %306 : vector<2x128xf32>
    %308 = math.tanh %307 : vector<2x128xf32>
    %cst_125 = arith.constant 1.000000e+00 : f32
    %309 = vector.broadcast %cst_125 : f32 to vector<2x128xf32>
    %310 = arith.subf %309, %302 : vector<2x128xf32>
    %311 = arith.mulf %310, %308 : vector<2x128xf32>
    %312 = arith.mulf %302, %286 : vector<2x128xf32>
    %313 = arith.addf %311, %312 : vector<2x128xf32>
    %c1_i32_126 = arith.constant 1 : i32
    %314 = arith.index_cast %c1_i32_126 : i32 to index
    %c0_127 = arith.constant 0 : index
    %c0_128 = arith.constant 0 : index
    %315 = vector.load %arg12[%314, %c0_127, %c0_128] : memref<8x2x384xf32, #tpu.memory_space<vmem>>, vector<1x2x384xf32>
    %316 = vector.shape_cast %315 : vector<1x2x384xf32> to vector<2x384xf32>
    %c1_129 = arith.constant 1 : index
    %c0_130 = arith.constant 0 : index
    %c0_131 = arith.constant 0 : index
    %317 = vector.load %arg5[%c1_129, %c0_130, %c0_131] : memref<2x128x384xf32, #tpu.memory_space<vmem>>, vector<1x128x384xf32>
    %318 = vector.shape_cast %317 : vector<1x128x384xf32> to vector<128x384xf32>
    %cst_132 = arith.constant dense<0.000000e+00> : vector<2x384xf32>
    %319 = tpu.matmul %313, %318, %cst_132 {dimension_numbers = #tpu.dot_dimension_numbers<[1], [0], [0], [1], [0, 0, 1, 1], [], []>} : vector<2x128xf32>, vector<128x384xf32>, vector<2x384xf32> -> vector<2x384xf32>
    %320 = vector.extract_strided_slice %316 {offsets = [0, 0], sizes = [2, 256], strides = [1, 1]} : vector<2x384xf32> to vector<2x256xf32>
    %321 = vector.extract_strided_slice %319 {offsets = [0, 0], sizes = [2, 256], strides = [1, 1]} : vector<2x384xf32> to vector<2x256xf32>
    %322 = arith.addf %320, %321 : vector<2x256xf32>
    %323 = arith.negf %322 : vector<2x256xf32>
    %324 = math.exp %323 : vector<2x256xf32>
    %cst_133 = arith.constant 1.000000e+00 : f32
    %325 = vector.broadcast %cst_133 : f32 to vector<2x256xf32>
    %326 = arith.addf %325, %324 : vector<2x256xf32>
    %327 = arith.divf %325, %326 : vector<2x256xf32>
    %328 = vector.extract_strided_slice %327 {offsets = [0, 0], sizes = [2, 128], strides = [1, 1]} : vector<2x256xf32> to vector<2x128xf32>
    %329 = vector.extract_strided_slice %327 {offsets = [0, 128], sizes = [2, 128], strides = [1, 1]} : vector<2x256xf32> to vector<2x128xf32>
    %330 = vector.extract_strided_slice %316 {offsets = [0, 256], sizes = [2, 128], strides = [1, 1]} : vector<2x384xf32> to vector<2x128xf32>
    %331 = vector.extract_strided_slice %319 {offsets = [0, 256], sizes = [2, 128], strides = [1, 1]} : vector<2x384xf32> to vector<2x128xf32>
    %332 = arith.addf %331, %285 : vector<2x128xf32>
    %333 = arith.mulf %328, %332 : vector<2x128xf32>
    %334 = arith.addf %330, %333 : vector<2x128xf32>
    %335 = math.tanh %334 : vector<2x128xf32>
    %cst_134 = arith.constant 1.000000e+00 : f32
    %336 = vector.broadcast %cst_134 : f32 to vector<2x128xf32>
    %337 = arith.subf %336, %329 : vector<2x128xf32>
    %338 = arith.mulf %337, %335 : vector<2x128xf32>
    %339 = arith.mulf %329, %313 : vector<2x128xf32>
    %340 = arith.addf %338, %339 : vector<2x128xf32>
    %c2_i32_135 = arith.constant 2 : i32
    %341 = arith.index_cast %c2_i32_135 : i32 to index
    %c0_136 = arith.constant 0 : index
    %c0_137 = arith.constant 0 : index
    %342 = vector.load %arg12[%341, %c0_136, %c0_137] : memref<8x2x384xf32, #tpu.memory_space<vmem>>, vector<1x2x384xf32>
    %343 = vector.shape_cast %342 : vector<1x2x384xf32> to vector<2x384xf32>
    %c1_138 = arith.constant 1 : index
    %c0_139 = arith.constant 0 : index
    %c0_140 = arith.constant 0 : index
    %344 = vector.load %arg5[%c1_138, %c0_139, %c0_140] : memref<2x128x384xf32, #tpu.memory_space<vmem>>, vector<1x128x384xf32>
    %345 = vector.shape_cast %344 : vector<1x128x384xf32> to vector<128x384xf32>
    %cst_141 = arith.constant dense<0.000000e+00> : vector<2x384xf32>
    %346 = tpu.matmul %340, %345, %cst_141 {dimension_numbers = #tpu.dot_dimension_numbers<[1], [0], [0], [1], [0, 0, 1, 1], [], []>} : vector<2x128xf32>, vector<128x384xf32>, vector<2x384xf32> -> vector<2x384xf32>
    %347 = vector.extract_strided_slice %343 {offsets = [0, 0], sizes = [2, 256], strides = [1, 1]} : vector<2x384xf32> to vector<2x256xf32>
    %348 = vector.extract_strided_slice %346 {offsets = [0, 0], sizes = [2, 256], strides = [1, 1]} : vector<2x384xf32> to vector<2x256xf32>
    %349 = arith.addf %347, %348 : vector<2x256xf32>
    %350 = arith.negf %349 : vector<2x256xf32>
    %351 = math.exp %350 : vector<2x256xf32>
    %cst_142 = arith.constant 1.000000e+00 : f32
    %352 = vector.broadcast %cst_142 : f32 to vector<2x256xf32>
    %353 = arith.addf %352, %351 : vector<2x256xf32>
    %354 = arith.divf %352, %353 : vector<2x256xf32>
    %355 = vector.extract_strided_slice %354 {offsets = [0, 0], sizes = [2, 128], strides = [1, 1]} : vector<2x256xf32> to vector<2x128xf32>
    %356 = vector.extract_strided_slice %354 {offsets = [0, 128], sizes = [2, 128], strides = [1, 1]} : vector<2x256xf32> to vector<2x128xf32>
    %357 = vector.extract_strided_slice %343 {offsets = [0, 256], sizes = [2, 128], strides = [1, 1]} : vector<2x384xf32> to vector<2x128xf32>
    %358 = vector.extract_strided_slice %346 {offsets = [0, 256], sizes = [2, 128], strides = [1, 1]} : vector<2x384xf32> to vector<2x128xf32>
    %359 = arith.addf %358, %285 : vector<2x128xf32>
    %360 = arith.mulf %355, %359 : vector<2x128xf32>
    %361 = arith.addf %357, %360 : vector<2x128xf32>
    %362 = math.tanh %361 : vector<2x128xf32>
    %cst_143 = arith.constant 1.000000e+00 : f32
    %363 = vector.broadcast %cst_143 : f32 to vector<2x128xf32>
    %364 = arith.subf %363, %356 : vector<2x128xf32>
    %365 = arith.mulf %364, %362 : vector<2x128xf32>
    %366 = arith.mulf %356, %340 : vector<2x128xf32>
    %367 = arith.addf %365, %366 : vector<2x128xf32>
    %c3_i32_144 = arith.constant 3 : i32
    %368 = arith.index_cast %c3_i32_144 : i32 to index
    %c0_145 = arith.constant 0 : index
    %c0_146 = arith.constant 0 : index
    %369 = vector.load %arg12[%368, %c0_145, %c0_146] : memref<8x2x384xf32, #tpu.memory_space<vmem>>, vector<1x2x384xf32>
    %370 = vector.shape_cast %369 : vector<1x2x384xf32> to vector<2x384xf32>
    %c1_147 = arith.constant 1 : index
    %c0_148 = arith.constant 0 : index
    %c0_149 = arith.constant 0 : index
    %371 = vector.load %arg5[%c1_147, %c0_148, %c0_149] : memref<2x128x384xf32, #tpu.memory_space<vmem>>, vector<1x128x384xf32>
    %372 = vector.shape_cast %371 : vector<1x128x384xf32> to vector<128x384xf32>
    %cst_150 = arith.constant dense<0.000000e+00> : vector<2x384xf32>
    %373 = tpu.matmul %367, %372, %cst_150 {dimension_numbers = #tpu.dot_dimension_numbers<[1], [0], [0], [1], [0, 0, 1, 1], [], []>} : vector<2x128xf32>, vector<128x384xf32>, vector<2x384xf32> -> vector<2x384xf32>
    %374 = vector.extract_strided_slice %370 {offsets = [0, 0], sizes = [2, 256], strides = [1, 1]} : vector<2x384xf32> to vector<2x256xf32>
    %375 = vector.extract_strided_slice %373 {offsets = [0, 0], sizes = [2, 256], strides = [1, 1]} : vector<2x384xf32> to vector<2x256xf32>
    %376 = arith.addf %374, %375 : vector<2x256xf32>
    %377 = arith.negf %376 : vector<2x256xf32>
    %378 = math.exp %377 : vector<2x256xf32>
    %cst_151 = arith.constant 1.000000e+00 : f32
    %379 = vector.broadcast %cst_151 : f32 to vector<2x256xf32>
    %380 = arith.addf %379, %378 : vector<2x256xf32>
    %381 = arith.divf %379, %380 : vector<2x256xf32>
    %382 = vector.extract_strided_slice %381 {offsets = [0, 0], sizes = [2, 128], strides = [1, 1]} : vector<2x256xf32> to vector<2x128xf32>
    %383 = vector.extract_strided_slice %381 {offsets = [0, 128], sizes = [2, 128], strides = [1, 1]} : vector<2x256xf32> to vector<2x128xf32>
    %384 = vector.extract_strided_slice %370 {offsets = [0, 256], sizes = [2, 128], strides = [1, 1]} : vector<2x384xf32> to vector<2x128xf32>
    %385 = vector.extract_strided_slice %373 {offsets = [0, 256], sizes = [2, 128], strides = [1, 1]} : vector<2x384xf32> to vector<2x128xf32>
    %386 = arith.addf %385, %285 : vector<2x128xf32>
    %387 = arith.mulf %382, %386 : vector<2x128xf32>
    %388 = arith.addf %384, %387 : vector<2x128xf32>
    %389 = math.tanh %388 : vector<2x128xf32>
    %cst_152 = arith.constant 1.000000e+00 : f32
    %390 = vector.broadcast %cst_152 : f32 to vector<2x128xf32>
    %391 = arith.subf %390, %383 : vector<2x128xf32>
    %392 = arith.mulf %391, %389 : vector<2x128xf32>
    %393 = arith.mulf %383, %367 : vector<2x128xf32>
    %394 = arith.addf %392, %393 : vector<2x128xf32>
    %c4_i32_153 = arith.constant 4 : i32
    %395 = arith.index_cast %c4_i32_153 : i32 to index
    %c0_154 = arith.constant 0 : index
    %c0_155 = arith.constant 0 : index
    %396 = vector.load %arg12[%395, %c0_154, %c0_155] : memref<8x2x384xf32, #tpu.memory_space<vmem>>, vector<1x2x384xf32>
    %397 = vector.shape_cast %396 : vector<1x2x384xf32> to vector<2x384xf32>
    %c1_156 = arith.constant 1 : index
    %c0_157 = arith.constant 0 : index
    %c0_158 = arith.constant 0 : index
    %398 = vector.load %arg5[%c1_156, %c0_157, %c0_158] : memref<2x128x384xf32, #tpu.memory_space<vmem>>, vector<1x128x384xf32>
    %399 = vector.shape_cast %398 : vector<1x128x384xf32> to vector<128x384xf32>
    %cst_159 = arith.constant dense<0.000000e+00> : vector<2x384xf32>
    %400 = tpu.matmul %394, %399, %cst_159 {dimension_numbers = #tpu.dot_dimension_numbers<[1], [0], [0], [1], [0, 0, 1, 1], [], []>} : vector<2x128xf32>, vector<128x384xf32>, vector<2x384xf32> -> vector<2x384xf32>
    %401 = vector.extract_strided_slice %397 {offsets = [0, 0], sizes = [2, 256], strides = [1, 1]} : vector<2x384xf32> to vector<2x256xf32>
    %402 = vector.extract_strided_slice %400 {offsets = [0, 0], sizes = [2, 256], strides = [1, 1]} : vector<2x384xf32> to vector<2x256xf32>
    %403 = arith.addf %401, %402 : vector<2x256xf32>
    %404 = arith.negf %403 : vector<2x256xf32>
    %405 = math.exp %404 : vector<2x256xf32>
    %cst_160 = arith.constant 1.000000e+00 : f32
    %406 = vector.broadcast %cst_160 : f32 to vector<2x256xf32>
    %407 = arith.addf %406, %405 : vector<2x256xf32>
    %408 = arith.divf %406, %407 : vector<2x256xf32>
    %409 = vector.extract_strided_slice %408 {offsets = [0, 0], sizes = [2, 128], strides = [1, 1]} : vector<2x256xf32> to vector<2x128xf32>
    %410 = vector.extract_strided_slice %408 {offsets = [0, 128], sizes = [2, 128], strides = [1, 1]} : vector<2x256xf32> to vector<2x128xf32>
    %411 = vector.extract_strided_slice %397 {offsets = [0, 256], sizes = [2, 128], strides = [1, 1]} : vector<2x384xf32> to vector<2x128xf32>
    %412 = vector.extract_strided_slice %400 {offsets = [0, 256], sizes = [2, 128], strides = [1, 1]} : vector<2x384xf32> to vector<2x128xf32>
    %413 = arith.addf %412, %285 : vector<2x128xf32>
    %414 = arith.mulf %409, %413 : vector<2x128xf32>
    %415 = arith.addf %411, %414 : vector<2x128xf32>
    %416 = math.tanh %415 : vector<2x128xf32>
    %cst_161 = arith.constant 1.000000e+00 : f32
    %417 = vector.broadcast %cst_161 : f32 to vector<2x128xf32>
    %418 = arith.subf %417, %410 : vector<2x128xf32>
    %419 = arith.mulf %418, %416 : vector<2x128xf32>
    %420 = arith.mulf %410, %394 : vector<2x128xf32>
    %421 = arith.addf %419, %420 : vector<2x128xf32>
    %c5_i32_162 = arith.constant 5 : i32
    %422 = arith.index_cast %c5_i32_162 : i32 to index
    %c0_163 = arith.constant 0 : index
    %c0_164 = arith.constant 0 : index
    %423 = vector.load %arg12[%422, %c0_163, %c0_164] : memref<8x2x384xf32, #tpu.memory_space<vmem>>, vector<1x2x384xf32>
    %424 = vector.shape_cast %423 : vector<1x2x384xf32> to vector<2x384xf32>
    %c1_165 = arith.constant 1 : index
    %c0_166 = arith.constant 0 : index
    %c0_167 = arith.constant 0 : index
    %425 = vector.load %arg5[%c1_165, %c0_166, %c0_167] : memref<2x128x384xf32, #tpu.memory_space<vmem>>, vector<1x128x384xf32>
    %426 = vector.shape_cast %425 : vector<1x128x384xf32> to vector<128x384xf32>
    %cst_168 = arith.constant dense<0.000000e+00> : vector<2x384xf32>
    %427 = tpu.matmul %421, %426, %cst_168 {dimension_numbers = #tpu.dot_dimension_numbers<[1], [0], [0], [1], [0, 0, 1, 1], [], []>} : vector<2x128xf32>, vector<128x384xf32>, vector<2x384xf32> -> vector<2x384xf32>
    %428 = vector.extract_strided_slice %424 {offsets = [0, 0], sizes = [2, 256], strides = [1, 1]} : vector<2x384xf32> to vector<2x256xf32>
    %429 = vector.extract_strided_slice %427 {offsets = [0, 0], sizes = [2, 256], strides = [1, 1]} : vector<2x384xf32> to vector<2x256xf32>
    %430 = arith.addf %428, %429 : vector<2x256xf32>
    %431 = arith.negf %430 : vector<2x256xf32>
    %432 = math.exp %431 : vector<2x256xf32>
    %cst_169 = arith.constant 1.000000e+00 : f32
    %433 = vector.broadcast %cst_169 : f32 to vector<2x256xf32>
    %434 = arith.addf %433, %432 : vector<2x256xf32>
    %435 = arith.divf %433, %434 : vector<2x256xf32>
    %436 = vector.extract_strided_slice %435 {offsets = [0, 0], sizes = [2, 128], strides = [1, 1]} : vector<2x256xf32> to vector<2x128xf32>
    %437 = vector.extract_strided_slice %435 {offsets = [0, 128], sizes = [2, 128], strides = [1, 1]} : vector<2x256xf32> to vector<2x128xf32>
    %438 = vector.extract_strided_slice %424 {offsets = [0, 256], sizes = [2, 128], strides = [1, 1]} : vector<2x384xf32> to vector<2x128xf32>
    %439 = vector.extract_strided_slice %427 {offsets = [0, 256], sizes = [2, 128], strides = [1, 1]} : vector<2x384xf32> to vector<2x128xf32>
    %440 = arith.addf %439, %285 : vector<2x128xf32>
    %441 = arith.mulf %436, %440 : vector<2x128xf32>
    %442 = arith.addf %438, %441 : vector<2x128xf32>
    %443 = math.tanh %442 : vector<2x128xf32>
    %cst_170 = arith.constant 1.000000e+00 : f32
    %444 = vector.broadcast %cst_170 : f32 to vector<2x128xf32>
    %445 = arith.subf %444, %437 : vector<2x128xf32>
    %446 = arith.mulf %445, %443 : vector<2x128xf32>
    %447 = arith.mulf %437, %421 : vector<2x128xf32>
    %448 = arith.addf %446, %447 : vector<2x128xf32>
    %c6_i32_171 = arith.constant 6 : i32
    %449 = arith.index_cast %c6_i32_171 : i32 to index
    %c0_172 = arith.constant 0 : index
    %c0_173 = arith.constant 0 : index
    %450 = vector.load %arg12[%449, %c0_172, %c0_173] : memref<8x2x384xf32, #tpu.memory_space<vmem>>, vector<1x2x384xf32>
    %451 = vector.shape_cast %450 : vector<1x2x384xf32> to vector<2x384xf32>
    %c1_174 = arith.constant 1 : index
    %c0_175 = arith.constant 0 : index
    %c0_176 = arith.constant 0 : index
    %452 = vector.load %arg5[%c1_174, %c0_175, %c0_176] : memref<2x128x384xf32, #tpu.memory_space<vmem>>, vector<1x128x384xf32>
    %453 = vector.shape_cast %452 : vector<1x128x384xf32> to vector<128x384xf32>
    %cst_177 = arith.constant dense<0.000000e+00> : vector<2x384xf32>
    %454 = tpu.matmul %448, %453, %cst_177 {dimension_numbers = #tpu.dot_dimension_numbers<[1], [0], [0], [1], [0, 0, 1, 1], [], []>} : vector<2x128xf32>, vector<128x384xf32>, vector<2x384xf32> -> vector<2x384xf32>
    %455 = vector.extract_strided_slice %451 {offsets = [0, 0], sizes = [2, 256], strides = [1, 1]} : vector<2x384xf32> to vector<2x256xf32>
    %456 = vector.extract_strided_slice %454 {offsets = [0, 0], sizes = [2, 256], strides = [1, 1]} : vector<2x384xf32> to vector<2x256xf32>
    %457 = arith.addf %455, %456 : vector<2x256xf32>
    %458 = arith.negf %457 : vector<2x256xf32>
    %459 = math.exp %458 : vector<2x256xf32>
    %cst_178 = arith.constant 1.000000e+00 : f32
    %460 = vector.broadcast %cst_178 : f32 to vector<2x256xf32>
    %461 = arith.addf %460, %459 : vector<2x256xf32>
    %462 = arith.divf %460, %461 : vector<2x256xf32>
    %463 = vector.extract_strided_slice %462 {offsets = [0, 0], sizes = [2, 128], strides = [1, 1]} : vector<2x256xf32> to vector<2x128xf32>
    %464 = vector.extract_strided_slice %462 {offsets = [0, 128], sizes = [2, 128], strides = [1, 1]} : vector<2x256xf32> to vector<2x128xf32>
    %465 = vector.extract_strided_slice %451 {offsets = [0, 256], sizes = [2, 128], strides = [1, 1]} : vector<2x384xf32> to vector<2x128xf32>
    %466 = vector.extract_strided_slice %454 {offsets = [0, 256], sizes = [2, 128], strides = [1, 1]} : vector<2x384xf32> to vector<2x128xf32>
    %467 = arith.addf %466, %285 : vector<2x128xf32>
    %468 = arith.mulf %463, %467 : vector<2x128xf32>
    %469 = arith.addf %465, %468 : vector<2x128xf32>
    %470 = math.tanh %469 : vector<2x128xf32>
    %cst_179 = arith.constant 1.000000e+00 : f32
    %471 = vector.broadcast %cst_179 : f32 to vector<2x128xf32>
    %472 = arith.subf %471, %464 : vector<2x128xf32>
    %473 = arith.mulf %472, %470 : vector<2x128xf32>
    %474 = arith.mulf %464, %448 : vector<2x128xf32>
    %475 = arith.addf %473, %474 : vector<2x128xf32>
    %c7_i32_180 = arith.constant 7 : i32
    %476 = arith.index_cast %c7_i32_180 : i32 to index
    %c0_181 = arith.constant 0 : index
    %c0_182 = arith.constant 0 : index
    %477 = vector.load %arg12[%476, %c0_181, %c0_182] : memref<8x2x384xf32, #tpu.memory_space<vmem>>, vector<1x2x384xf32>
    %478 = vector.shape_cast %477 : vector<1x2x384xf32> to vector<2x384xf32>
    %c1_183 = arith.constant 1 : index
    %c0_184 = arith.constant 0 : index
    %c0_185 = arith.constant 0 : index
    %479 = vector.load %arg5[%c1_183, %c0_184, %c0_185] : memref<2x128x384xf32, #tpu.memory_space<vmem>>, vector<1x128x384xf32>
    %480 = vector.shape_cast %479 : vector<1x128x384xf32> to vector<128x384xf32>
    %cst_186 = arith.constant dense<0.000000e+00> : vector<2x384xf32>
    %481 = tpu.matmul %475, %480, %cst_186 {dimension_numbers = #tpu.dot_dimension_numbers<[1], [0], [0], [1], [0, 0, 1, 1], [], []>} : vector<2x128xf32>, vector<128x384xf32>, vector<2x384xf32> -> vector<2x384xf32>
    %482 = vector.extract_strided_slice %478 {offsets = [0, 0], sizes = [2, 256], strides = [1, 1]} : vector<2x384xf32> to vector<2x256xf32>
    %483 = vector.extract_strided_slice %481 {offsets = [0, 0], sizes = [2, 256], strides = [1, 1]} : vector<2x384xf32> to vector<2x256xf32>
    %484 = arith.addf %482, %483 : vector<2x256xf32>
    %485 = arith.negf %484 : vector<2x256xf32>
    %486 = math.exp %485 : vector<2x256xf32>
    %cst_187 = arith.constant 1.000000e+00 : f32
    %487 = vector.broadcast %cst_187 : f32 to vector<2x256xf32>
    %488 = arith.addf %487, %486 : vector<2x256xf32>
    %489 = arith.divf %487, %488 : vector<2x256xf32>
    %490 = vector.extract_strided_slice %489 {offsets = [0, 0], sizes = [2, 128], strides = [1, 1]} : vector<2x256xf32> to vector<2x128xf32>
    %491 = vector.extract_strided_slice %489 {offsets = [0, 128], sizes = [2, 128], strides = [1, 1]} : vector<2x256xf32> to vector<2x128xf32>
    %492 = vector.extract_strided_slice %478 {offsets = [0, 256], sizes = [2, 128], strides = [1, 1]} : vector<2x384xf32> to vector<2x128xf32>
    %493 = vector.extract_strided_slice %481 {offsets = [0, 256], sizes = [2, 128], strides = [1, 1]} : vector<2x384xf32> to vector<2x128xf32>
    %494 = arith.addf %493, %285 : vector<2x128xf32>
    %495 = arith.mulf %490, %494 : vector<2x128xf32>
    %496 = arith.addf %492, %495 : vector<2x128xf32>
    %497 = math.tanh %496 : vector<2x128xf32>
    %cst_188 = arith.constant 1.000000e+00 : f32
    %498 = vector.broadcast %cst_188 : f32 to vector<2x128xf32>
    %499 = arith.subf %498, %491 : vector<2x128xf32>
    %500 = arith.mulf %499, %497 : vector<2x128xf32>
    %501 = arith.mulf %491, %475 : vector<2x128xf32>
    %502 = arith.addf %500, %501 : vector<2x128xf32>
    %c8_i32_189 = arith.constant 8 : i32
    %c0_190 = arith.constant 0 : index
    %c0_191 = arith.constant 0 : index
    %503 = vector.load %arg8[%c0_190, %c0_191] : memref<128x1xf32, #tpu.memory_space<vmem>>, vector<128x1xf32>
    %cst_192 = arith.constant dense<0.000000e+00> : vector<2x1xf32>
    %504 = tpu.matmul %502, %503, %cst_192 {dimension_numbers = #tpu.dot_dimension_numbers<[1], [0], [0], [1], [0, 0, 1, 1], [], []>} : vector<2x128xf32>, vector<128x1xf32>, vector<2x1xf32> -> vector<2x1xf32>
    %c0_193 = arith.constant 0 : index
    %c0_194 = arith.constant 0 : index
    %505 = vector.load %arg9[%c0_193, %c0_194] : memref<1x1xf32, #tpu.memory_space<vmem>>, vector<1x1xf32>
    %506 = vector.broadcast %505 : vector<1x1xf32> to vector<2x1xf32>
    %507 = arith.addf %504, %506 : vector<2x1xf32>
    %508 = arith.negf %507 : vector<2x1xf32>
    %509 = math.exp %508 : vector<2x1xf32>
    %cst_195 = arith.constant 1.000000e+00 : f32
    %510 = vector.broadcast %cst_195 : f32 to vector<2x1xf32>
    %511 = arith.addf %510, %509 : vector<2x1xf32>
    %512 = arith.divf %510, %511 : vector<2x1xf32>
    %c0_196 = arith.constant 0 : index
    %c0_197 = arith.constant 0 : index
    %513 = vector.load %arg10[%c0_196, %c0_197] : memref<2x1xf32, #tpu.memory_space<vmem>>, vector<2x1xf32>
    tpu.vector_store %arg10[%c0_196, %c0_197], %512 {strides = array<i32>} : memref<2x1xf32, #tpu.memory_space<vmem>>, vector<2x1xf32>,
    %514 = vector.extract_strided_slice %502 {offsets = [0, 0], sizes = [2, 32], strides = [1, 1]} : vector<2x128xf32> to vector<2x32xf32>
    %c0_198 = arith.constant 0 : index
    %c0_199 = arith.constant 0 : index
    %515 = vector.load %arg11[%c0_198, %c0_199] : memref<2x32xf32, #tpu.memory_space<vmem>>, vector<2x32xf32>
    tpu.vector_store %arg11[%c0_198, %c0_199], %514 {strides = array<i32>} : memref<2x32xf32, #tpu.memory_space<vmem>>, vector<2x32xf32>,
    return
  }
  func.func @transform_0(%arg0: i32) -> (i32, i32, i32) {
    %c0_i32 = arith.constant 0 : i32
    %c0_i32_0 = arith.constant 0 : i32
    %c0_i32_1 = arith.constant 0 : i32
    return %c0_i32, %arg0, %c0_i32_0 : i32, i32, i32
  }
  func.func @transform_1(%arg0: i32) -> (i32, i32) {
    %c0_i32 = arith.constant 0 : i32
    %c0_i32_0 = arith.constant 0 : i32
    %c0_i32_1 = arith.constant 0 : i32
    return %c0_i32, %c0_i32_0 : i32, i32
  }
  func.func @transform_2(%arg0: i32) -> (i32, i32) {
    %c0_i32 = arith.constant 0 : i32
    %c0_i32_0 = arith.constant 0 : i32
    %c0_i32_1 = arith.constant 0 : i32
    return %c0_i32, %c0_i32_0 : i32, i32
  }
  func.func @transform_3(%arg0: i32) -> (i32, i32, i32) {
    %c0_i32 = arith.constant 0 : i32
    %c0_i32_0 = arith.constant 0 : i32
    %c0_i32_1 = arith.constant 0 : i32
    %c0_i32_2 = arith.constant 0 : i32
    return %c0_i32, %c0_i32_0, %c0_i32_1 : i32, i32, i32
  }
  func.func @transform_4(%arg0: i32) -> (i32, i32, i32) {
    %c0_i32 = arith.constant 0 : i32
    %c0_i32_0 = arith.constant 0 : i32
    %c0_i32_1 = arith.constant 0 : i32
    %c0_i32_2 = arith.constant 0 : i32
    return %c0_i32, %c0_i32_0, %c0_i32_1 : i32, i32, i32
  }
  func.func @transform_5(%arg0: i32) -> (i32, i32, i32) {
    %c0_i32 = arith.constant 0 : i32
    %c0_i32_0 = arith.constant 0 : i32
    %c0_i32_1 = arith.constant 0 : i32
    %c0_i32_2 = arith.constant 0 : i32
    return %c0_i32, %c0_i32_0, %c0_i32_1 : i32, i32, i32
  }
  func.func @transform_6(%arg0: i32) -> (i32, i32, i32) {
    %c0_i32 = arith.constant 0 : i32
    %c0_i32_0 = arith.constant 0 : i32
    %c0_i32_1 = arith.constant 0 : i32
    %c0_i32_2 = arith.constant 0 : i32
    return %c0_i32, %c0_i32_0, %c0_i32_1 : i32, i32, i32
  }
  func.func @transform_7(%arg0: i32) -> (i32, i32) {
    %c0_i32 = arith.constant 0 : i32
    %c0_i32_0 = arith.constant 0 : i32
    %c0_i32_1 = arith.constant 0 : i32
    return %c0_i32, %c0_i32_0 : i32, i32
  }
  func.func @transform_8(%arg0: i32) -> (i32, i32) {
    %c0_i32 = arith.constant 0 : i32
    %c0_i32_0 = arith.constant 0 : i32
    %c0_i32_1 = arith.constant 0 : i32
    return %c0_i32, %c0_i32_0 : i32, i32
  }
  func.func @transform_9(%arg0: i32) -> (i32, i32) {
    %c0_i32 = arith.constant 0 : i32
    %c0_i32_0 = arith.constant 0 : i32
    return %arg0, %c0_i32 : i32, i32
  }
  func.func @transform_10(%arg0: i32) -> (i32, i32) {
    %c0_i32 = arith.constant 0 : i32
    %c0_i32_0 = arith.constant 0 : i32
    return %arg0, %c0_i32 : i32, i32
  }
}

</mosaic_0001>

<llo_original>
// kernel: tpu_custom_call.1
$region0: #{tpu_custom_call.1}
  #allocation0 [shape = 'u32[]', space=smem, size = 0x4, offset = 0x4, fixed_abs, tag = 'smem constant byte address 0x4 - core index']
  #allocation1 [shape = 'u32[144,128]{1,0:T(1,128)}', space=vmem, size = 0x12000, scoped, tag = 'internal scratch']
  #allocation2 [shape = 'f32[8,2,384]{2,1,0:T(2,128)}', space=vmem, size = 0x6000, scoped, tag = 'scratch operand']
  #allocation3 [shape = 'f32[8,2,128]{2,1,0:T(2,128)}', space=vmem, size = 0x2000, scoped, tag = 'scratch operand']
  #allocation4 [shape = 'f32[1,1]{1,0:T(1,128)S(1)}', space=vmem, size = 0x200, scoped, tag = 'scoped memory for tpu_custom_call.1']
  %s0 = inlined_call_operand.vmem [shape: f32[8,2,32], index: 0, kind: input, shape index: {}]
  %s1 = inlined_call_operand.vmem [shape: f32[32,128], index: 1, kind: input, shape index: {}]
  %s2 = inlined_call_operand.vmem [shape: f32[1,128], index: 2, kind: input, shape index: {}]
  %s3 = inlined_call_operand.hbm [shape: f32[2,128,384], index: 3, kind: input, shape index: {}]
  %s4 = inlined_call_operand.hbm [shape: f32[2,128,384], index: 4, kind: input, shape index: {}]
  %s5 = inlined_call_operand.vmem [shape: f32[2,1,384], index: 5, kind: input, shape index: {}]
  %s6 = inlined_call_operand.vmem [shape: f32[2,1,128], index: 6, kind: input, shape index: {}]
  %s7 = inlined_call_operand.vmem [shape: f32[128,1], index: 7, kind: input, shape index: {}]
  %s8 = inlined_call_operand.<no memory space> [shape: f32[1,1], index: 8, kind: input, shape index: {}]
  %s9 = inlined_call_operand.vmem [shape: f32[2,1], index: 9, kind: output, shape index: {0}]
  %s10 = inlined_call_operand.hbm [shape: f32[2,32], index: 10, kind: output, shape index: {1}]
  %11 = xla_tuple %s9, %s10
  %s12 = sld [smem:[#allocation0]]
  $region62: #{tpu_custom_call.1} parent=0
    _
  %s14 = ssub.s32 1, %s12
  %s15 = scalar_select 0, %s14, %s12
  %v16 = vstv %s8
  %17 = vst [vmem:[#allocation4] sm:$0x1] %v16
  $region1: #{tpu_custom_call.1} parent=0
    #allocation5 [shape = 'u8[393216]{0}', space=vmem, size = 0x60000, scoped, tag = 'input window, operand 3, single buffered']
    #allocation6 [shape = 's32[1]{0}', space=sflag, size = 0x4, scoped, tag = 'scoped memory for tpu_custom_call.1']
    #allocation7 [shape = 's32[1]{0}', space=sflag, size = 0x4, scoped, tag = 'scoped memory for tpu_custom_call.1']
    #allocation8 [shape = 'u8[393216]{0}', space=vmem, size = 0x60000, scoped, tag = 'input window, operand 4, single buffered']
    #allocation9 [shape = 's32[1]{0}', space=sflag, size = 0x4, scoped, tag = 'scoped memory for tpu_custom_call.1']
    #allocation10 [shape = 'u8[1024]{0}', space=vmem, size = 0x400, scoped, tag = 'output window, operand 1, single buffered']
    %18 = vsyncpa [#allocation6], 0
    %19 = vsyncpa [#allocation9], 0
    %20 = vsyncpa [#allocation7], 0
    // Predicated region
    $region2: #{tpu_custom_call.1} parent=1 // pred_check
      _
    $region3: #{tpu_custom_call.1} parent=1 // pred_check_branch
      %22 = sbr.rel (0) target = $region5
    $region4: #{tpu_custom_call.1} parent=1 // pred_region
      _
    $region5: #{tpu_custom_call.1} parent=1 // pred_fallthru
      _
    // Predicated region
    $region6: #{tpu_custom_call.1} parent=1 // pred_check
      _
    $region7: #{tpu_custom_call.1} parent=1 // pred_check_branch
      %24 = sbr.rel (0) target = $region9
    $region8: #{tpu_custom_call.1} parent=1 // pred_region
      _
    $region9: #{tpu_custom_call.1} parent=1 // pred_fallthru
      _
    // Predicated region
    $region10: #{tpu_custom_call.1} parent=1 // pred_check
      _
    $region11: #{tpu_custom_call.1} parent=1 // pred_check_branch
      %26 = sbr.rel (0) target = $region13
    $region12: #{tpu_custom_call.1} parent=1 // pred_region
      _
    $region13: #{tpu_custom_call.1} parent=1 // pred_fallthru
      _
    // Predicated region
    $region14: #{tpu_custom_call.1} parent=1 // pred_check
      _
    $region15: #{tpu_custom_call.1} parent=1 // pred_check_branch
      %28 = sbr.rel (0) target = $region17
    $region16: #{tpu_custom_call.1} parent=1 // pred_region
      %s30 = ssub.s32 12288, 12288
      %31 = vsyncadd [#allocation6], %s30
      %s32 = sshll.u32 [#allocation5], 4
      %s33 = int_to_ptr.vmem [resolvable:$true] %s32
      %38 = dma.hbm_to_vmem [thread:$0]  %s3, 12288, %s33, [#allocation6], 384, 384, 24
    $region17: #{tpu_custom_call.1} parent=1 // pred_fallthru
      _
    // Predicated region
    $region18: #{tpu_custom_call.1} parent=1 // pred_check
      _
    $region19: #{tpu_custom_call.1} parent=1 // pred_check_branch
      %40 = sbr.rel (0) target = $region21
    $region20: #{tpu_custom_call.1} parent=1 // pred_region
      %s42 = ssub.s32 12288, 12288
      %43 = vsyncadd [#allocation9], %s42
      %s44 = sshll.u32 [#allocation8], 4
      %s45 = int_to_ptr.vmem [resolvable:$true] %s44
      %50 = dma.hbm_to_vmem [thread:$0]  %s4, 12288, %s45, [#allocation9], 384, 384, 24
    $region21: #{tpu_custom_call.1} parent=1 // pred_fallthru
      _
    // Predicated region
    $region22: #{tpu_custom_call.1} parent=1 // pred_check
      _
    $region23: #{tpu_custom_call.1} parent=1 // pred_check_branch
      %52 = sbr.rel (0) target = $region25
    $region24: #{tpu_custom_call.1} parent=1 // pred_region
      _
    $region25: #{tpu_custom_call.1} parent=1 // pred_fallthru
      _
    // Predicated region
    $region26: #{tpu_custom_call.1} parent=1 // pred_check
      _
    $region27: #{tpu_custom_call.1} parent=1 // pred_check_branch
      %54 = sbr.rel (0) target = $region29
    $region28: #{tpu_custom_call.1} parent=1 // pred_region
      _
    $region29: #{tpu_custom_call.1} parent=1 // pred_fallthru
      _
    // Predicated region
    $region30: #{tpu_custom_call.1} parent=1 // pred_check
      _
    $region31: #{tpu_custom_call.1} parent=1 // pred_check_branch
      %56 = sbr.rel (0) target = $region33
    $region32: #{tpu_custom_call.1} parent=1 // pred_region
      _
    $region33: #{tpu_custom_call.1} parent=1 // pred_fallthru
      _
    // Predicated region
    $region34: #{tpu_custom_call.1} parent=1 // pred_check
      _
    $region35: #{tpu_custom_call.1} parent=1 // pred_check_branch
      %58 = sbr.rel (0) target = $region37
    $region36: #{tpu_custom_call.1} parent=1 // pred_region
      _
    $region37: #{tpu_custom_call.1} parent=1 // pred_fallthru
      _
    // Predicated region
    $region38: #{tpu_custom_call.1} parent=1 // pred_check
      _
    $region39: #{tpu_custom_call.1} parent=1 // pred_check_branch
      %60 = sbr.rel (0) target = $region41
    $region40: #{tpu_custom_call.1} parent=1 // pred_region
      %61 = dma.done [#allocation6], 12288
    $region41: #{tpu_custom_call.1} parent=1 // pred_fallthru
      _
    // Predicated region
    $region42: #{tpu_custom_call.1} parent=1 // pred_check
      _
    $region43: #{tpu_custom_call.1} parent=1 // pred_check_branch
      %63 = sbr.rel (0) target = $region45
    $region44: #{tpu_custom_call.1} parent=1 // pred_region
      %64 = dma.done [#allocation9], 12288
    $region45: #{tpu_custom_call.1} parent=1 // pred_fallthru
      _
    %v65 = vld [vmem:[%s0] sm:$0x3]
    %v66 = vld [vmem:[%s0 + $0x2] sm:$0x3]
    %v67 = vld [vmem:[%s0 + $0x4] sm:$0x3]
    %v68 = vld [vmem:[%s0 + $0x6] sm:$0x3]
    %v69 = vld [vmem:[%s0 + $0x8] sm:$0x3]
    %v70 = vld [vmem:[%s0 + $0xa] sm:$0x3]
    %v71 = vld [vmem:[%s0 + $0xc] sm:$0x3]
    %v72 = vld [vmem:[%s0 + $0xe] sm:$0x3]
    %v73 = vld [vmem:[%s1] sm:$0xff]
    %v74 = vld [vmem:[%s1 + $0x8] sm:$0xff]
    %v75 = vld [vmem:[%s1 + $0x10] sm:$0xff]
    %v76 = vld [vmem:[%s1 + $0x18] sm:$0xff]
    %v77 = vld [vmem:[%s2] sm:$0x1]
    %v79 = vlaneseq
    %v80 = vshrl.u32 %v79, 7
    %v81 = vsub.s32 0, %v80
    %v82 = vrot.slane %v77, %v81
    %v92 = vcombine.low %v65, %v66
    %v93 = vcombine.low %v67, %v68
    %v95 = vunpack.c.l.s4 1983009808
    %v96 = vunpack.c.0.s8 %v95
    %v97 = vlaneseq
    %v98 = vshrl.u32 %v97, 7
    %v99 = vsub.s32 %v96, %v98
    %v100 = vrot.slane %v92, %v99
    %v102 = vunpack.c.l.s4 1983009808
    %v103 = vunpack.c.0.s8 %v102
    %v104 = vlaneseq
    %v105 = vshrl.u32 %v104, 7
    %v106 = vsub.s32 %v103, %v105
    %v107 = vrot.slane %v93, %v106
    %v108 = vcombine.low %v100, %v107
    %v109 = vcombine.low %v69, %v70
    %v110 = vcombine.low %v71, %v72
    %v112 = vunpack.c.l.s4 1983009808
    %v113 = vunpack.c.0.s8 %v112
    %v114 = vlaneseq
    %v115 = vshrl.u32 %v114, 7
    %v116 = vsub.s32 %v113, %v115
    %v117 = vrot.slane %v109, %v116
    %v119 = vunpack.c.l.s4 1983009808
    %v120 = vunpack.c.0.s8 %v119
    %v121 = vlaneseq
    %v122 = vshrl.u32 %v121, 7
    %v123 = vsub.s32 %v120, %v122
    %v124 = vrot.slane %v110, %v123
    %v125 = vcombine.low %v117, %v124
    %vm126 = vcmask 261120
    %v127 = vsel %vm126, %v108, 0
    %v129 = vsel %vm126, %v125, 0
    %131 = vmatprep.subr.mxu0 0.0
    %132 = vmatpush1.msra.mxu0 %v73
    %133 = vmatprep.subr.mxu0 0.0
    %134 = vmatpush1.msra.mxu0 %v74
    %135 = vmatprep.subr.mxu0 0.0
    %136 = vmatpush1.msra.mxu0 %v75
    %137 = vmatprep.subr.mxu0 0.0
    %138 = vmatpush1.msra.mxu0 %v76
    %139 = vmatprep.subr.mxu0 0.0
    %140 = vmatpush1.msra.mxu0 0.0
    %141 = vmatprep.subr.mxu0 0.0
    %142 = vmatpush1.msra.mxu0 0.0
    %143 = vmatprep.subr.mxu0 0.0
    %144 = vmatpush1.msra.mxu0 0.0
    %145 = vmatprep.subr.mxu0 0.0
    %146 = vmatpush1.msra.mxu0 0.0
    %147 = vmatprep.subr.mxu0 0.0
    %148 = vmatpush1.msra.mxu0 0.0
    %149 = vmatprep.subr.mxu0 0.0
    %150 = vmatpush1.msra.mxu0 0.0
    %151 = vmatprep.subr.mxu0 0.0
    %152 = vmatpush1.msra.mxu0 0.0
    %153 = vmatprep.subr.mxu0 0.0
    %154 = vmatpush1.msra.mxu0 0.0
    %155 = vmatprep.subr.mxu0 0.0
    %156 = vmatpush1.msra.mxu0 0.0
    %157 = vmatprep.subr.mxu0 0.0
    %158 = vmatpush1.msra.mxu0 0.0
    %159 = vmatprep.subr.mxu0 0.0
    %160 = vmatpush1.msra.mxu0 0.0
    %161 = vmatprep.subr.mxu0 0.0
    %162 = vmatpush1.msra.mxu0 0.0
    %163 = vmatprep.subr.mxu0 0.0
    %164 = vmatpush1.msra.mxu0 0.0
    %165 = vmatprep.subr.mxu0 0.0
    %166 = vmatpush1.msra.mxu0 0.0
    %167 = vmatprep.subr.mxu0 0.0
    %168 = vmatpush1.msra.mxu0 0.0
    %169 = vmatprep.subr.mxu0 0.0
    %170 = vmatpush1.msra.mxu0 0.0
    %171 = vmatprep.subr.mxu0 0.0
    %172 = vmatpush1.msra.mxu0 0.0
    %173 = vmatprep.subr.mxu0 0.0
    %174 = vmatpush1.msra.mxu0 0.0
    %175 = vmatprep.subr.mxu0 0.0
    %176 = vmatpush1.msra.mxu0 0.0
    %177 = vmatprep.subr.mxu0 0.0
    %178 = vmatpush1.msra.mxu0 0.0
    %179 = vmatprep.subr.mxu0 0.0
    %180 = vmatpush1.msra.mxu0 0.0
    %181 = vmatprep.subr.mxu0 0.0
    %182 = vmatpush1.msra.mxu0 0.0
    %183 = vmatprep.subr.mxu0 0.0
    %184 = vmatpush1.msra.mxu0 0.0
    %185 = vmatprep.subr.mxu0 0.0
    %186 = vmatpush1.msra.mxu0 0.0
    %187 = vmatprep.subr.mxu0 0.0
    %188 = vmatpush1.msra.mxu0 0.0
    %189 = vmatprep.subr.mxu0 0.0
    %190 = vmatpush1.msra.mxu0 0.0
    %191 = vmatprep.subr.mxu0 0.0
    %192 = vmatpush1.msra.mxu0 0.0
    %193 = vmatprep.subr.mxu0 0.0
    %194 = vmatpush1.msra.mxu0 0.0
    %195 = vmatprep.mubr.f32.mxu0 0.0
    %196 = vmatmul.mubr.f32.gmra.mrb[0].mxu0 %v127
    %v197 = vpop.f32.mrb[0].mxu0
    %v198 = vadd.f32 %v82, %v197
    %v199 = vpop.f32.mrb[0].mxu0
    %200 = vmatprep.mubr.f32.mxu0 0.0
    %201 = vmatmul.mubr.f32.gmra.mrb[0].mxu0 %v129
    %v202 = vpop.f32.mrb[0].mxu0
    %v203 = vadd.f32 %v82, %v202
    %v204 = vpop.f32.mrb[0].mxu0
    %205 = vdwg.mxu0
    %v206 = vmax.f32 %v198, 0.0
    %v207 = vmax.f32 %v203, 0.0
    %v208 = vld [vmem:[#allocation5] sm:$0xff]
    %v209 = vld [vmem:[#allocation5 + $0x8] sm:$0xff]
    %v210 = vld [vmem:[#allocation5 + $0x10] sm:$0xff]
    %v211 = vld [vmem:[#allocation5 + $0x18] sm:$0xff]
    %v212 = vld [vmem:[#allocation5 + $0x20] sm:$0xff]
    %v213 = vld [vmem:[#allocation5 + $0x28] sm:$0xff]
    %v214 = vld [vmem:[#allocation5 + $0x30] sm:$0xff]
    %v215 = vld [vmem:[#allocation5 + $0x38] sm:$0xff]
    %v216 = vld [vmem:[#allocation5 + $0x40] sm:$0xff]
    %v217 = vld [vmem:[#allocation5 + $0x48] sm:$0xff]
    %v218 = vld [vmem:[#allocation5 + $0x50] sm:$0xff]
    %v219 = vld [vmem:[#allocation5 + $0x58] sm:$0xff]
    %v220 = vld [vmem:[#allocation5 + $0x60] sm:$0xff]
    %v221 = vld [vmem:[#allocation5 + $0x68] sm:$0xff]
    %v222 = vld [vmem:[#allocation5 + $0x70] sm:$0xff]
    %v223 = vld [vmem:[#allocation5 + $0x78] sm:$0xff]
    %v224 = vld [vmem:[#allocation5 + $0x80] sm:$0xff]
    %v225 = vld [vmem:[#allocation5 + $0x88] sm:$0xff]
    %v226 = vld [vmem:[#allocation5 + $0x90] sm:$0xff]
    %v227 = vld [vmem:[#allocation5 + $0x98] sm:$0xff]
    %v228 = vld [vmem:[#allocation5 + $0xa0] sm:$0xff]
    %v229 = vld [vmem:[#allocation5 + $0xa8] sm:$0xff]
    %v230 = vld [vmem:[#allocation5 + $0xb0] sm:$0xff]
    %v231 = vld [vmem:[#allocation5 + $0xb8] sm:$0xff]
    %v232 = vld [vmem:[#allocation5 + $0xc0] sm:$0xff]
    %v233 = vld [vmem:[#allocation5 + $0xc8] sm:$0xff]
    %v234 = vld [vmem:[#allocation5 + $0xd0] sm:$0xff]
    %v235 = vld [vmem:[#allocation5 + $0xd8] sm:$0xff]
    %v236 = vld [vmem:[#allocation5 + $0xe0] sm:$0xff]
    %v237 = vld [vmem:[#allocation5 + $0xe8] sm:$0xff]
    %v238 = vld [vmem:[#allocation5 + $0xf0] sm:$0xff]
    %v239 = vld [vmem:[#allocation5 + $0xf8] sm:$0xff]
    %v240 = vld [vmem:[#allocation5 + $0x100] sm:$0xff]
    %v241 = vld [vmem:[#allocation5 + $0x108] sm:$0xff]
    %v242 = vld [vmem:[#allocation5 + $0x110] sm:$0xff]
    %v243 = vld [vmem:[#allocation5 + $0x118] sm:$0xff]
    %v244 = vld [vmem:[#allocation5 + $0x120] sm:$0xff]
    %v245 = vld [vmem:[#allocation5 + $0x128] sm:$0xff]
    %v246 = vld [vmem:[#allocation5 + $0x130] sm:$0xff]
    %v247 = vld [vmem:[#allocation5 + $0x138] sm:$0xff]
    %v248 = vld [vmem:[#allocation5 + $0x140] sm:$0xff]
    %v249 = vld [vmem:[#allocation5 + $0x148] sm:$0xff]
    %v250 = vld [vmem:[#allocation5 + $0x150] sm:$0xff]
    %v251 = vld [vmem:[#allocation5 + $0x158] sm:$0xff]
    %v252 = vld [vmem:[#allocation5 + $0x160] sm:$0xff]
    %v253 = vld [vmem:[#allocation5 + $0x168] sm:$0xff]
    %v254 = vld [vmem:[#allocation5 + $0x170] sm:$0xff]
    %v255 = vld [vmem:[#allocation5 + $0x178] sm:$0xff]
    %v256 = vld [vmem:[%s5] sm:$0x7]
    %v258 = vlaneseq
    %v259 = vshrl.u32 %v258, 7
    %v260 = vsub.s32 0, %v259
    %v261 = vrot.slane %v256, %v260
    %v262 = vlaneseq
    %v263 = vshrl.u32 %v262, 7
    %v264 = vsub.s32 1, %v263
    %v265 = vrot.slane %v256, %v264
    %v266 = vlaneseq
    %v267 = vshrl.u32 %v266, 7
    %v268 = vsub.s32 2, %v267
    %v269 = vrot.slane %v256, %v268
    %273 = vmatprep.subr.mxu0 %v209
    %274 = vmatpush1.msra.mxu0 %v208
    %275 = vmatprep.subr.mxu0 %v212
    %276 = vmatpush1.msra.mxu0 %v211
    %277 = vmatprep.subr.mxu0 %v215
    %278 = vmatpush1.msra.mxu0 %v214
    %279 = vmatprep.subr.mxu0 %v218
    %280 = vmatpush1.msra.mxu0 %v217
    %281 = vmatprep.subr.mxu0 %v221
    %282 = vmatpush1.msra.mxu0 %v220
    %283 = vmatprep.subr.mxu0 %v224
    %284 = vmatpush1.msra.mxu0 %v223
    %285 = vmatprep.subr.mxu0 %v227
    %286 = vmatpush1.msra.mxu0 %v226
    %287 = vmatprep.subr.mxu0 %v230
    %288 = vmatpush1.msra.mxu0 %v229
    %289 = vmatprep.subr.mxu0 %v233
    %290 = vmatpush1.msra.mxu0 %v232
    %291 = vmatprep.subr.mxu0 %v236
    %292 = vmatpush1.msra.mxu0 %v235
    %293 = vmatprep.subr.mxu0 %v239
    %294 = vmatpush1.msra.mxu0 %v238
    %295 = vmatprep.subr.mxu0 %v242
    %296 = vmatpush1.msra.mxu0 %v241
    %297 = vmatprep.subr.mxu0 %v245
    %298 = vmatpush1.msra.mxu0 %v244
    %299 = vmatprep.subr.mxu0 %v248
    %300 = vmatpush1.msra.mxu0 %v247
    %301 = vmatprep.subr.mxu0 %v251
    %302 = vmatpush1.msra.mxu0 %v250
    %303 = vmatprep.subr.mxu0 %v254
    %304 = vmatpush1.msra.mxu0 %v253
    %305 = vmatprep.subr.mxu0 0.0
    %306 = vmatpush1.msra.mxu0 0.0
    %307 = vmatprep.subr.mxu0 0.0
    %308 = vmatpush1.msra.mxu0 0.0
    %309 = vmatprep.subr.mxu0 0.0
    %310 = vmatpush1.msra.mxu0 0.0
    %311 = vmatprep.subr.mxu0 0.0
    %312 = vmatpush1.msra.mxu0 0.0
    %313 = vmatprep.subr.mxu0 0.0
    %314 = vmatpush1.msra.mxu0 0.0
    %315 = vmatprep.subr.mxu0 0.0
    %316 = vmatpush1.msra.mxu0 0.0
    %317 = vmatprep.subr.mxu0 0.0
    %318 = vmatpush1.msra.mxu0 0.0
    %319 = vmatprep.subr.mxu0 0.0
    %320 = vmatpush1.msra.mxu0 0.0
    %321 = vmatprep.subr.mxu0 0.0
    %322 = vmatpush1.msra.mxu0 0.0
    %323 = vmatprep.subr.mxu0 0.0
    %324 = vmatpush1.msra.mxu0 0.0
    %325 = vmatprep.subr.mxu0 0.0
    %326 = vmatpush1.msra.mxu0 0.0
    %327 = vmatprep.subr.mxu0 0.0
    %328 = vmatpush1.msra.mxu0 0.0
    %329 = vmatprep.subr.mxu0 0.0
    %330 = vmatpush1.msra.mxu0 0.0
    %331 = vmatprep.subr.mxu0 0.0
    %332 = vmatpush1.msra.mxu0 0.0
    %333 = vmatprep.subr.mxu0 0.0
    %334 = vmatpush1.msra.mxu0 0.0
    %335 = vmatprep.subr.mxu0 0.0
    %336 = vmatpush1.msra.mxu0 0.0
    %337 = vmatprep.mubr.f32.mxu0 0.0
    %338 = vmatmul.mubr.f32.gmra.mrb[0].mxu0 %v206
    %v339 = vpop.f32.mrb[0].mxu0
    %v340 = vadd.f32 %v261, %v339
    %v341 = vpop.f32.mrb[0].mxu0
    %v342 = vadd.f32 %v265, %v341
    %343 = vmatprep.mubr.f32.mxu0 0.0
    %344 = vmatmul.mubr.f32.gmra.mrb[0].mxu0 %v207
    %v345 = vpop.f32.mrb[0].mxu0
    %v346 = vadd.f32 %v261, %v345
    %v347 = vpop.f32.mrb[0].mxu0
    %v348 = vadd.f32 %v265, %v347
    %349 = vdwg.mxu0
    %350 = vmatprep.subr.mxu0 0.0
    %351 = vmatpush1.msra.mxu0 %v210
    %352 = vmatprep.subr.mxu0 0.0
    %353 = vmatpush1.msra.mxu0 %v213
    %354 = vmatprep.subr.mxu0 0.0
    %355 = vmatpush1.msra.mxu0 %v216
    %356 = vmatprep.subr.mxu0 0.0
    %357 = vmatpush1.msra.mxu0 %v219
    %358 = vmatprep.subr.mxu0 0.0
    %359 = vmatpush1.msra.mxu0 %v222
    %360 = vmatprep.subr.mxu0 0.0
    %361 = vmatpush1.msra.mxu0 %v225
    %362 = vmatprep.subr.mxu0 0.0
    %363 = vmatpush1.msra.mxu0 %v228
    %364 = vmatprep.subr.mxu0 0.0
    %365 = vmatpush1.msra.mxu0 %v231
    %366 = vmatprep.subr.mxu0 0.0
    %367 = vmatpush1.msra.mxu0 %v234
    %368 = vmatprep.subr.mxu0 0.0
    %369 = vmatpush1.msra.mxu0 %v237
    %370 = vmatprep.subr.mxu0 0.0
    %371 = vmatpush1.msra.mxu0 %v240
    %372 = vmatprep.subr.mxu0 0.0
    %373 = vmatpush1.msra.mxu0 %v243
    %374 = vmatprep.subr.mxu0 0.0
    %375 = vmatpush1.msra.mxu0 %v246
    %376 = vmatprep.subr.mxu0 0.0
    %377 = vmatpush1.msra.mxu0 %v249
    %378 = vmatprep.subr.mxu0 0.0
    %379 = vmatpush1.msra.mxu0 %v252
    %380 = vmatprep.subr.mxu0 0.0
    %381 = vmatpush1.msra.mxu0 %v255
    %382 = vmatprep.subr.mxu0 0.0
    %383 = vmatpush1.msra.mxu0 0.0
    %384 = vmatprep.subr.mxu0 0.0
    %385 = vmatpush1.msra.mxu0 0.0
    %386 = vmatprep.subr.mxu0 0.0
    %387 = vmatpush1.msra.mxu0 0.0
    %388 = vmatprep.subr.mxu0 0.0
    %389 = vmatpush1.msra.mxu0 0.0
    %390 = vmatprep.subr.mxu0 0.0
    %391 = vmatpush1.msra.mxu0 0.0
    %392 = vmatprep.subr.mxu0 0.0
    %393 = vmatpush1.msra.mxu0 0.0
    %394 = vmatprep.subr.mxu0 0.0
    %395 = vmatpush1.msra.mxu0 0.0
    %396 = vmatprep.subr.mxu0 0.0
    %397 = vmatpush1.msra.mxu0 0.0
    %398 = vmatprep.subr.mxu0 0.0
    %399 = vmatpush1.msra.mxu0 0.0
    %400 = vmatprep.subr.mxu0 0.0
    %401 = vmatpush1.msra.mxu0 0.0
    %402 = vmatprep.subr.mxu0 0.0
    %403 = vmatpush1.msra.mxu0 0.0
    %404 = vmatprep.subr.mxu0 0.0
    %405 = vmatpush1.msra.mxu0 0.0
    %406 = vmatprep.subr.mxu0 0.0
    %407 = vmatpush1.msra.mxu0 0.0
    %408 = vmatprep.subr.mxu0 0.0
    %409 = vmatpush1.msra.mxu0 0.0
    %410 = vmatprep.subr.mxu0 0.0
    %411 = vmatpush1.msra.mxu0 0.0
    %412 = vmatprep.subr.mxu0 0.0
    %413 = vmatpush1.msra.mxu0 0.0
    %414 = vmatprep.mubr.f32.mxu0 0.0
    %415 = vmatmul.mubr.f32.gmra.mrb[0].mxu0 %v206
    %v416 = vpop.f32.mrb[0].mxu0
    %v417 = vadd.f32 %v269, %v416
    %v418 = vpop.f32.mrb[0].mxu0
    %419 = vmatprep.mubr.f32.mxu0 0.0
    %420 = vmatmul.mubr.f32.gmra.mrb[0].mxu0 %v207
    %v421 = vpop.f32.mrb[0].mxu0
    %v422 = vadd.f32 %v269, %v421
    %v423 = vpop.f32.mrb[0].mxu0
    %424 = vdwg.mxu0
    %v431 = vcombine.low %v340, %v342
    %v432 = vcombine.high %v340, %v342
    %v433 = vcombine.high %v417, %v417
    %v435 = vunpack.c.l.s4 1983009808
    %v436 = vunpack.c.0.s8 %v435
    %v437 = vlaneseq
    %v438 = vshrl.u32 %v437, 7
    %v439 = vsub.s32 %v436, %v438
    %v440 = vrot.slane %v431, %v439
    %v442 = vunpack.c.l.s4 1983009808
    %v443 = vunpack.c.0.s8 %v442
    %v444 = vlaneseq
    %v445 = vshrl.u32 %v444, 7
    %v446 = vsub.s32 %v443, %v445
    %v447 = vrot.slane %v432, %v446
    %v449 = vunpack.c.l.s4 1983009808
    %v450 = vunpack.c.0.s8 %v449
    %v451 = vlaneseq
    %v452 = vshrl.u32 %v451, 7
    %v453 = vsub.s32 %v450, %v452
    %v454 = vrot.slane %v417, %v453
    %v456 = vunpack.c.l.s4 1983009808
    %v457 = vunpack.c.0.s8 %v456
    %v458 = vlaneseq
    %v459 = vshrl.u32 %v458, 7
    %v460 = vsub.s32 %v457, %v459
    %v461 = vrot.slane %v433, %v460
    %v462 = vcombine.low %v440, %v454
    %v463 = vcombine.high %v440, %v454
    %v464 = vcombine.low %v447, %v461
    %v465 = vcombine.high %v447, %v461
    %v466 = vcombine.low %v346, %v348
    %v467 = vcombine.high %v346, %v348
    %v468 = vcombine.high %v422, %v422
    %v470 = vunpack.c.l.s4 1983009808
    %v471 = vunpack.c.0.s8 %v470
    %v472 = vlaneseq
    %v473 = vshrl.u32 %v472, 7
    %v474 = vsub.s32 %v471, %v473
    %v475 = vrot.slane %v466, %v474
    %v477 = vunpack.c.l.s4 1983009808
    %v478 = vunpack.c.0.s8 %v477
    %v479 = vlaneseq
    %v480 = vshrl.u32 %v479, 7
    %v481 = vsub.s32 %v478, %v480
    %v482 = vrot.slane %v467, %v481
    %v484 = vunpack.c.l.s4 1983009808
    %v485 = vunpack.c.0.s8 %v484
    %v486 = vlaneseq
    %v487 = vshrl.u32 %v486, 7
    %v488 = vsub.s32 %v485, %v487
    %v489 = vrot.slane %v422, %v488
    %v491 = vunpack.c.l.s4 1983009808
    %v492 = vunpack.c.0.s8 %v491
    %v493 = vlaneseq
    %v494 = vshrl.u32 %v493, 7
    %v495 = vsub.s32 %v492, %v494
    %v496 = vrot.slane %v468, %v495
    %v497 = vcombine.low %v475, %v489
    %v498 = vcombine.high %v475, %v489
    %v499 = vcombine.low %v482, %v496
    %v500 = vcombine.high %v482, %v496
    %509 = vst [vmem:[#allocation2] sm:$0x3f] %v462
    %510 = vst [vmem:[#allocation2 + $0x6] sm:$0x3f] %v463
    %511 = vst [vmem:[#allocation2 + $0xc] sm:$0x3f] %v464
    %512 = vst [vmem:[#allocation2 + $0x12] sm:$0x3f] %v465
    %513 = vst [vmem:[#allocation2 + $0x18] sm:$0x3f] %v497
    %514 = vst [vmem:[#allocation2 + $0x1e] sm:$0x3f] %v498
    %515 = vst [vmem:[#allocation2 + $0x24] sm:$0x3f] %v499
    %516 = vst [vmem:[#allocation2 + $0x2a] sm:$0x3f] %v500
    %v517 = vld [vmem:[%s6] sm:$0x1]
    %v519 = vlaneseq
    %v520 = vshrl.u32 %v519, 7
    %v521 = vsub.s32 0, %v520
    %v522 = vrot.slane %v517, %v521
    %v524 = vld [vmem:[#allocation2] sm:$0x3f]
    %v525 = vld [vmem:[#allocation8] sm:$0xff]
    %v526 = vld [vmem:[#allocation8 + $0x8] sm:$0xff]
    %v527 = vld [vmem:[#allocation8 + $0x10] sm:$0xff]
    %v528 = vld [vmem:[#allocation8 + $0x18] sm:$0xff]
    %v529 = vld [vmem:[#allocation8 + $0x20] sm:$0xff]
    %v530 = vld [vmem:[#allocation8 + $0x28] sm:$0xff]
    %v531 = vld [vmem:[#allocation8 + $0x30] sm:$0xff]
    %v532 = vld [vmem:[#allocation8 + $0x38] sm:$0xff]
    %v533 = vld [vmem:[#allocation8 + $0x40] sm:$0xff]
    %v534 = vld [vmem:[#allocation8 + $0x48] sm:$0xff]
    %v535 = vld [vmem:[#allocation8 + $0x50] sm:$0xff]
    %v536 = vld [vmem:[#allocation8 + $0x58] sm:$0xff]
    %v537 = vld [vmem:[#allocation8 + $0x60] sm:$0xff]
    %v538 = vld [vmem:[#allocation8 + $0x68] sm:$0xff]
    %v539 = vld [vmem:[#allocation8 + $0x70] sm:$0xff]
    %v540 = vld [vmem:[#allocation8 + $0x78] sm:$0xff]
    %v541 = vld [vmem:[#allocation8 + $0x80] sm:$0xff]
    %v542 = vld [vmem:[#allocation8 + $0x88] sm:$0xff]
    %v543 = vld [vmem:[#allocation8 + $0x90] sm:$0xff]
    %v544 = vld [vmem:[#allocation8 + $0x98] sm:$0xff]
    %v545 = vld [vmem:[#allocation8 + $0xa0] sm:$0xff]
    %v546 = vld [vmem:[#allocation8 + $0xa8] sm:$0xff]
    %v547 = vld [vmem:[#allocation8 + $0xb0] sm:$0xff]
    %v548 = vld [vmem:[#allocation8 + $0xb8] sm:$0xff]
    %v549 = vld [vmem:[#allocation8 + $0xc0] sm:$0xff]
    %v550 = vld [vmem:[#allocation8 + $0xc8] sm:$0xff]
    %v551 = vld [vmem:[#allocation8 + $0xd0] sm:$0xff]
    %v552 = vld [vmem:[#allocation8 + $0xd8] sm:$0xff]
    %v553 = vld [vmem:[#allocation8 + $0xe0] sm:$0xff]
    %v554 = vld [vmem:[#allocation8 + $0xe8] sm:$0xff]
    %v555 = vld [vmem:[#allocation8 + $0xf0] sm:$0xff]
    %v556 = vld [vmem:[#allocation8 + $0xf8] sm:$0xff]
    %v557 = vld [vmem:[#allocation8 + $0x100] sm:$0xff]
    %v558 = vld [vmem:[#allocation8 + $0x108] sm:$0xff]
    %v559 = vld [vmem:[#allocation8 + $0x110] sm:$0xff]
    %v560 = vld [vmem:[#allocation8 + $0x118] sm:$0xff]
    %v561 = vld [vmem:[#allocation8 + $0x120] sm:$0xff]
    %v562 = vld [vmem:[#allocation8 + $0x128] sm:$0xff]
    %v563 = vld [vmem:[#allocation8 + $0x130] sm:$0xff]
    %v564 = vld [vmem:[#allocation8 + $0x138] sm:$0xff]
    %v565 = vld [vmem:[#allocation8 + $0x140] sm:$0xff]
    %v566 = vld [vmem:[#allocation8 + $0x148] sm:$0xff]
    %v567 = vld [vmem:[#allocation8 + $0x150] sm:$0xff]
    %v568 = vld [vmem:[#allocation8 + $0x158] sm:$0xff]
    %v569 = vld [vmem:[#allocation8 + $0x160] sm:$0xff]
    %v570 = vld [vmem:[#allocation8 + $0x168] sm:$0xff]
    %v571 = vld [vmem:[#allocation8 + $0x170] sm:$0xff]
    %v572 = vld [vmem:[#allocation8 + $0x178] sm:$0xff]
    %573 = vmatprep.subr.mxu0 %v526
    %574 = vmatpush1.msra.mxu0 %v525
    %575 = vmatprep.subr.mxu0 %v529
    %576 = vmatpush1.msra.mxu0 %v528
    %577 = vmatprep.subr.mxu0 %v532
    %578 = vmatpush1.msra.mxu0 %v531
    %579 = vmatprep.subr.mxu0 %v535
    %580 = vmatpush1.msra.mxu0 %v534
    %581 = vmatprep.subr.mxu0 %v538
    %582 = vmatpush1.msra.mxu0 %v537
    %583 = vmatprep.subr.mxu0 %v541
    %584 = vmatpush1.msra.mxu0 %v540
    %585 = vmatprep.subr.mxu0 %v544
    %586 = vmatpush1.msra.mxu0 %v543
    %587 = vmatprep.subr.mxu0 %v547
    %588 = vmatpush1.msra.mxu0 %v546
    %589 = vmatprep.subr.mxu0 %v550
    %590 = vmatpush1.msra.mxu0 %v549
    %591 = vmatprep.subr.mxu0 %v553
    %592 = vmatpush1.msra.mxu0 %v552
    %593 = vmatprep.subr.mxu0 %v556
    %594 = vmatpush1.msra.mxu0 %v555
    %595 = vmatprep.subr.mxu0 %v559
    %596 = vmatpush1.msra.mxu0 %v558
    %597 = vmatprep.subr.mxu0 %v562
    %598 = vmatpush1.msra.mxu0 %v561
    %599 = vmatprep.subr.mxu0 %v565
    %600 = vmatpush1.msra.mxu0 %v564
    %601 = vmatprep.subr.mxu0 %v568
    %602 = vmatpush1.msra.mxu0 %v567
    %603 = vmatprep.subr.mxu0 %v571
    %604 = vmatpush1.msra.mxu0 %v570
    %605 = vmatprep.subr.mxu0 0.0
    %606 = vmatpush1.msra.mxu0 0.0
    %607 = vmatprep.subr.mxu0 0.0
    %608 = vmatpush1.msra.mxu0 0.0
    %609 = vmatprep.subr.mxu0 0.0
    %610 = vmatpush1.msra.mxu0 0.0
    %611 = vmatprep.subr.mxu0 0.0
    %612 = vmatpush1.msra.mxu0 0.0
    %613 = vmatprep.subr.mxu0 0.0
    %614 = vmatpush1.msra.mxu0 0.0
    %615 = vmatprep.subr.mxu0 0.0
    %616 = vmatpush1.msra.mxu0 0.0
    %617 = vmatprep.subr.mxu0 0.0
    %618 = vmatpush1.msra.mxu0 0.0
    %619 = vmatprep.subr.mxu0 0.0
    %620 = vmatpush1.msra.mxu0 0.0
    %621 = vmatprep.subr.mxu0 0.0
    %622 = vmatpush1.msra.mxu0 0.0
    %623 = vmatprep.subr.mxu0 0.0
    %624 = vmatpush1.msra.mxu0 0.0
    %625 = vmatprep.subr.mxu0 0.0
    %626 = vmatpush1.msra.mxu0 0.0
    %627 = vmatprep.subr.mxu0 0.0
    %628 = vmatpush1.msra.mxu0 0.0
    %629 = vmatprep.subr.mxu0 0.0
    %630 = vmatpush1.msra.mxu0 0.0
    %631 = vmatprep.subr.mxu0 0.0
    %632 = vmatpush1.msra.mxu0 0.0
    %633 = vmatprep.subr.mxu0 0.0
    %634 = vmatpush1.msra.mxu0 0.0
    %635 = vmatprep.subr.mxu0 0.0
    %636 = vmatpush1.msra.mxu0 0.0
    %637 = vmatprep.mubr.f32.mxu0 0.0
    %638 = vmatmul.mubr.f32.gmra.mrb[0].mxu0 0.0
    %v639 = vpop.f32.mrb[0].mxu0
    %v640 = vadd.f32 0.0, %v639
    %v641 = vpop.f32.mrb[0].mxu0
    %v642 = vadd.f32 0.0, %v641
    %643 = vdwg.mxu0
    %644 = vmatprep.subr.mxu0 0.0
    %645 = vmatpush1.msra.mxu0 %v527
    %646 = vmatprep.subr.mxu0 0.0
    %647 = vmatpush1.msra.mxu0 %v530
    %648 = vmatprep.subr.mxu0 0.0
    %649 = vmatpush1.msra.mxu0 %v533
    %650 = vmatprep.subr.mxu0 0.0
    %651 = vmatpush1.msra.mxu0 %v536
    %652 = vmatprep.subr.mxu0 0.0
    %653 = vmatpush1.msra.mxu0 %v539
    %654 = vmatprep.subr.mxu0 0.0
    %655 = vmatpush1.msra.mxu0 %v542
    %656 = vmatprep.subr.mxu0 0.0
    %657 = vmatpush1.msra.mxu0 %v545
    %658 = vmatprep.subr.mxu0 0.0
    %659 = vmatpush1.msra.mxu0 %v548
    %660 = vmatprep.subr.mxu0 0.0
    %661 = vmatpush1.msra.mxu0 %v551
    %662 = vmatprep.subr.mxu0 0.0
    %663 = vmatpush1.msra.mxu0 %v554
    %664 = vmatprep.subr.mxu0 0.0
    %665 = vmatpush1.msra.mxu0 %v557
    %666 = vmatprep.subr.mxu0 0.0
    %667 = vmatpush1.msra.mxu0 %v560
    %668 = vmatprep.subr.mxu0 0.0
    %669 = vmatpush1.msra.mxu0 %v563
    %670 = vmatprep.subr.mxu0 0.0
    %671 = vmatpush1.msra.mxu0 %v566
    %672 = vmatprep.subr.mxu0 0.0
    %673 = vmatpush1.msra.mxu0 %v569
    %674 = vmatprep.subr.mxu0 0.0
    %675 = vmatpush1.msra.mxu0 %v572
    %676 = vmatprep.subr.mxu0 0.0
    %677 = vmatpush1.msra.mxu0 0.0
    %678 = vmatprep.subr.mxu0 0.0
    %679 = vmatpush1.msra.mxu0 0.0
    %680 = vmatprep.subr.mxu0 0.0
    %681 = vmatpush1.msra.mxu0 0.0
    %682 = vmatprep.subr.mxu0 0.0
    %683 = vmatpush1.msra.mxu0 0.0
    %684 = vmatprep.subr.mxu0 0.0
    %685 = vmatpush1.msra.mxu0 0.0
    %686 = vmatprep.subr.mxu0 0.0
    %687 = vmatpush1.msra.mxu0 0.0
    %688 = vmatprep.subr.mxu0 0.0
    %689 = vmatpush1.msra.mxu0 0.0
    %690 = vmatprep.subr.mxu0 0.0
    %691 = vmatpush1.msra.mxu0 0.0
    %692 = vmatprep.subr.mxu0 0.0
    %693 = vmatpush1.msra.mxu0 0.0
    %694 = vmatprep.subr.mxu0 0.0
    %695 = vmatpush1.msra.mxu0 0.0
    %696 = vmatprep.subr.mxu0 0.0
    %697 = vmatpush1.msra.mxu0 0.0
    %698 = vmatprep.subr.mxu0 0.0
    %699 = vmatpush1.msra.mxu0 0.0
    %700 = vmatprep.subr.mxu0 0.0
    %701 = vmatpush1.msra.mxu0 0.0
    %702 = vmatprep.subr.mxu0 0.0
    %703 = vmatpush1.msra.mxu0 0.0
    %704 = vmatprep.subr.mxu0 0.0
    %705 = vmatpush1.msra.mxu0 0.0
    %706 = vmatprep.subr.mxu0 0.0
    %707 = vmatpush1.msra.mxu0 0.0
    %708 = vmatprep.mubr.f32.mxu0 0.0
    %709 = vmatmul.mubr.f32.gmra.mrb[0].mxu0 0.0
    %v710 = vpop.f32.mrb[0].mxu0
    %v711 = vadd.f32 0.0, %v710
    %v712 = vpop.f32.mrb[0].mxu0
    %713 = vdwg.mxu0
    %v716 = vcombine.low %v640, %v642
    %v718 = vunpack.c.l.s4 1983009808
    %v719 = vunpack.c.0.s8 %v718
    %v720 = vlaneseq
    %v721 = vshrl.u32 %v720, 7
    %v722 = vsub.s32 %v719, %v721
    %v723 = vrot.slane %v716, %v722
    %v725 = vadd.f32 %v524, %v723
    %v726 = vxor.u32 %v725, 2147483648
    %v727 = vmul.f32 %v726, 1.442695
    %v728 = vpow.pop %v727
    %v729 = vadd.f32 %v728, 1.0
    %v730 = vrcp.pop %v729
    %v731 = vmul.f32 1.0, %v730
    %v732 = vadd.f32 %v711, %v522
    %v733 = vmul.f32 %v731, %v732
    %v735 = vrot.slane %v524, 4
    %v737 = vadd.f32 %v735, %v733
    %v738 = vtanh.pop %v737
    %v740 = vrot.slane %v731, 2
    %v742 = vsub.f32 1.0, %v740
    %v743 = vmul.f32 %v742, %v738
    %v744 = vmul.f32 %v740, 0.0
    %v745 = vadd.f32 %v743, %v744
    %746 = vst [vmem:[#allocation3] sm:$0x3] %v745
    %s747 = scalar_lea.vmem [#allocation2], 6
    %v748 = vld [vmem:[%s747] sm:$0x3f]
    %v749 = vld [vmem:[#allocation8] sm:$0xff]
    %v750 = vld [vmem:[#allocation8 + $0x8] sm:$0xff]
    %v751 = vld [vmem:[#allocation8 + $0x10] sm:$0xff]
    %v752 = vld [vmem:[#allocation8 + $0x18] sm:$0xff]
    %v753 = vld [vmem:[#allocation8 + $0x20] sm:$0xff]
    %v754 = vld [vmem:[#allocation8 + $0x28] sm:$0xff]
    %v755 = vld [vmem:[#allocation8 + $0x30] sm:$0xff]
    %v756 = vld [vmem:[#allocation8 + $0x38] sm:$0xff]
    %v757 = vld [vmem:[#allocation8 + $0x40] sm:$0xff]
    %v758 = vld [vmem:[#allocation8 + $0x48] sm:$0xff]
    %v759 = vld [vmem:[#allocation8 + $0x50] sm:$0xff]
    %v760 = vld [vmem:[#allocation8 + $0x58] sm:$0xff]
    %v761 = vld [vmem:[#allocation8 + $0x60] sm:$0xff]
    %v762 = vld [vmem:[#allocation8 + $0x68] sm:$0xff]
    %v763 = vld [vmem:[#allocation8 + $0x70] sm:$0xff]
    %v764 = vld [vmem:[#allocation8 + $0x78] sm:$0xff]
    %v765 = vld [vmem:[#allocation8 + $0x80] sm:$0xff]
    %v766 = vld [vmem:[#allocation8 + $0x88] sm:$0xff]
    %v767 = vld [vmem:[#allocation8 + $0x90] sm:$0xff]
    %v768 = vld [vmem:[#allocation8 + $0x98] sm:$0xff]
    %v769 = vld [vmem:[#allocation8 + $0xa0] sm:$0xff]
    %v770 = vld [vmem:[#allocation8 + $0xa8] sm:$0xff]
    %v771 = vld [vmem:[#allocation8 + $0xb0] sm:$0xff]
    %v772 = vld [vmem:[#allocation8 + $0xb8] sm:$0xff]
    %v773 = vld [vmem:[#allocation8 + $0xc0] sm:$0xff]
    %v774 = vld [vmem:[#allocation8 + $0xc8] sm:$0xff]
    %v775 = vld [vmem:[#allocation8 + $0xd0] sm:$0xff]
    %v776 = vld [vmem:[#allocation8 + $0xd8] sm:$0xff]
    %v777 = vld [vmem:[#allocation8 + $0xe0] sm:$0xff]
    %v778 = vld [vmem:[#allocation8 + $0xe8] sm:$0xff]
    %v779 = vld [vmem:[#allocation8 + $0xf0] sm:$0xff]
    %v780 = vld [vmem:[#allocation8 + $0xf8] sm:$0xff]
    %v781 = vld [vmem:[#allocation8 + $0x100] sm:$0xff]
    %v782 = vld [vmem:[#allocation8 + $0x108] sm:$0xff]
    %v783 = vld [vmem:[#allocation8 + $0x110] sm:$0xff]
    %v784 = vld [vmem:[#allocation8 + $0x118] sm:$0xff]
    %v785 = vld [vmem:[#allocation8 + $0x120] sm:$0xff]
    %v786 = vld [vmem:[#allocation8 + $0x128] sm:$0xff]
    %v787 = vld [vmem:[#allocation8 + $0x130] sm:$0xff]
    %v788 = vld [vmem:[#allocation8 + $0x138] sm:$0xff]
    %v789 = vld [vmem:[#allocation8 + $0x140] sm:$0xff]
    %v790 = vld [vmem:[#allocation8 + $0x148] sm:$0xff]
    %v791 = vld [vmem:[#allocation8 + $0x150] sm:$0xff]
    %v792 = vld [vmem:[#allocation8 + $0x158] sm:$0xff]
    %v793 = vld [vmem:[#allocation8 + $0x160] sm:$0xff]
    %v794 = vld [vmem:[#allocation8 + $0x168] sm:$0xff]
    %v795 = vld [vmem:[#allocation8 + $0x170] sm:$0xff]
    %v796 = vld [vmem:[#allocation8 + $0x178] sm:$0xff]
    %797 = vmatprep.subr.mxu0 %v750
    %798 = vmatpush1.msra.mxu0 %v749
    %799 = vmatprep.subr.mxu0 %v753
    %800 = vmatpush1.msra.mxu0 %v752
    %801 = vmatprep.subr.mxu0 %v756
    %802 = vmatpush1.msra.mxu0 %v755
    %803 = vmatprep.subr.mxu0 %v759
    %804 = vmatpush1.msra.mxu0 %v758
    %805 = vmatprep.subr.mxu0 %v762
    %806 = vmatpush1.msra.mxu0 %v761
    %807 = vmatprep.subr.mxu0 %v765
    %808 = vmatpush1.msra.mxu0 %v764
    %809 = vmatprep.subr.mxu0 %v768
    %810 = vmatpush1.msra.mxu0 %v767
    %811 = vmatprep.subr.mxu0 %v771
    %812 = vmatpush1.msra.mxu0 %v770
    %813 = vmatprep.subr.mxu0 %v774
    %814 = vmatpush1.msra.mxu0 %v773
    %815 = vmatprep.subr.mxu0 %v777
    %816 = vmatpush1.msra.mxu0 %v776
    %817 = vmatprep.subr.mxu0 %v780
    %818 = vmatpush1.msra.mxu0 %v779
    %819 = vmatprep.subr.mxu0 %v783
    %820 = vmatpush1.msra.mxu0 %v782
    %821 = vmatprep.subr.mxu0 %v786
    %822 = vmatpush1.msra.mxu0 %v785
    %823 = vmatprep.subr.mxu0 %v789
    %824 = vmatpush1.msra.mxu0 %v788
    %825 = vmatprep.subr.mxu0 %v792
    %826 = vmatpush1.msra.mxu0 %v791
    %827 = vmatprep.subr.mxu0 %v795
    %828 = vmatpush1.msra.mxu0 %v794
    %829 = vmatprep.subr.mxu0 0.0
    %830 = vmatpush1.msra.mxu0 0.0
    %831 = vmatprep.subr.mxu0 0.0
    %832 = vmatpush1.msra.mxu0 0.0
    %833 = vmatprep.subr.mxu0 0.0
    %834 = vmatpush1.msra.mxu0 0.0
    %835 = vmatprep.subr.mxu0 0.0
    %836 = vmatpush1.msra.mxu0 0.0
    %837 = vmatprep.subr.mxu0 0.0
    %838 = vmatpush1.msra.mxu0 0.0
    %839 = vmatprep.subr.mxu0 0.0
    %840 = vmatpush1.msra.mxu0 0.0
    %841 = vmatprep.subr.mxu0 0.0
    %842 = vmatpush1.msra.mxu0 0.0
    %843 = vmatprep.subr.mxu0 0.0
    %844 = vmatpush1.msra.mxu0 0.0
    %845 = vmatprep.subr.mxu0 0.0
    %846 = vmatpush1.msra.mxu0 0.0
    %847 = vmatprep.subr.mxu0 0.0
    %848 = vmatpush1.msra.mxu0 0.0
    %849 = vmatprep.subr.mxu0 0.0
    %850 = vmatpush1.msra.mxu0 0.0
    %851 = vmatprep.subr.mxu0 0.0
    %852 = vmatpush1.msra.mxu0 0.0
    %853 = vmatprep.subr.mxu0 0.0
    %854 = vmatpush1.msra.mxu0 0.0
    %855 = vmatprep.subr.mxu0 0.0
    %856 = vmatpush1.msra.mxu0 0.0
    %857 = vmatprep.subr.mxu0 0.0
    %858 = vmatpush1.msra.mxu0 0.0
    %859 = vmatprep.subr.mxu0 0.0
    %860 = vmatpush1.msra.mxu0 0.0
    %861 = vmatprep.mubr.f32.mxu0 0.0
    %862 = vmatmul.mubr.f32.gmra.mrb[0].mxu0 %v745
    %v863 = vpop.f32.mrb[0].mxu0
    %v864 = vadd.f32 0.0, %v863
    %v865 = vpop.f32.mrb[0].mxu0
    %v866 = vadd.f32 0.0, %v865
    %867 = vdwg.mxu0
    %868 = vmatprep.subr.mxu0 0.0
    %869 = vmatpush1.msra.mxu0 %v751
    %870 = vmatprep.subr.mxu0 0.0
    %871 = vmatpush1.msra.mxu0 %v754
    %872 = vmatprep.subr.mxu0 0.0
    %873 = vmatpush1.msra.mxu0 %v757
    %874 = vmatprep.subr.mxu0 0.0
    %875 = vmatpush1.msra.mxu0 %v760
    %876 = vmatprep.subr.mxu0 0.0
    %877 = vmatpush1.msra.mxu0 %v763
    %878 = vmatprep.subr.mxu0 0.0
    %879 = vmatpush1.msra.mxu0 %v766
    %880 = vmatprep.subr.mxu0 0.0
    %881 = vmatpush1.msra.mxu0 %v769
    %882 = vmatprep.subr.mxu0 0.0
    %883 = vmatpush1.msra.mxu0 %v772
    %884 = vmatprep.subr.mxu0 0.0
    %885 = vmatpush1.msra.mxu0 %v775
    %886 = vmatprep.subr.mxu0 0.0
    %887 = vmatpush1.msra.mxu0 %v778
    %888 = vmatprep.subr.mxu0 0.0
    %889 = vmatpush1.msra.mxu0 %v781
    %890 = vmatprep.subr.mxu0 0.0
    %891 = vmatpush1.msra.mxu0 %v784
    %892 = vmatprep.subr.mxu0 0.0
    %893 = vmatpush1.msra.mxu0 %v787
    %894 = vmatprep.subr.mxu0 0.0
    %895 = vmatpush1.msra.mxu0 %v790
    %896 = vmatprep.subr.mxu0 0.0
    %897 = vmatpush1.msra.mxu0 %v793
    %898 = vmatprep.subr.mxu0 0.0
    %899 = vmatpush1.msra.mxu0 %v796
    %900 = vmatprep.subr.mxu0 0.0
    %901 = vmatpush1.msra.mxu0 0.0
    %902 = vmatprep.subr.mxu0 0.0
    %903 = vmatpush1.msra.mxu0 0.0
    %904 = vmatprep.subr.mxu0 0.0
    %905 = vmatpush1.msra.mxu0 0.0
    %906 = vmatprep.subr.mxu0 0.0
    %907 = vmatpush1.msra.mxu0 0.0
    %908 = vmatprep.subr.mxu0 0.0
    %909 = vmatpush1.msra.mxu0 0.0
    %910 = vmatprep.subr.mxu0 0.0
    %911 = vmatpush1.msra.mxu0 0.0
    %912 = vmatprep.subr.mxu0 0.0
    %913 = vmatpush1.msra.mxu0 0.0
    %914 = vmatprep.subr.mxu0 0.0
    %915 = vmatpush1.msra.mxu0 0.0
    %916 = vmatprep.subr.mxu0 0.0
    %917 = vmatpush1.msra.mxu0 0.0
    %918 = vmatprep.subr.mxu0 0.0
    %919 = vmatpush1.msra.mxu0 0.0
    %920 = vmatprep.subr.mxu0 0.0
    %921 = vmatpush1.msra.mxu0 0.0
    %922 = vmatprep.subr.mxu0 0.0
    %923 = vmatpush1.msra.mxu0 0.0
    %924 = vmatprep.subr.mxu0 0.0
    %925 = vmatpush1.msra.mxu0 0.0
    %926 = vmatprep.subr.mxu0 0.0
    %927 = vmatpush1.msra.mxu0 0.0
    %928 = vmatprep.subr.mxu0 0.0
    %929 = vmatpush1.msra.mxu0 0.0
    %930 = vmatprep.subr.mxu0 0.0
    %931 = vmatpush1.msra.mxu0 0.0
    %932 = vmatprep.mubr.f32.mxu0 0.0
    %933 = vmatmul.mubr.f32.gmra.mrb[0].mxu0 %v745
    %v934 = vpop.f32.mrb[0].mxu0
    %v935 = vadd.f32 0.0, %v934
    %v936 = vpop.f32.mrb[0].mxu0
    %937 = vdwg.mxu0
    %v940 = vcombine.low %v864, %v866
    %v942 = vunpack.c.l.s4 1983009808
    %v943 = vunpack.c.0.s8 %v942
    %v944 = vlaneseq
    %v945 = vshrl.u32 %v944, 7
    %v946 = vsub.s32 %v943, %v945
    %v947 = vrot.slane %v940, %v946
    %v949 = vadd.f32 %v748, %v947
    %v950 = vxor.u32 %v949, 2147483648
    %v951 = vmul.f32 %v950, 1.442695
    %v952 = vpow.pop %v951
    %v953 = vadd.f32 %v952, 1.0
    %v954 = vrcp.pop %v953
    %v955 = vmul.f32 1.0, %v954
    %v956 = vadd.f32 %v935, %v522
    %v957 = vmul.f32 %v955, %v956
    %v959 = vrot.slane %v748, 4
    %v961 = vadd.f32 %v959, %v957
    %v962 = vtanh.pop %v961
    %v964 = vrot.slane %v955, 2
    %v966 = vsub.f32 1.0, %v964
    %v967 = vmul.f32 %v966, %v962
    %v968 = vmul.f32 %v964, %v745
    %v969 = vadd.f32 %v967, %v968
    %s970 = scalar_lea.vmem [#allocation3], 2
    %971 = vst [vmem:[%s970] sm:$0x3] %v969
    %s972 = scalar_lea.vmem [#allocation2], 12
    %v973 = vld [vmem:[%s972] sm:$0x3f]
    %v974 = vld [vmem:[#allocation8] sm:$0xff]
    %v975 = vld [vmem:[#allocation8 + $0x8] sm:$0xff]
    %v976 = vld [vmem:[#allocation8 + $0x10] sm:$0xff]
    %v977 = vld [vmem:[#allocation8 + $0x18] sm:$0xff]
    %v978 = vld [vmem:[#allocation8 + $0x20] sm:$0xff]
    %v979 = vld [vmem:[#allocation8 + $0x28] sm:$0xff]
    %v980 = vld [vmem:[#allocation8 + $0x30] sm:$0xff]
    %v981 = vld [vmem:[#allocation8 + $0x38] sm:$0xff]
    %v982 = vld [vmem:[#allocation8 + $0x40] sm:$0xff]
    %v983 = vld [vmem:[#allocation8 + $0x48] sm:$0xff]
    %v984 = vld [vmem:[#allocation8 + $0x50] sm:$0xff]
    %v985 = vld [vmem:[#allocation8 + $0x58] sm:$0xff]
    %v986 = vld [vmem:[#allocation8 + $0x60] sm:$0xff]
    %v987 = vld [vmem:[#allocation8 + $0x68] sm:$0xff]
    %v988 = vld [vmem:[#allocation8 + $0x70] sm:$0xff]
    %v989 = vld [vmem:[#allocation8 + $0x78] sm:$0xff]
    %v990 = vld [vmem:[#allocation8 + $0x80] sm:$0xff]
    %v991 = vld [vmem:[#allocation8 + $0x88] sm:$0xff]
    %v992 = vld [vmem:[#allocation8 + $0x90] sm:$0xff]
    %v993 = vld [vmem:[#allocation8 + $0x98] sm:$0xff]
    %v994 = vld [vmem:[#allocation8 + $0xa0] sm:$0xff]
    %v995 = vld [vmem:[#allocation8 + $0xa8] sm:$0xff]
    %v996 = vld [vmem:[#allocation8 + $0xb0] sm:$0xff]
    %v997 = vld [vmem:[#allocation8 + $0xb8] sm:$0xff]
    %v998 = vld [vmem:[#allocation8 + $0xc0] sm:$0xff]
    %v999 = vld [vmem:[#allocation8 + $0xc8] sm:$0xff]
    %v1000 = vld [vmem:[#allocation8 + $0xd0] sm:$0xff]
    %v1001 = vld [vmem:[#allocation8 + $0xd8] sm:$0xff]
    %v1002 = vld [vmem:[#allocation8 + $0xe0] sm:$0xff]
    %v1003 = vld [vmem:[#allocation8 + $0xe8] sm:$0xff]
    %v1004 = vld [vmem:[#allocation8 + $0xf0] sm:$0xff]
    %v1005 = vld [vmem:[#allocation8 + $0xf8] sm:$0xff]
    %v1006 = vld [vmem:[#allocation8 + $0x100] sm:$0xff]
    %v1007 = vld [vmem:[#allocation8 + $0x108] sm:$0xff]
    %v1008 = vld [vmem:[#allocation8 + $0x110] sm:$0xff]
    %v1009 = vld [vmem:[#allocation8 + $0x118] sm:$0xff]
    %v1010 = vld [vmem:[#allocation8 + $0x120] sm:$0xff]
    %v1011 = vld [vmem:[#allocation8 + $0x128] sm:$0xff]
    %v1012 = vld [vmem:[#allocation8 + $0x130] sm:$0xff]
    %v1013 = vld [vmem:[#allocation8 + $0x138] sm:$0xff]
    %v1014 = vld [vmem:[#allocation8 + $0x140] sm:$0xff]
    %v1015 = vld [vmem:[#allocation8 + $0x148] sm:$0xff]
    %v1016 = vld [vmem:[#allocation8 + $0x150] sm:$0xff]
    %v1017 = vld [vmem:[#allocation8 + $0x158] sm:$0xff]
    %v1018 = vld [vmem:[#allocation8 + $0x160] sm:$0xff]
    %v1019 = vld [vmem:[#allocation8 + $0x168] sm:$0xff]
    %v1020 = vld [vmem:[#allocation8 + $0x170] sm:$0xff]
    %v1021 = vld [vmem:[#allocation8 + $0x178] sm:$0xff]
    %1022 = vmatprep.subr.mxu0 %v975
    %1023 = vmatpush1.msra.mxu0 %v974
    %1024 = vmatprep.subr.mxu0 %v978
    %1025 = vmatpush1.msra.mxu0 %v977
    %1026 = vmatprep.subr.mxu0 %v981
    %1027 = vmatpush1.msra.mxu0 %v980
    %1028 = vmatprep.subr.mxu0 %v984
    %1029 = vmatpush1.msra.mxu0 %v983
    %1030 = vmatprep.subr.mxu0 %v987
    %1031 = vmatpush1.msra.mxu0 %v986
    %1032 = vmatprep.subr.mxu0 %v990
    %1033 = vmatpush1.msra.mxu0 %v989
    %1034 = vmatprep.subr.mxu0 %v993
    %1035 = vmatpush1.msra.mxu0 %v992
    %1036 = vmatprep.subr.mxu0 %v996
    %1037 = vmatpush1.msra.mxu0 %v995
    %1038 = vmatprep.subr.mxu0 %v999
    %1039 = vmatpush1.msra.mxu0 %v998
    %1040 = vmatprep.subr.mxu0 %v1002
    %1041 = vmatpush1.msra.mxu0 %v1001
    %1042 = vmatprep.subr.mxu0 %v1005
    %1043 = vmatpush1.msra.mxu0 %v1004
    %1044 = vmatprep.subr.mxu0 %v1008
    %1045 = vmatpush1.msra.mxu0 %v1007
    %1046 = vmatprep.subr.mxu0 %v1011
    %1047 = vmatpush1.msra.mxu0 %v1010
    %1048 = vmatprep.subr.mxu0 %v1014
    %1049 = vmatpush1.msra.mxu0 %v1013
    %1050 = vmatprep.subr.mxu0 %v1017
    %1051 = vmatpush1.msra.mxu0 %v1016
    %1052 = vmatprep.subr.mxu0 %v1020
    %1053 = vmatpush1.msra.mxu0 %v1019
    %1054 = vmatprep.subr.mxu0 0.0
    %1055 = vmatpush1.msra.mxu0 0.0
    %1056 = vmatprep.subr.mxu0 0.0
    %1057 = vmatpush1.msra.mxu0 0.0
    %1058 = vmatprep.subr.mxu0 0.0
    %1059 = vmatpush1.msra.mxu0 0.0
    %1060 = vmatprep.subr.mxu0 0.0
    %1061 = vmatpush1.msra.mxu0 0.0
    %1062 = vmatprep.subr.mxu0 0.0
    %1063 = vmatpush1.msra.mxu0 0.0
    %1064 = vmatprep.subr.mxu0 0.0
    %1065 = vmatpush1.msra.mxu0 0.0
    %1066 = vmatprep.subr.mxu0 0.0
    %1067 = vmatpush1.msra.mxu0 0.0
    %1068 = vmatprep.subr.mxu0 0.0
    %1069 = vmatpush1.msra.mxu0 0.0
    %1070 = vmatprep.subr.mxu0 0.0
    %1071 = vmatpush1.msra.mxu0 0.0
    %1072 = vmatprep.subr.mxu0 0.0
    %1073 = vmatpush1.msra.mxu0 0.0
    %1074 = vmatprep.subr.mxu0 0.0
    %1075 = vmatpush1.msra.mxu0 0.0
    %1076 = vmatprep.subr.mxu0 0.0
    %1077 = vmatpush1.msra.mxu0 0.0
    %1078 = vmatprep.subr.mxu0 0.0
    %1079 = vmatpush1.msra.mxu0 0.0
    %1080 = vmatprep.subr.mxu0 0.0
    %1081 = vmatpush1.msra.mxu0 0.0
    %1082 = vmatprep.subr.mxu0 0.0
    %1083 = vmatpush1.msra.mxu0 0.0
    %1084 = vmatprep.subr.mxu0 0.0
    %1085 = vmatpush1.msra.mxu0 0.0
    %1086 = vmatprep.mubr.f32.mxu0 0.0
    %1087 = vmatmul.mubr.f32.gmra.mrb[0].mxu0 %v969
    %v1088 = vpop.f32.mrb[0].mxu0
    %v1089 = vadd.f32 0.0, %v1088
    %v1090 = vpop.f32.mrb[0].mxu0
    %v1091 = vadd.f32 0.0, %v1090
    %1092 = vdwg.mxu0
    %1093 = vmatprep.subr.mxu0 0.0
    %1094 = vmatpush1.msra.mxu0 %v976
    %1095 = vmatprep.subr.mxu0 0.0
    %1096 = vmatpush1.msra.mxu0 %v979
    %1097 = vmatprep.subr.mxu0 0.0
    %1098 = vmatpush1.msra.mxu0 %v982
    %1099 = vmatprep.subr.mxu0 0.0
    %1100 = vmatpush1.msra.mxu0 %v985
    %1101 = vmatprep.subr.mxu0 0.0
    %1102 = vmatpush1.msra.mxu0 %v988
    %1103 = vmatprep.subr.mxu0 0.0
    %1104 = vmatpush1.msra.mxu0 %v991
    %1105 = vmatprep.subr.mxu0 0.0
    %1106 = vmatpush1.msra.mxu0 %v994
    %1107 = vmatprep.subr.mxu0 0.0
    %1108 = vmatpush1.msra.mxu0 %v997
    %1109 = vmatprep.subr.mxu0 0.0
    %1110 = vmatpush1.msra.mxu0 %v1000
    %1111 = vmatprep.subr.mxu0 0.0
    %1112 = vmatpush1.msra.mxu0 %v1003
    %1113 = vmatprep.subr.mxu0 0.0
    %1114 = vmatpush1.msra.mxu0 %v1006
    %1115 = vmatprep.subr.mxu0 0.0
    %1116 = vmatpush1.msra.mxu0 %v1009
    %1117 = vmatprep.subr.mxu0 0.0
    %1118 = vmatpush1.msra.mxu0 %v1012
    %1119 = vmatprep.subr.mxu0 0.0
    %1120 = vmatpush1.msra.mxu0 %v1015
    %1121 = vmatprep.subr.mxu0 0.0
    %1122 = vmatpush1.msra.mxu0 %v1018
    %1123 = vmatprep.subr.mxu0 0.0
    %1124 = vmatpush1.msra.mxu0 %v1021
    %1125 = vmatprep.subr.mxu0 0.0
    %1126 = vmatpush1.msra.mxu0 0.0
    %1127 = vmatprep.subr.mxu0 0.0
    %1128 = vmatpush1.msra.mxu0 0.0
    %1129 = vmatprep.subr.mxu0 0.0
    %1130 = vmatpush1.msra.mxu0 0.0
    %1131 = vmatprep.subr.mxu0 0.0
    %1132 = vmatpush1.msra.mxu0 0.0
    %1133 = vmatprep.subr.mxu0 0.0
    %1134 = vmatpush1.msra.mxu0 0.0
    %1135 = vmatprep.subr.mxu0 0.0
    %1136 = vmatpush1.msra.mxu0 0.0
    %1137 = vmatprep.subr.mxu0 0.0
    %1138 = vmatpush1.msra.mxu0 0.0
    %1139 = vmatprep.subr.mxu0 0.0
    %1140 = vmatpush1.msra.mxu0 0.0
    %1141 = vmatprep.subr.mxu0 0.0
    %1142 = vmatpush1.msra.mxu0 0.0
    %1143 = vmatprep.subr.mxu0 0.0
    %1144 = vmatpush1.msra.mxu0 0.0
    %1145 = vmatprep.subr.mxu0 0.0
    %1146 = vmatpush1.msra.mxu0 0.0
    %1147 = vmatprep.subr.mxu0 0.0
    %1148 = vmatpush1.msra.mxu0 0.0
    %1149 = vmatprep.subr.mxu0 0.0
    %1150 = vmatpush1.msra.mxu0 0.0
    %1151 = vmatprep.subr.mxu0 0.0
    %1152 = vmatpush1.msra.mxu0 0.0
    %1153 = vmatprep.subr.mxu0 0.0
    %1154 = vmatpush1.msra.mxu0 0.0
    %1155 = vmatprep.subr.mxu0 0.0
    %1156 = vmatpush1.msra.mxu0 0.0
    %1157 = vmatprep.mubr.f32.mxu0 0.0
    %1158 = vmatmul.mubr.f32.gmra.mrb[0].mxu0 %v969
    %v1159 = vpop.f32.mrb[0].mxu0
    %v1160 = vadd.f32 0.0, %v1159
    %v1161 = vpop.f32.mrb[0].mxu0
    %1162 = vdwg.mxu0
    %v1165 = vcombine.low %v1089, %v1091
    %v1167 = vunpack.c.l.s4 1983009808
    %v1168 = vunpack.c.0.s8 %v1167
    %v1169 = vlaneseq
    %v1170 = vshrl.u32 %v1169, 7
    %v1171 = vsub.s32 %v1168, %v1170
    %v1172 = vrot.slane %v1165, %v1171
    %v1174 = vadd.f32 %v973, %v1172
    %v1175 = vxor.u32 %v1174, 2147483648
    %v1176 = vmul.f32 %v1175, 1.442695
    %v1177 = vpow.pop %v1176
    %v1178 = vadd.f32 %v1177, 1.0
    %v1179 = vrcp.pop %v1178
    %v1180 = vmul.f32 1.0, %v1179
    %v1181 = vadd.f32 %v1160, %v522
    %v1182 = vmul.f32 %v1180, %v1181
    %v1184 = vrot.slane %v973, 4
    %v1186 = vadd.f32 %v1184, %v1182
    %v1187 = vtanh.pop %v1186
    %v1189 = vrot.slane %v1180, 2
    %v1191 = vsub.f32 1.0, %v1189
    %v1192 = vmul.f32 %v1191, %v1187
    %v1193 = vmul.f32 %v1189, %v969
    %v1194 = vadd.f32 %v1192, %v1193
    %s1195 = scalar_lea.vmem [#allocation3], 4
    %1196 = vst [vmem:[%s1195] sm:$0x3] %v1194
    %s1197 = scalar_lea.vmem [#allocation2], 18
    %v1198 = vld [vmem:[%s1197] sm:$0x3f]
    %v1199 = vld [vmem:[#allocation8] sm:$0xff]
    %v1200 = vld [vmem:[#allocation8 + $0x8] sm:$0xff]
    %v1201 = vld [vmem:[#allocation8 + $0x10] sm:$0xff]
    %v1202 = vld [vmem:[#allocation8 + $0x18] sm:$0xff]
    %v1203 = vld [vmem:[#allocation8 + $0x20] sm:$0xff]
    %v1204 = vld [vmem:[#allocation8 + $0x28] sm:$0xff]
    %v1205 = vld [vmem:[#allocation8 + $0x30] sm:$0xff]
    %v1206 = vld [vmem:[#allocation8 + $0x38] sm:$0xff]
    %v1207 = vld [vmem:[#allocation8 + $0x40] sm:$0xff]
    %v1208 = vld [vmem:[#allocation8 + $0x48] sm:$0xff]
    %v1209 = vld [vmem:[#allocation8 + $0x50] sm:$0xff]
    %v1210 = vld [vmem:[#allocation8 + $0x58] sm:$0xff]
    %v1211 = vld [vmem:[#allocation8 + $0x60] sm:$0xff]
    %v1212 = vld [vmem:[#allocation8 + $0x68] sm:$0xff]
    %v1213 = vld [vmem:[#allocation8 + $0x70] sm:$0xff]
    %v1214 = vld [vmem:[#allocation8 + $0x78] sm:$0xff]
    %v1215 = vld [vmem:[#allocation8 + $0x80] sm:$0xff]
    %v1216 = vld [vmem:[#allocation8 + $0x88] sm:$0xff]
    %v1217 = vld [vmem:[#allocation8 + $0x90] sm:$0xff]
    %v1218 = vld [vmem:[#allocation8 + $0x98] sm:$0xff]
    %v1219 = vld [vmem:[#allocation8 + $0xa0] sm:$0xff]
    %v1220 = vld [vmem:[#allocation8 + $0xa8] sm:$0xff]
    %v1221 = vld [vmem:[#allocation8 + $0xb0] sm:$0xff]
    %v1222 = vld [vmem:[#allocation8 + $0xb8] sm:$0xff]
    %v1223 = vld [vmem:[#allocation8 + $0xc0] sm:$0xff]
    %v1224 = vld [vmem:[#allocation8 + $0xc8] sm:$0xff]
    %v1225 = vld [vmem:[#allocation8 + $0xd0] sm:$0xff]
    %v1226 = vld [vmem:[#allocation8 + $0xd8] sm:$0xff]
    %v1227 = vld [vmem:[#allocation8 + $0xe0] sm:$0xff]
    %v1228 = vld [vmem:[#allocation8 + $0xe8] sm:$0xff]
    %v1229 = vld [vmem:[#allocation8 + $0xf0] sm:$0xff]
    %v1230 = vld [vmem:[#allocation8 + $0xf8] sm:$0xff]
    %v1231 = vld [vmem:[#allocation8 + $0x100] sm:$0xff]
    %v1232 = vld [vmem:[#allocation8 + $0x108] sm:$0xff]
    %v1233 = vld [vmem:[#allocation8 + $0x110] sm:$0xff]
    %v1234 = vld [vmem:[#allocation8 + $0x118] sm:$0xff]
    %v1235 = vld [vmem:[#allocation8 + $0x120] sm:$0xff]
    %v1236 = vld [vmem:[#allocation8 + $0x128] sm:$0xff]
    %v1237 = vld [vmem:[#allocation8 + $0x130] sm:$0xff]
    %v1238 = vld [vmem:[#allocation8 + $0x138] sm:$0xff]
    %v1239 = vld [vmem:[#allocation8 + $0x140] sm:$0xff]
    %v1240 = vld [vmem:[#allocation8 + $0x148] sm:$0xff]
    %v1241 = vld [vmem:[#allocation8 + $0x150] sm:$0xff]
    %v1242 = vld [vmem:[#allocation8 + $0x158] sm:$0xff]
    %v1243 = vld [vmem:[#allocation8 + $0x160] sm:$0xff]
    %v1244 = vld [vmem:[#allocation8 + $0x168] sm:$0xff]
    %v1245 = vld [vmem:[#allocation8 + $0x170] sm:$0xff]
    %v1246 = vld [vmem:[#allocation8 + $0x178] sm:$0xff]
    %1247 = vmatprep.subr.mxu0 %v1200
    %1248 = vmatpush1.msra.mxu0 %v1199
    %1249 = vmatprep.subr.mxu0 %v1203
    %1250 = vmatpush1.msra.mxu0 %v1202
    %1251 = vmatprep.subr.mxu0 %v1206
    %1252 = vmatpush1.msra.mxu0 %v1205
    %1253 = vmatprep.subr.mxu0 %v1209
    %1254 = vmatpush1.msra.mxu0 %v1208
    %1255 = vmatprep.subr.mxu0 %v1212
    %1256 = vmatpush1.msra.mxu0 %v1211
    %1257 = vmatprep.subr.mxu0 %v1215
    %1258 = vmatpush1.msra.mxu0 %v1214
    %1259 = vmatprep.subr.mxu0 %v1218
    %1260 = vmatpush1.msra.mxu0 %v1217
    %1261 = vmatprep.subr.mxu0 %v1221
    %1262 = vmatpush1.msra.mxu0 %v1220
    %1263 = vmatprep.subr.mxu0 %v1224
    %1264 = vmatpush1.msra.mxu0 %v1223
    %1265 = vmatprep.subr.mxu0 %v1227
    %1266 = vmatpush1.msra.mxu0 %v1226
    %1267 = vmatprep.subr.mxu0 %v1230
    %1268 = vmatpush1.msra.mxu0 %v1229
    %1269 = vmatprep.subr.mxu0 %v1233
    %1270 = vmatpush1.msra.mxu0 %v1232
    %1271 = vmatprep.subr.mxu0 %v1236
    %1272 = vmatpush1.msra.mxu0 %v1235
    %1273 = vmatprep.subr.mxu0 %v1239
    %1274 = vmatpush1.msra.mxu0 %v1238
    %1275 = vmatprep.subr.mxu0 %v1242
    %1276 = vmatpush1.msra.mxu0 %v1241
    %1277 = vmatprep.subr.mxu0 %v1245
    %1278 = vmatpush1.msra.mxu0 %v1244
    %1279 = vmatprep.subr.mxu0 0.0
    %1280 = vmatpush1.msra.mxu0 0.0
    %1281 = vmatprep.subr.mxu0 0.0
    %1282 = vmatpush1.msra.mxu0 0.0
    %1283 = vmatprep.subr.mxu0 0.0
    %1284 = vmatpush1.msra.mxu0 0.0
    %1285 = vmatprep.subr.mxu0 0.0
    %1286 = vmatpush1.msra.mxu0 0.0
    %1287 = vmatprep.subr.mxu0 0.0
    %1288 = vmatpush1.msra.mxu0 0.0
    %1289 = vmatprep.subr.mxu0 0.0
    %1290 = vmatpush1.msra.mxu0 0.0
    %1291 = vmatprep.subr.mxu0 0.0
    %1292 = vmatpush1.msra.mxu0 0.0
    %1293 = vmatprep.subr.mxu0 0.0
    %1294 = vmatpush1.msra.mxu0 0.0
    %1295 = vmatprep.subr.mxu0 0.0
    %1296 = vmatpush1.msra.mxu0 0.0
    %1297 = vmatprep.subr.mxu0 0.0
    %1298 = vmatpush1.msra.mxu0 0.0
    %1299 = vmatprep.subr.mxu0 0.0
    %1300 = vmatpush1.msra.mxu0 0.0
    %1301 = vmatprep.subr.mxu0 0.0
    %1302 = vmatpush1.msra.mxu0 0.0
    %1303 = vmatprep.subr.mxu0 0.0
    %1304 = vmatpush1.msra.mxu0 0.0
    %1305 = vmatprep.subr.mxu0 0.0
    %1306 = vmatpush1.msra.mxu0 0.0
    %1307 = vmatprep.subr.mxu0 0.0
    %1308 = vmatpush1.msra.mxu0 0.0
    %1309 = vmatprep.subr.mxu0 0.0
    %1310 = vmatpush1.msra.mxu0 0.0
    %1311 = vmatprep.mubr.f32.mxu0 0.0
    %1312 = vmatmul.mubr.f32.gmra.mrb[0].mxu0 %v1194
    %v1313 = vpop.f32.mrb[0].mxu0
    %v1314 = vadd.f32 0.0, %v1313
    %v1315 = vpop.f32.mrb[0].mxu0
    %v1316 = vadd.f32 0.0, %v1315
    %1317 = vdwg.mxu0
    %1318 = vmatprep.subr.mxu0 0.0
    %1319 = vmatpush1.msra.mxu0 %v1201
    %1320 = vmatprep.subr.mxu0 0.0
    %1321 = vmatpush1.msra.mxu0 %v1204
    %1322 = vmatprep.subr.mxu0 0.0
    %1323 = vmatpush1.msra.mxu0 %v1207
    %1324 = vmatprep.subr.mxu0 0.0
    %1325 = vmatpush1.msra.mxu0 %v1210
    %1326 = vmatprep.subr.mxu0 0.0
    %1327 = vmatpush1.msra.mxu0 %v1213
    %1328 = vmatprep.subr.mxu0 0.0
    %1329 = vmatpush1.msra.mxu0 %v1216
    %1330 = vmatprep.subr.mxu0 0.0
    %1331 = vmatpush1.msra.mxu0 %v1219
    %1332 = vmatprep.subr.mxu0 0.0
    %1333 = vmatpush1.msra.mxu0 %v1222
    %1334 = vmatprep.subr.mxu0 0.0
    %1335 = vmatpush1.msra.mxu0 %v1225
    %1336 = vmatprep.subr.mxu0 0.0
    %1337 = vmatpush1.msra.mxu0 %v1228
    %1338 = vmatprep.subr.mxu0 0.0
    %1339 = vmatpush1.msra.mxu0 %v1231
    %1340 = vmatprep.subr.mxu0 0.0
    %1341 = vmatpush1.msra.mxu0 %v1234
    %1342 = vmatprep.subr.mxu0 0.0
    %1343 = vmatpush1.msra.mxu0 %v1237
    %1344 = vmatprep.subr.mxu0 0.0
    %1345 = vmatpush1.msra.mxu0 %v1240
    %1346 = vmatprep.subr.mxu0 0.0
    %1347 = vmatpush1.msra.mxu0 %v1243
    %1348 = vmatprep.subr.mxu0 0.0
    %1349 = vmatpush1.msra.mxu0 %v1246
    %1350 = vmatprep.subr.mxu0 0.0
    %1351 = vmatpush1.msra.mxu0 0.0
    %1352 = vmatprep.subr.mxu0 0.0
    %1353 = vmatpush1.msra.mxu0 0.0
    %1354 = vmatprep.subr.mxu0 0.0
    %1355 = vmatpush1.msra.mxu0 0.0
    %1356 = vmatprep.subr.mxu0 0.0
    %1357 = vmatpush1.msra.mxu0 0.0
    %1358 = vmatprep.subr.mxu0 0.0
    %1359 = vmatpush1.msra.mxu0 0.0
    %1360 = vmatprep.subr.mxu0 0.0
    %1361 = vmatpush1.msra.mxu0 0.0
    %1362 = vmatprep.subr.mxu0 0.0
    %1363 = vmatpush1.msra.mxu0 0.0
    %1364 = vmatprep.subr.mxu0 0.0
    %1365 = vmatpush1.msra.mxu0 0.0
    %1366 = vmatprep.subr.mxu0 0.0
    %1367 = vmatpush1.msra.mxu0 0.0
    %1368 = vmatprep.subr.mxu0 0.0
    %1369 = vmatpush1.msra.mxu0 0.0
    %1370 = vmatprep.subr.mxu0 0.0
    %1371 = vmatpush1.msra.mxu0 0.0
    %1372 = vmatprep.subr.mxu0 0.0
    %1373 = vmatpush1.msra.mxu0 0.0
    %1374 = vmatprep.subr.mxu0 0.0
    %1375 = vmatpush1.msra.mxu0 0.0
    %1376 = vmatprep.subr.mxu0 0.0
    %1377 = vmatpush1.msra.mxu0 0.0
    %1378 = vmatprep.subr.mxu0 0.0
    %1379 = vmatpush1.msra.mxu0 0.0
    %1380 = vmatprep.subr.mxu0 0.0
    %1381 = vmatpush1.msra.mxu0 0.0
    %1382 = vmatprep.mubr.f32.mxu0 0.0
    %1383 = vmatmul.mubr.f32.gmra.mrb[0].mxu0 %v1194
    %v1384 = vpop.f32.mrb[0].mxu0
    %v1385 = vadd.f32 0.0, %v1384
    %v1386 = vpop.f32.mrb[0].mxu0
    %1387 = vdwg.mxu0
    %v1390 = vcombine.low %v1314, %v1316
    %v1392 = vunpack.c.l.s4 1983009808
    %v1393 = vunpack.c.0.s8 %v1392
    %v1394 = vlaneseq
    %v1395 = vshrl.u32 %v1394, 7
    %v1396 = vsub.s32 %v1393, %v1395
    %v1397 = vrot.slane %v1390, %v1396
    %v1399 = vadd.f32 %v1198, %v1397
    %v1400 = vxor.u32 %v1399, 2147483648
    %v1401 = vmul.f32 %v1400, 1.442695
    %v1402 = vpow.pop %v1401
    %v1403 = vadd.f32 %v1402, 1.0
    %v1404 = vrcp.pop %v1403
    %v1405 = vmul.f32 1.0, %v1404
    %v1406 = vadd.f32 %v1385, %v522
    %v1407 = vmul.f32 %v1405, %v1406
    %v1409 = vrot.slane %v1198, 4
    %v1411 = vadd.f32 %v1409, %v1407
    %v1412 = vtanh.pop %v1411
    %v1414 = vrot.slane %v1405, 2
    %v1416 = vsub.f32 1.0, %v1414
    %v1417 = vmul.f32 %v1416, %v1412
    %v1418 = vmul.f32 %v1414, %v1194
    %v1419 = vadd.f32 %v1417, %v1418
    %s1420 = scalar_lea.vmem [#allocation3], 6
    %1421 = vst [vmem:[%s1420] sm:$0x3] %v1419
    %s1422 = scalar_lea.vmem [#allocation2], 24
    %v1423 = vld [vmem:[%s1422] sm:$0x3f]
    %v1424 = vld [vmem:[#allocation8] sm:$0xff]
    %v1425 = vld [vmem:[#allocation8 + $0x8] sm:$0xff]
    %v1426 = vld [vmem:[#allocation8 + $0x10] sm:$0xff]
    %v1427 = vld [vmem:[#allocation8 + $0x18] sm:$0xff]
    %v1428 = vld [vmem:[#allocation8 + $0x20] sm:$0xff]
    %v1429 = vld [vmem:[#allocation8 + $0x28] sm:$0xff]
    %v1430 = vld [vmem:[#allocation8 + $0x30] sm:$0xff]
    %v1431 = vld [vmem:[#allocation8 + $0x38] sm:$0xff]
    %v1432 = vld [vmem:[#allocation8 + $0x40] sm:$0xff]
    %v1433 = vld [vmem:[#allocation8 + $0x48] sm:$0xff]
    %v1434 = vld [vmem:[#allocation8 + $0x50] sm:$0xff]
    %v1435 = vld [vmem:[#allocation8 + $0x58] sm:$0xff]
    %v1436 = vld [vmem:[#allocation8 + $0x60] sm:$0xff]
    %v1437 = vld [vmem:[#allocation8 + $0x68] sm:$0xff]
    %v1438 = vld [vmem:[#allocation8 + $0x70] sm:$0xff]
    %v1439 = vld [vmem:[#allocation8 + $0x78] sm:$0xff]
    %v1440 = vld [vmem:[#allocation8 + $0x80] sm:$0xff]
    %v1441 = vld [vmem:[#allocation8 + $0x88] sm:$0xff]
    %v1442 = vld [vmem:[#allocation8 + $0x90] sm:$0xff]
    %v1443 = vld [vmem:[#allocation8 + $0x98] sm:$0xff]
    %v1444 = vld [vmem:[#allocation8 + $0xa0] sm:$0xff]
    %v1445 = vld [vmem:[#allocation8 + $0xa8] sm:$0xff]
    %v1446 = vld [vmem:[#allocation8 + $0xb0] sm:$0xff]
    %v1447 = vld [vmem:[#allocation8 + $0xb8] sm:$0xff]
    %v1448 = vld [vmem:[#allocation8 + $0xc0] sm:$0xff]
    %v1449 = vld [vmem:[#allocation8 + $0xc8] sm:$0xff]
    %v1450 = vld [vmem:[#allocation8 + $0xd0] sm:$0xff]
    %v1451 = vld [vmem:[#allocation8 + $0xd8] sm:$0xff]
    %v1452 = vld [vmem:[#allocation8 + $0xe0] sm:$0xff]
    %v1453 = vld [vmem:[#allocation8 + $0xe8] sm:$0xff]
    %v1454 = vld [vmem:[#allocation8 + $0xf0] sm:$0xff]
    %v1455 = vld [vmem:[#allocation8 + $0xf8] sm:$0xff]
    %v1456 = vld [vmem:[#allocation8 + $0x100] sm:$0xff]
    %v1457 = vld [vmem:[#allocation8 + $0x108] sm:$0xff]
    %v1458 = vld [vmem:[#allocation8 + $0x110] sm:$0xff]
    %v1459 = vld [vmem:[#allocation8 + $0x118] sm:$0xff]
    %v1460 = vld [vmem:[#allocation8 + $0x120] sm:$0xff]
    %v1461 = vld [vmem:[#allocation8 + $0x128] sm:$0xff]
    %v1462 = vld [vmem:[#allocation8 + $0x130] sm:$0xff]
    %v1463 = vld [vmem:[#allocation8 + $0x138] sm:$0xff]
    %v1464 = vld [vmem:[#allocation8 + $0x140] sm:$0xff]
    %v1465 = vld [vmem:[#allocation8 + $0x148] sm:$0xff]
    %v1466 = vld [vmem:[#allocation8 + $0x150] sm:$0xff]
    %v1467 = vld [vmem:[#allocation8 + $0x158] sm:$0xff]
    %v1468 = vld [vmem:[#allocation8 + $0x160] sm:$0xff]
    %v1469 = vld [vmem:[#allocation8 + $0x168] sm:$0xff]
    %v1470 = vld [vmem:[#allocation8 + $0x170] sm:$0xff]
    %v1471 = vld [vmem:[#allocation8 + $0x178] sm:$0xff]
    %1472 = vmatprep.subr.mxu0 %v1425
    %1473 = vmatpush1.msra.mxu0 %v1424
    %1474 = vmatprep.subr.mxu0 %v1428
    %1475 = vmatpush1.msra.mxu0 %v1427
    %1476 = vmatprep.subr.mxu0 %v1431
    %1477 = vmatpush1.msra.mxu0 %v1430
    %1478 = vmatprep.subr.mxu0 %v1434
    %1479 = vmatpush1.msra.mxu0 %v1433
    %1480 = vmatprep.subr.mxu0 %v1437
    %1481 = vmatpush1.msra.mxu0 %v1436
    %1482 = vmatprep.subr.mxu0 %v1440
    %1483 = vmatpush1.msra.mxu0 %v1439
    %1484 = vmatprep.subr.mxu0 %v1443
    %1485 = vmatpush1.msra.mxu0 %v1442
    %1486 = vmatprep.subr.mxu0 %v1446
    %1487 = vmatpush1.msra.mxu0 %v1445
    %1488 = vmatprep.subr.mxu0 %v1449
    %1489 = vmatpush1.msra.mxu0 %v1448
    %1490 = vmatprep.subr.mxu0 %v1452
    %1491 = vmatpush1.msra.mxu0 %v1451
    %1492 = vmatprep.subr.mxu0 %v1455
    %1493 = vmatpush1.msra.mxu0 %v1454
    %1494 = vmatprep.subr.mxu0 %v1458
    %1495 = vmatpush1.msra.mxu0 %v1457
    %1496 = vmatprep.subr.mxu0 %v1461
    %1497 = vmatpush1.msra.mxu0 %v1460
    %1498 = vmatprep.subr.mxu0 %v1464
    %1499 = vmatpush1.msra.mxu0 %v1463
    %1500 = vmatprep.subr.mxu0 %v1467
    %1501 = vmatpush1.msra.mxu0 %v1466
    %1502 = vmatprep.subr.mxu0 %v1470
    %1503 = vmatpush1.msra.mxu0 %v1469
    %1504 = vmatprep.subr.mxu0 0.0
    %1505 = vmatpush1.msra.mxu0 0.0
    %1506 = vmatprep.subr.mxu0 0.0
    %1507 = vmatpush1.msra.mxu0 0.0
    %1508 = vmatprep.subr.mxu0 0.0
    %1509 = vmatpush1.msra.mxu0 0.0
    %1510 = vmatprep.subr.mxu0 0.0
    %1511 = vmatpush1.msra.mxu0 0.0
    %1512 = vmatprep.subr.mxu0 0.0
    %1513 = vmatpush1.msra.mxu0 0.0
    %1514 = vmatprep.subr.mxu0 0.0
    %1515 = vmatpush1.msra.mxu0 0.0
    %1516 = vmatprep.subr.mxu0 0.0
    %1517 = vmatpush1.msra.mxu0 0.0
    %1518 = vmatprep.subr.mxu0 0.0
    %1519 = vmatpush1.msra.mxu0 0.0
    %1520 = vmatprep.subr.mxu0 0.0
    %1521 = vmatpush1.msra.mxu0 0.0
    %1522 = vmatprep.subr.mxu0 0.0
    %1523 = vmatpush1.msra.mxu0 0.0
    %1524 = vmatprep.subr.mxu0 0.0
    %1525 = vmatpush1.msra.mxu0 0.0
    %1526 = vmatprep.subr.mxu0 0.0
    %1527 = vmatpush1.msra.mxu0 0.0
    %1528 = vmatprep.subr.mxu0 0.0
    %1529 = vmatpush1.msra.mxu0 0.0
    %1530 = vmatprep.subr.mxu0 0.0
    %1531 = vmatpush1.msra.mxu0 0.0
    %1532 = vmatprep.subr.mxu0 0.0
    %1533 = vmatpush1.msra.mxu0 0.0
    %1534 = vmatprep.subr.mxu0 0.0
    %1535 = vmatpush1.msra.mxu0 0.0
    %1536 = vmatprep.mubr.f32.mxu0 0.0
    %1537 = vmatmul.mubr.f32.gmra.mrb[0].mxu0 %v1419
    %v1538 = vpop.f32.mrb[0].mxu0
    %v1539 = vadd.f32 0.0, %v1538
    %v1540 = vpop.f32.mrb[0].mxu0
    %v1541 = vadd.f32 0.0, %v1540
    %1542 = vdwg.mxu0
    %1543 = vmatprep.subr.mxu0 0.0
    %1544 = vmatpush1.msra.mxu0 %v1426
    %1545 = vmatprep.subr.mxu0 0.0
    %1546 = vmatpush1.msra.mxu0 %v1429
    %1547 = vmatprep.subr.mxu0 0.0
    %1548 = vmatpush1.msra.mxu0 %v1432
    %1549 = vmatprep.subr.mxu0 0.0
    %1550 = vmatpush1.msra.mxu0 %v1435
    %1551 = vmatprep.subr.mxu0 0.0
    %1552 = vmatpush1.msra.mxu0 %v1438
    %1553 = vmatprep.subr.mxu0 0.0
    %1554 = vmatpush1.msra.mxu0 %v1441
    %1555 = vmatprep.subr.mxu0 0.0
    %1556 = vmatpush1.msra.mxu0 %v1444
    %1557 = vmatprep.subr.mxu0 0.0
    %1558 = vmatpush1.msra.mxu0 %v1447
    %1559 = vmatprep.subr.mxu0 0.0
    %1560 = vmatpush1.msra.mxu0 %v1450
    %1561 = vmatprep.subr.mxu0 0.0
    %1562 = vmatpush1.msra.mxu0 %v1453
    %1563 = vmatprep.subr.mxu0 0.0
    %1564 = vmatpush1.msra.mxu0 %v1456
    %1565 = vmatprep.subr.mxu0 0.0
    %1566 = vmatpush1.msra.mxu0 %v1459
    %1567 = vmatprep.subr.mxu0 0.0
    %1568 = vmatpush1.msra.mxu0 %v1462
    %1569 = vmatprep.subr.mxu0 0.0
    %1570 = vmatpush1.msra.mxu0 %v1465
    %1571 = vmatprep.subr.mxu0 0.0
    %1572 = vmatpush1.msra.mxu0 %v1468
    %1573 = vmatprep.subr.mxu0 0.0
    %1574 = vmatpush1.msra.mxu0 %v1471
    %1575 = vmatprep.subr.mxu0 0.0
    %1576 = vmatpush1.msra.mxu0 0.0
    %1577 = vmatprep.subr.mxu0 0.0
    %1578 = vmatpush1.msra.mxu0 0.0
    %1579 = vmatprep.subr.mxu0 0.0
    %1580 = vmatpush1.msra.mxu0 0.0
    %1581 = vmatprep.subr.mxu0 0.0
    %1582 = vmatpush1.msra.mxu0 0.0
    %1583 = vmatprep.subr.mxu0 0.0
    %1584 = vmatpush1.msra.mxu0 0.0
    %1585 = vmatprep.subr.mxu0 0.0
    %1586 = vmatpush1.msra.mxu0 0.0
    %1587 = vmatprep.subr.mxu0 0.0
    %1588 = vmatpush1.msra.mxu0 0.0
    %1589 = vmatprep.subr.mxu0 0.0
    %1590 = vmatpush1.msra.mxu0 0.0
    %1591 = vmatprep.subr.mxu0 0.0
    %1592 = vmatpush1.msra.mxu0 0.0
    %1593 = vmatprep.subr.mxu0 0.0
    %1594 = vmatpush1.msra.mxu0 0.0
    %1595 = vmatprep.subr.mxu0 0.0
    %1596 = vmatpush1.msra.mxu0 0.0
    %1597 = vmatprep.subr.mxu0 0.0
    %1598 = vmatpush1.msra.mxu0 0.0
    %1599 = vmatprep.subr.mxu0 0.0
    %1600 = vmatpush1.msra.mxu0 0.0
    %1601 = vmatprep.subr.mxu0 0.0
    %1602 = vmatpush1.msra.mxu0 0.0
    %1603 = vmatprep.subr.mxu0 0.0
    %1604 = vmatpush1.msra.mxu0 0.0
    %1605 = vmatprep.subr.mxu0 0.0
    %1606 = vmatpush1.msra.mxu0 0.0
    %1607 = vmatprep.mubr.f32.mxu0 0.0
    %1608 = vmatmul.mubr.f32.gmra.mrb[0].mxu0 %v1419
    %v1609 = vpop.f32.mrb[0].mxu0
    %v1610 = vadd.f32 0.0, %v1609
    %v1611 = vpop.f32.mrb[0].mxu0
    %1612 = vdwg.mxu0
    %v1615 = vcombine.low %v1539, %v1541
    %v1617 = vunpack.c.l.s4 1983009808
    %v1618 = vunpack.c.0.s8 %v1617
    %v1619 = vlaneseq
    %v1620 = vshrl.u32 %v1619, 7
    %v1621 = vsub.s32 %v1618, %v1620
    %v1622 = vrot.slane %v1615, %v1621
    %v1624 = vadd.f32 %v1423, %v1622
    %v1625 = vxor.u32 %v1624, 2147483648
    %v1626 = vmul.f32 %v1625, 1.442695
    %v1627 = vpow.pop %v1626
    %v1628 = vadd.f32 %v1627, 1.0
    %v1629 = vrcp.pop %v1628
    %v1630 = vmul.f32 1.0, %v1629
    %v1631 = vadd.f32 %v1610, %v522
    %v1632 = vmul.f32 %v1630, %v1631
    %v1634 = vrot.slane %v1423, 4
    %v1636 = vadd.f32 %v1634, %v1632
    %v1637 = vtanh.pop %v1636
    %v1639 = vrot.slane %v1630, 2
    %v1641 = vsub.f32 1.0, %v1639
    %v1642 = vmul.f32 %v1641, %v1637
    %v1643 = vmul.f32 %v1639, %v1419
    %v1644 = vadd.f32 %v1642, %v1643
    %s1645 = scalar_lea.vmem [#allocation3], 8
    %1646 = vst [vmem:[%s1645] sm:$0x3] %v1644
    %s1647 = scalar_lea.vmem [#allocation2], 30
    %v1648 = vld [vmem:[%s1647] sm:$0x3f]
    %v1649 = vld [vmem:[#allocation8] sm:$0xff]
    %v1650 = vld [vmem:[#allocation8 + $0x8] sm:$0xff]
    %v1651 = vld [vmem:[#allocation8 + $0x10] sm:$0xff]
    %v1652 = vld [vmem:[#allocation8 + $0x18] sm:$0xff]
    %v1653 = vld [vmem:[#allocation8 + $0x20] sm:$0xff]
    %v1654 = vld [vmem:[#allocation8 + $0x28] sm:$0xff]
    %v1655 = vld [vmem:[#allocation8 + $0x30] sm:$0xff]
    %v1656 = vld [vmem:[#allocation8 + $0x38] sm:$0xff]
    %v1657 = vld [vmem:[#allocation8 + $0x40] sm:$0xff]
    %v1658 = vld [vmem:[#allocation8 + $0x48] sm:$0xff]
    %v1659 = vld [vmem:[#allocation8 + $0x50] sm:$0xff]
    %v1660 = vld [vmem:[#allocation8 + $0x58] sm:$0xff]
    %v1661 = vld [vmem:[#allocation8 + $0x60] sm:$0xff]
    %v1662 = vld [vmem:[#allocation8 + $0x68] sm:$0xff]
    %v1663 = vld [vmem:[#allocation8 + $0x70] sm:$0xff]
    %v1664 = vld [vmem:[#allocation8 + $0x78] sm:$0xff]
    %v1665 = vld [vmem:[#allocation8 + $0x80] sm:$0xff]
    %v1666 = vld [vmem:[#allocation8 + $0x88] sm:$0xff]
    %v1667 = vld [vmem:[#allocation8 + $0x90] sm:$0xff]
    %v1668 = vld [vmem:[#allocation8 + $0x98] sm:$0xff]
    %v1669 = vld [vmem:[#allocation8 + $0xa0] sm:$0xff]
    %v1670 = vld [vmem:[#allocation8 + $0xa8] sm:$0xff]
    %v1671 = vld [vmem:[#allocation8 + $0xb0] sm:$0xff]
    %v1672 = vld [vmem:[#allocation8 + $0xb8] sm:$0xff]
    %v1673 = vld [vmem:[#allocation8 + $0xc0] sm:$0xff]
    %v1674 = vld [vmem:[#allocation8 + $0xc8] sm:$0xff]
    %v1675 = vld [vmem:[#allocation8 + $0xd0] sm:$0xff]
    %v1676 = vld [vmem:[#allocation8 + $0xd8] sm:$0xff]
    %v1677 = vld [vmem:[#allocation8 + $0xe0] sm:$0xff]
    %v1678 = vld [vmem:[#allocation8 + $0xe8] sm:$0xff]
    %v1679 = vld [vmem:[#allocation8 + $0xf0] sm:$0xff]
    %v1680 = vld [vmem:[#allocation8 + $0xf8] sm:$0xff]
    %v1681 = vld [vmem:[#allocation8 + $0x100] sm:$0xff]
    %v1682 = vld [vmem:[#allocation8 + $0x108] sm:$0xff]
    %v1683 = vld [vmem:[#allocation8 + $0x110] sm:$0xff]
    %v1684 = vld [vmem:[#allocation8 + $0x118] sm:$0xff]
    %v1685 = vld [vmem:[#allocation8 + $0x120] sm:$0xff]
    %v1686 = vld [vmem:[#allocation8 + $0x128] sm:$0xff]
    %v1687 = vld [vmem:[#allocation8 + $0x130] sm:$0xff]
    %v1688 = vld [vmem:[#allocation8 + $0x138] sm:$0xff]
    %v1689 = vld [vmem:[#allocation8 + $0x140] sm:$0xff]
    %v1690 = vld [vmem:[#allocation8 + $0x148] sm:$0xff]
    %v1691 = vld [vmem:[#allocation8 + $0x150] sm:$0xff]
    %v1692 = vld [vmem:[#allocation8 + $0x158] sm:$0xff]
    %v1693 = vld [vmem:[#allocation8 + $0x160] sm:$0xff]
    %v1694 = vld [vmem:[#allocation8 + $0x168] sm:$0xff]
    %v1695 = vld [vmem:[#allocation8 + $0x170] sm:$0xff]
    %v1696 = vld [vmem:[#allocation8 + $0x178] sm:$0xff]
    %1697 = vmatprep.subr.mxu0 %v1650
    %1698 = vmatpush1.msra.mxu0 %v1649
    %1699 = vmatprep.subr.mxu0 %v1653
    %1700 = vmatpush1.msra.mxu0 %v1652
    %1701 = vmatprep.subr.mxu0 %v1656
    %1702 = vmatpush1.msra.mxu0 %v1655
    %1703 = vmatprep.subr.mxu0 %v1659
    %1704 = vmatpush1.msra.mxu0 %v1658
    %1705 = vmatprep.subr.mxu0 %v1662
    %1706 = vmatpush1.msra.mxu0 %v1661
    %1707 = vmatprep.subr.mxu0 %v1665
    %1708 = vmatpush1.msra.mxu0 %v1664
    %1709 = vmatprep.subr.mxu0 %v1668
    %1710 = vmatpush1.msra.mxu0 %v1667
    %1711 = vmatprep.subr.mxu0 %v1671
    %1712 = vmatpush1.msra.mxu0 %v1670
    %1713 = vmatprep.subr.mxu0 %v1674
    %1714 = vmatpush1.msra.mxu0 %v1673
    %1715 = vmatprep.subr.mxu0 %v1677
    %1716 = vmatpush1.msra.mxu0 %v1676
    %1717 = vmatprep.subr.mxu0 %v1680
    %1718 = vmatpush1.msra.mxu0 %v1679
    %1719 = vmatprep.subr.mxu0 %v1683
    %1720 = vmatpush1.msra.mxu0 %v1682
    %1721 = vmatprep.subr.mxu0 %v1686
    %1722 = vmatpush1.msra.mxu0 %v1685
    %1723 = vmatprep.subr.mxu0 %v1689
    %1724 = vmatpush1.msra.mxu0 %v1688
    %1725 = vmatprep.subr.mxu0 %v1692
    %1726 = vmatpush1.msra.mxu0 %v1691
    %1727 = vmatprep.subr.mxu0 %v1695
    %1728 = vmatpush1.msra.mxu0 %v1694
    %1729 = vmatprep.subr.mxu0 0.0
    %1730 = vmatpush1.msra.mxu0 0.0
    %1731 = vmatprep.subr.mxu0 0.0
    %1732 = vmatpush1.msra.mxu0 0.0
    %1733 = vmatprep.subr.mxu0 0.0
    %1734 = vmatpush1.msra.mxu0 0.0
    %1735 = vmatprep.subr.mxu0 0.0
    %1736 = vmatpush1.msra.mxu0 0.0
    %1737 = vmatprep.subr.mxu0 0.0
    %1738 = vmatpush1.msra.mxu0 0.0
    %1739 = vmatprep.subr.mxu0 0.0
    %1740 = vmatpush1.msra.mxu0 0.0
    %1741 = vmatprep.subr.mxu0 0.0
    %1742 = vmatpush1.msra.mxu0 0.0
    %1743 = vmatprep.subr.mxu0 0.0
    %1744 = vmatpush1.msra.mxu0 0.0
    %1745 = vmatprep.subr.mxu0 0.0
    %1746 = vmatpush1.msra.mxu0 0.0
    %1747 = vmatprep.subr.mxu0 0.0
    %1748 = vmatpush1.msra.mxu0 0.0
    %1749 = vmatprep.subr.mxu0 0.0
    %1750 = vmatpush1.msra.mxu0 0.0
    %1751 = vmatprep.subr.mxu0 0.0
    %1752 = vmatpush1.msra.mxu0 0.0
    %1753 = vmatprep.subr.mxu0 0.0
    %1754 = vmatpush1.msra.mxu0 0.0
    %1755 = vmatprep.subr.mxu0 0.0
    %1756 = vmatpush1.msra.mxu0 0.0
    %1757 = vmatprep.subr.mxu0 0.0
    %1758 = vmatpush1.msra.mxu0 0.0
    %1759 = vmatprep.subr.mxu0 0.0
    %1760 = vmatpush1.msra.mxu0 0.0
    %1761 = vmatprep.mubr.f32.mxu0 0.0
    %1762 = vmatmul.mubr.f32.gmra.mrb[0].mxu0 %v1644
    %v1763 = vpop.f32.mrb[0].mxu0
    %v1764 = vadd.f32 0.0, %v1763
    %v1765 = vpop.f32.mrb[0].mxu0
    %v1766 = vadd.f32 0.0, %v1765
    %1767 = vdwg.mxu0
    %1768 = vmatprep.subr.mxu0 0.0
    %1769 = vmatpush1.msra.mxu0 %v1651
    %1770 = vmatprep.subr.mxu0 0.0
    %1771 = vmatpush1.msra.mxu0 %v1654
    %1772 = vmatprep.subr.mxu0 0.0
    %1773 = vmatpush1.msra.mxu0 %v1657
    %1774 = vmatprep.subr.mxu0 0.0
    %1775 = vmatpush1.msra.mxu0 %v1660
    %1776 = vmatprep.subr.mxu0 0.0
    %1777 = vmatpush1.msra.mxu0 %v1663
    %1778 = vmatprep.subr.mxu0 0.0
    %1779 = vmatpush1.msra.mxu0 %v1666
    %1780 = vmatprep.subr.mxu0 0.0
    %1781 = vmatpush1.msra.mxu0 %v1669
    %1782 = vmatprep.subr.mxu0 0.0
    %1783 = vmatpush1.msra.mxu0 %v1672
    %1784 = vmatprep.subr.mxu0 0.0
    %1785 = vmatpush1.msra.mxu0 %v1675
    %1786 = vmatprep.subr.mxu0 0.0
    %1787 = vmatpush1.msra.mxu0 %v1678
    %1788 = vmatprep.subr.mxu0 0.0
    %1789 = vmatpush1.msra.mxu0 %v1681
    %1790 = vmatprep.subr.mxu0 0.0
    %1791 = vmatpush1.msra.mxu0 %v1684
    %1792 = vmatprep.subr.mxu0 0.0
    %1793 = vmatpush1.msra.mxu0 %v1687
    %1794 = vmatprep.subr.mxu0 0.0
    %1795 = vmatpush1.msra.mxu0 %v1690
    %1796 = vmatprep.subr.mxu0 0.0
    %1797 = vmatpush1.msra.mxu0 %v1693
    %1798 = vmatprep.subr.mxu0 0.0
    %1799 = vmatpush1.msra.mxu0 %v1696
    %1800 = vmatprep.subr.mxu0 0.0
    %1801 = vmatpush1.msra.mxu0 0.0
    %1802 = vmatprep.subr.mxu0 0.0
    %1803 = vmatpush1.msra.mxu0 0.0
    %1804 = vmatprep.subr.mxu0 0.0
    %1805 = vmatpush1.msra.mxu0 0.0
    %1806 = vmatprep.subr.mxu0 0.0
    %1807 = vmatpush1.msra.mxu0 0.0
    %1808 = vmatprep.subr.mxu0 0.0
    %1809 = vmatpush1.msra.mxu0 0.0
    %1810 = vmatprep.subr.mxu0 0.0
    %1811 = vmatpush1.msra.mxu0 0.0
    %1812 = vmatprep.subr.mxu0 0.0
    %1813 = vmatpush1.msra.mxu0 0.0
    %1814 = vmatprep.subr.mxu0 0.0
    %1815 = vmatpush1.msra.mxu0 0.0
    %1816 = vmatprep.subr.mxu0 0.0
    %1817 = vmatpush1.msra.mxu0 0.0
    %1818 = vmatprep.subr.mxu0 0.0
    %1819 = vmatpush1.msra.mxu0 0.0
    %1820 = vmatprep.subr.mxu0 0.0
    %1821 = vmatpush1.msra.mxu0 0.0
    %1822 = vmatprep.subr.mxu0 0.0
    %1823 = vmatpush1.msra.mxu0 0.0
    %1824 = vmatprep.subr.mxu0 0.0
    %1825 = vmatpush1.msra.mxu0 0.0
    %1826 = vmatprep.subr.mxu0 0.0
    %1827 = vmatpush1.msra.mxu0 0.0
    %1828 = vmatprep.subr.mxu0 0.0
    %1829 = vmatpush1.msra.mxu0 0.0
    %1830 = vmatprep.subr.mxu0 0.0
    %1831 = vmatpush1.msra.mxu0 0.0
    %1832 = vmatprep.mubr.f32.mxu0 0.0
    %1833 = vmatmul.mubr.f32.gmra.mrb[0].mxu0 %v1644
    %v1834 = vpop.f32.mrb[0].mxu0
    %v1835 = vadd.f32 0.0, %v1834
    %v1836 = vpop.f32.mrb[0].mxu0
    %1837 = vdwg.mxu0
    %v1840 = vcombine.low %v1764, %v1766
    %v1842 = vunpack.c.l.s4 1983009808
    %v1843 = vunpack.c.0.s8 %v1842
    %v1844 = vlaneseq
    %v1845 = vshrl.u32 %v1844, 7
    %v1846 = vsub.s32 %v1843, %v1845
    %v1847 = vrot.slane %v1840, %v1846
    %v1849 = vadd.f32 %v1648, %v1847
    %v1850 = vxor.u32 %v1849, 2147483648
    %v1851 = vmul.f32 %v1850, 1.442695
    %v1852 = vpow.pop %v1851
    %v1853 = vadd.f32 %v1852, 1.0
    %v1854 = vrcp.pop %v1853
    %v1855 = vmul.f32 1.0, %v1854
    %v1856 = vadd.f32 %v1835, %v522
    %v1857 = vmul.f32 %v1855, %v1856
    %v1859 = vrot.slane %v1648, 4
    %v1861 = vadd.f32 %v1859, %v1857
    %v1862 = vtanh.pop %v1861
    %v1864 = vrot.slane %v1855, 2
    %v1866 = vsub.f32 1.0, %v1864
    %v1867 = vmul.f32 %v1866, %v1862
    %v1868 = vmul.f32 %v1864, %v1644
    %v1869 = vadd.f32 %v1867, %v1868
    %s1870 = scalar_lea.vmem [#allocation3], 10
    %1871 = vst [vmem:[%s1870] sm:$0x3] %v1869
    %s1872 = scalar_lea.vmem [#allocation2], 36
    %v1873 = vld [vmem:[%s1872] sm:$0x3f]
    %v1874 = vld [vmem:[#allocation8] sm:$0xff]
    %v1875 = vld [vmem:[#allocation8 + $0x8] sm:$0xff]
    %v1876 = vld [vmem:[#allocation8 + $0x10] sm:$0xff]
    %v1877 = vld [vmem:[#allocation8 + $0x18] sm:$0xff]
    %v1878 = vld [vmem:[#allocation8 + $0x20] sm:$0xff]
    %v1879 = vld [vmem:[#allocation8 + $0x28] sm:$0xff]
    %v1880 = vld [vmem:[#allocation8 + $0x30] sm:$0xff]
    %v1881 = vld [vmem:[#allocation8 + $0x38] sm:$0xff]
    %v1882 = vld [vmem:[#allocation8 + $0x40] sm:$0xff]
    %v1883 = vld [vmem:[#allocation8 + $0x48] sm:$0xff]
    %v1884 = vld [vmem:[#allocation8 + $0x50] sm:$0xff]
    %v1885 = vld [vmem:[#allocation8 + $0x58] sm:$0xff]
    %v1886 = vld [vmem:[#allocation8 + $0x60] sm:$0xff]
    %v1887 = vld [vmem:[#allocation8 + $0x68] sm:$0xff]
    %v1888 = vld [vmem:[#allocation8 + $0x70] sm:$0xff]
    %v1889 = vld [vmem:[#allocation8 + $0x78] sm:$0xff]
    %v1890 = vld [vmem:[#allocation8 + $0x80] sm:$0xff]
    %v1891 = vld [vmem:[#allocation8 + $0x88] sm:$0xff]
    %v1892 = vld [vmem:[#allocation8 + $0x90] sm:$0xff]
    %v1893 = vld [vmem:[#allocation8 + $0x98] sm:$0xff]
    %v1894 = vld [vmem:[#allocation8 + $0xa0] sm:$0xff]
    %v1895 = vld [vmem:[#allocation8 + $0xa8] sm:$0xff]
    %v1896 = vld [vmem:[#allocation8 + $0xb0] sm:$0xff]
    %v1897 = vld [vmem:[#allocation8 + $0xb8] sm:$0xff]
    %v1898 = vld [vmem:[#allocation8 + $0xc0] sm:$0xff]
    %v1899 = vld [vmem:[#allocation8 + $0xc8] sm:$0xff]
    %v1900 = vld [vmem:[#allocation8 + $0xd0] sm:$0xff]
    %v1901 = vld [vmem:[#allocation8 + $0xd8] sm:$0xff]
    %v1902 = vld [vmem:[#allocation8 + $0xe0] sm:$0xff]
    %v1903 = vld [vmem:[#allocation8 + $0xe8] sm:$0xff]
    %v1904 = vld [vmem:[#allocation8 + $0xf0] sm:$0xff]
    %v1905 = vld [vmem:[#allocation8 + $0xf8] sm:$0xff]
    %v1906 = vld [vmem:[#allocation8 + $0x100] sm:$0xff]
    %v1907 = vld [vmem:[#allocation8 + $0x108] sm:$0xff]
    %v1908 = vld [vmem:[#allocation8 + $0x110] sm:$0xff]
    %v1909 = vld [vmem:[#allocation8 + $0x118] sm:$0xff]
    %v1910 = vld [vmem:[#allocation8 + $0x120] sm:$0xff]
    %v1911 = vld [vmem:[#allocation8 + $0x128] sm:$0xff]
    %v1912 = vld [vmem:[#allocation8 + $0x130] sm:$0xff]
    %v1913 = vld [vmem:[#allocation8 + $0x138] sm:$0xff]
    %v1914 = vld [vmem:[#allocation8 + $0x140] sm:$0xff]
    %v1915 = vld [vmem:[#allocation8 + $0x148] sm:$0xff]
    %v1916 = vld [vmem:[#allocation8 + $0x150] sm:$0xff]
    %v1917 = vld [vmem:[#allocation8 + $0x158] sm:$0xff]
    %v1918 = vld [vmem:[#allocation8 + $0x160] sm:$0xff]
    %v1919 = vld [vmem:[#allocation8 + $0x168] sm:$0xff]
    %v1920 = vld [vmem:[#allocation8 + $0x170] sm:$0xff]
    %v1921 = vld [vmem:[#allocation8 + $0x178] sm:$0xff]
    %1922 = vmatprep.subr.mxu0 %v1875
    %1923 = vmatpush1.msra.mxu0 %v1874
    %1924 = vmatprep.subr.mxu0 %v1878
    %1925 = vmatpush1.msra.mxu0 %v1877
    %1926 = vmatprep.subr.mxu0 %v1881
    %1927 = vmatpush1.msra.mxu0 %v1880
    %1928 = vmatprep.subr.mxu0 %v1884
    %1929 = vmatpush1.msra.mxu0 %v1883
    %1930 = vmatprep.subr.mxu0 %v1887
    %1931 = vmatpush1.msra.mxu0 %v1886
    %1932 = vmatprep.subr.mxu0 %v1890
    %1933 = vmatpush1.msra.mxu0 %v1889
    %1934 = vmatprep.subr.mxu0 %v1893
    %1935 = vmatpush1.msra.mxu0 %v1892
    %1936 = vmatprep.subr.mxu0 %v1896
    %1937 = vmatpush1.msra.mxu0 %v1895
    %1938 = vmatprep.subr.mxu0 %v1899
    %1939 = vmatpush1.msra.mxu0 %v1898
    %1940 = vmatprep.subr.mxu0 %v1902
    %1941 = vmatpush1.msra.mxu0 %v1901
    %1942 = vmatprep.subr.mxu0 %v1905
    %1943 = vmatpush1.msra.mxu0 %v1904
    %1944 = vmatprep.subr.mxu0 %v1908
    %1945 = vmatpush1.msra.mxu0 %v1907
    %1946 = vmatprep.subr.mxu0 %v1911
    %1947 = vmatpush1.msra.mxu0 %v1910
    %1948 = vmatprep.subr.mxu0 %v1914
    %1949 = vmatpush1.msra.mxu0 %v1913
    %1950 = vmatprep.subr.mxu0 %v1917
    %1951 = vmatpush1.msra.mxu0 %v1916
    %1952 = vmatprep.subr.mxu0 %v1920
    %1953 = vmatpush1.msra.mxu0 %v1919
    %1954 = vmatprep.subr.mxu0 0.0
    %1955 = vmatpush1.msra.mxu0 0.0
    %1956 = vmatprep.subr.mxu0 0.0
    %1957 = vmatpush1.msra.mxu0 0.0
    %1958 = vmatprep.subr.mxu0 0.0
    %1959 = vmatpush1.msra.mxu0 0.0
    %1960 = vmatprep.subr.mxu0 0.0
    %1961 = vmatpush1.msra.mxu0 0.0
    %1962 = vmatprep.subr.mxu0 0.0
    %1963 = vmatpush1.msra.mxu0 0.0
    %1964 = vmatprep.subr.mxu0 0.0
    %1965 = vmatpush1.msra.mxu0 0.0
    %1966 = vmatprep.subr.mxu0 0.0
    %1967 = vmatpush1.msra.mxu0 0.0
    %1968 = vmatprep.subr.mxu0 0.0
    %1969 = vmatpush1.msra.mxu0 0.0
    %1970 = vmatprep.subr.mxu0 0.0
    %1971 = vmatpush1.msra.mxu0 0.0
    %1972 = vmatprep.subr.mxu0 0.0
    %1973 = vmatpush1.msra.mxu0 0.0
    %1974 = vmatprep.subr.mxu0 0.0
    %1975 = vmatpush1.msra.mxu0 0.0
    %1976 = vmatprep.subr.mxu0 0.0
    %1977 = vmatpush1.msra.mxu0 0.0
    %1978 = vmatprep.subr.mxu0 0.0
    %1979 = vmatpush1.msra.mxu0 0.0
    %1980 = vmatprep.subr.mxu0 0.0
    %1981 = vmatpush1.msra.mxu0 0.0
    %1982 = vmatprep.subr.mxu0 0.0
    %1983 = vmatpush1.msra.mxu0 0.0
    %1984 = vmatprep.subr.mxu0 0.0
    %1985 = vmatpush1.msra.mxu0 0.0
    %1986 = vmatprep.mubr.f32.mxu0 0.0
    %1987 = vmatmul.mubr.f32.gmra.mrb[0].mxu0 %v1869
    %v1988 = vpop.f32.mrb[0].mxu0
    %v1989 = vadd.f32 0.0, %v1988
    %v1990 = vpop.f32.mrb[0].mxu0
    %v1991 = vadd.f32 0.0, %v1990
    %1992 = vdwg.mxu0
    %1993 = vmatprep.subr.mxu0 0.0
    %1994 = vmatpush1.msra.mxu0 %v1876
    %1995 = vmatprep.subr.mxu0 0.0
    %1996 = vmatpush1.msra.mxu0 %v1879
    %1997 = vmatprep.subr.mxu0 0.0
    %1998 = vmatpush1.msra.mxu0 %v1882
    %1999 = vmatprep.subr.mxu0 0.0
    %2000 = vmatpush1.msra.mxu0 %v1885
    %2001 = vmatprep.subr.mxu0 0.0
    %2002 = vmatpush1.msra.mxu0 %v1888
    %2003 = vmatprep.subr.mxu0 0.0
    %2004 = vmatpush1.msra.mxu0 %v1891
    %2005 = vmatprep.subr.mxu0 0.0
    %2006 = vmatpush1.msra.mxu0 %v1894
    %2007 = vmatprep.subr.mxu0 0.0
    %2008 = vmatpush1.msra.mxu0 %v1897
    %2009 = vmatprep.subr.mxu0 0.0
    %2010 = vmatpush1.msra.mxu0 %v1900
    %2011 = vmatprep.subr.mxu0 0.0
    %2012 = vmatpush1.msra.mxu0 %v1903
    %2013 = vmatprep.subr.mxu0 0.0
    %2014 = vmatpush1.msra.mxu0 %v1906
    %2015 = vmatprep.subr.mxu0 0.0
    %2016 = vmatpush1.msra.mxu0 %v1909
    %2017 = vmatprep.subr.mxu0 0.0
    %2018 = vmatpush1.msra.mxu0 %v1912
    %2019 = vmatprep.subr.mxu0 0.0
    %2020 = vmatpush1.msra.mxu0 %v1915
    %2021 = vmatprep.subr.mxu0 0.0
    %2022 = vmatpush1.msra.mxu0 %v1918
    %2023 = vmatprep.subr.mxu0 0.0
    %2024 = vmatpush1.msra.mxu0 %v1921
    %2025 = vmatprep.subr.mxu0 0.0
    %2026 = vmatpush1.msra.mxu0 0.0
    %2027 = vmatprep.subr.mxu0 0.0
    %2028 = vmatpush1.msra.mxu0 0.0
    %2029 = vmatprep.subr.mxu0 0.0
    %2030 = vmatpush1.msra.mxu0 0.0
    %2031 = vmatprep.subr.mxu0 0.0
    %2032 = vmatpush1.msra.mxu0 0.0
    %2033 = vmatprep.subr.mxu0 0.0
    %2034 = vmatpush1.msra.mxu0 0.0
    %2035 = vmatprep.subr.mxu0 0.0
    %2036 = vmatpush1.msra.mxu0 0.0
    %2037 = vmatprep.subr.mxu0 0.0
    %2038 = vmatpush1.msra.mxu0 0.0
    %2039 = vmatprep.subr.mxu0 0.0
    %2040 = vmatpush1.msra.mxu0 0.0
    %2041 = vmatprep.subr.mxu0 0.0
    %2042 = vmatpush1.msra.mxu0 0.0
    %2043 = vmatprep.subr.mxu0 0.0
    %2044 = vmatpush1.msra.mxu0 0.0
    %2045 = vmatprep.subr.mxu0 0.0
    %2046 = vmatpush1.msra.mxu0 0.0
    %2047 = vmatprep.subr.mxu0 0.0
    %2048 = vmatpush1.msra.mxu0 0.0
    %2049 = vmatprep.subr.mxu0 0.0
    %2050 = vmatpush1.msra.mxu0 0.0
    %2051 = vmatprep.subr.mxu0 0.0
    %2052 = vmatpush1.msra.mxu0 0.0
    %2053 = vmatprep.subr.mxu0 0.0
    %2054 = vmatpush1.msra.mxu0 0.0
    %2055 = vmatprep.subr.mxu0 0.0
    %2056 = vmatpush1.msra.mxu0 0.0
    %2057 = vmatprep.mubr.f32.mxu0 0.0
    %2058 = vmatmul.mubr.f32.gmra.mrb[0].mxu0 %v1869
    %v2059 = vpop.f32.mrb[0].mxu0
    %v2060 = vadd.f32 0.0, %v2059
    %v2061 = vpop.f32.mrb[0].mxu0
    %2062 = vdwg.mxu0
    %v2065 = vcombine.low %v1989, %v1991
    %v2067 = vunpack.c.l.s4 1983009808
    %v2068 = vunpack.c.0.s8 %v2067
    %v2069 = vlaneseq
    %v2070 = vshrl.u32 %v2069, 7
    %v2071 = vsub.s32 %v2068, %v2070
    %v2072 = vrot.slane %v2065, %v2071
    %v2074 = vadd.f32 %v1873, %v2072
    %v2075 = vxor.u32 %v2074, 2147483648
    %v2076 = vmul.f32 %v2075, 1.442695
    %v2077 = vpow.pop %v2076
    %v2078 = vadd.f32 %v2077, 1.0
    %v2079 = vrcp.pop %v2078
    %v2080 = vmul.f32 1.0, %v2079
    %v2081 = vadd.f32 %v2060, %v522
    %v2082 = vmul.f32 %v2080, %v2081
    %v2084 = vrot.slane %v1873, 4
    %v2086 = vadd.f32 %v2084, %v2082
    %v2087 = vtanh.pop %v2086
    %v2089 = vrot.slane %v2080, 2
    %v2091 = vsub.f32 1.0, %v2089
    %v2092 = vmul.f32 %v2091, %v2087
    %v2093 = vmul.f32 %v2089, %v1869
    %v2094 = vadd.f32 %v2092, %v2093
    %s2095 = scalar_lea.vmem [#allocation3], 12
    %2096 = vst [vmem:[%s2095] sm:$0x3] %v2094
    %s2097 = scalar_lea.vmem [#allocation2], 42
    %v2098 = vld [vmem:[%s2097] sm:$0x3f]
    %v2099 = vld [vmem:[#allocation8] sm:$0xff]
    %v2100 = vld [vmem:[#allocation8 + $0x8] sm:$0xff]
    %v2101 = vld [vmem:[#allocation8 + $0x10] sm:$0xff]
    %v2102 = vld [vmem:[#allocation8 + $0x18] sm:$0xff]
    %v2103 = vld [vmem:[#allocation8 + $0x20] sm:$0xff]
    %v2104 = vld [vmem:[#allocation8 + $0x28] sm:$0xff]
    %v2105 = vld [vmem:[#allocation8 + $0x30] sm:$0xff]
    %v2106 = vld [vmem:[#allocation8 + $0x38] sm:$0xff]
    %v2107 = vld [vmem:[#allocation8 + $0x40] sm:$0xff]
    %v2108 = vld [vmem:[#allocation8 + $0x48] sm:$0xff]
    %v2109 = vld [vmem:[#allocation8 + $0x50] sm:$0xff]
    %v2110 = vld [vmem:[#allocation8 + $0x58] sm:$0xff]
    %v2111 = vld [vmem:[#allocation8 + $0x60] sm:$0xff]
    %v2112 = vld [vmem:[#allocation8 + $0x68] sm:$0xff]
    %v2113 = vld [vmem:[#allocation8 + $0x70] sm:$0xff]
    %v2114 = vld [vmem:[#allocation8 + $0x78] sm:$0xff]
    %v2115 = vld [vmem:[#allocation8 + $0x80] sm:$0xff]
    %v2116 = vld [vmem:[#allocation8 + $0x88] sm:$0xff]
    %v2117 = vld [vmem:[#allocation8 + $0x90] sm:$0xff]
    %v2118 = vld [vmem:[#allocation8 + $0x98] sm:$0xff]
    %v2119 = vld [vmem:[#allocation8 + $0xa0] sm:$0xff]
    %v2120 = vld [vmem:[#allocation8 + $0xa8] sm:$0xff]
    %v2121 = vld [vmem:[#allocation8 + $0xb0] sm:$0xff]
    %v2122 = vld [vmem:[#allocation8 + $0xb8] sm:$0xff]
    %v2123 = vld [vmem:[#allocation8 + $0xc0] sm:$0xff]
    %v2124 = vld [vmem:[#allocation8 + $0xc8] sm:$0xff]
    %v2125 = vld [vmem:[#allocation8 + $0xd0] sm:$0xff]
    %v2126 = vld [vmem:[#allocation8 + $0xd8] sm:$0xff]
    %v2127 = vld [vmem:[#allocation8 + $0xe0] sm:$0xff]
    %v2128 = vld [vmem:[#allocation8 + $0xe8] sm:$0xff]
    %v2129 = vld [vmem:[#allocation8 + $0xf0] sm:$0xff]
    %v2130 = vld [vmem:[#allocation8 + $0xf8] sm:$0xff]
    %v2131 = vld [vmem:[#allocation8 + $0x100] sm:$0xff]
    %v2132 = vld [vmem:[#allocation8 + $0x108] sm:$0xff]
    %v2133 = vld [vmem:[#allocation8 + $0x110] sm:$0xff]
    %v2134 = vld [vmem:[#allocation8 + $0x118] sm:$0xff]
    %v2135 = vld [vmem:[#allocation8 + $0x120] sm:$0xff]
    %v2136 = vld [vmem:[#allocation8 + $0x128] sm:$0xff]
    %v2137 = vld [vmem:[#allocation8 + $0x130] sm:$0xff]
    %v2138 = vld [vmem:[#allocation8 + $0x138] sm:$0xff]
    %v2139 = vld [vmem:[#allocation8 + $0x140] sm:$0xff]
    %v2140 = vld [vmem:[#allocation8 + $0x148] sm:$0xff]
    %v2141 = vld [vmem:[#allocation8 + $0x150] sm:$0xff]
    %v2142 = vld [vmem:[#allocation8 + $0x158] sm:$0xff]
    %v2143 = vld [vmem:[#allocation8 + $0x160] sm:$0xff]
    %v2144 = vld [vmem:[#allocation8 + $0x168] sm:$0xff]
    %v2145 = vld [vmem:[#allocation8 + $0x170] sm:$0xff]
    %v2146 = vld [vmem:[#allocation8 + $0x178] sm:$0xff]
    %2147 = vmatprep.subr.mxu0 %v2100
    %2148 = vmatpush1.msra.mxu0 %v2099
    %2149 = vmatprep.subr.mxu0 %v2103
    %2150 = vmatpush1.msra.mxu0 %v2102
    %2151 = vmatprep.subr.mxu0 %v2106
    %2152 = vmatpush1.msra.mxu0 %v2105
    %2153 = vmatprep.subr.mxu0 %v2109
    %2154 = vmatpush1.msra.mxu0 %v2108
    %2155 = vmatprep.subr.mxu0 %v2112
    %2156 = vmatpush1.msra.mxu0 %v2111
    %2157 = vmatprep.subr.mxu0 %v2115
    %2158 = vmatpush1.msra.mxu0 %v2114
    %2159 = vmatprep.subr.mxu0 %v2118
    %2160 = vmatpush1.msra.mxu0 %v2117
    %2161 = vmatprep.subr.mxu0 %v2121
    %2162 = vmatpush1.msra.mxu0 %v2120
    %2163 = vmatprep.subr.mxu0 %v2124
    %2164 = vmatpush1.msra.mxu0 %v2123
    %2165 = vmatprep.subr.mxu0 %v2127
    %2166 = vmatpush1.msra.mxu0 %v2126
    %2167 = vmatprep.subr.mxu0 %v2130
    %2168 = vmatpush1.msra.mxu0 %v2129
    %2169 = vmatprep.subr.mxu0 %v2133
    %2170 = vmatpush1.msra.mxu0 %v2132
    %2171 = vmatprep.subr.mxu0 %v2136
    %2172 = vmatpush1.msra.mxu0 %v2135
    %2173 = vmatprep.subr.mxu0 %v2139
    %2174 = vmatpush1.msra.mxu0 %v2138
    %2175 = vmatprep.subr.mxu0 %v2142
    %2176 = vmatpush1.msra.mxu0 %v2141
    %2177 = vmatprep.subr.mxu0 %v2145
    %2178 = vmatpush1.msra.mxu0 %v2144
    %2179 = vmatprep.subr.mxu0 0.0
    %2180 = vmatpush1.msra.mxu0 0.0
    %2181 = vmatprep.subr.mxu0 0.0
    %2182 = vmatpush1.msra.mxu0 0.0
    %2183 = vmatprep.subr.mxu0 0.0
    %2184 = vmatpush1.msra.mxu0 0.0
    %2185 = vmatprep.subr.mxu0 0.0
    %2186 = vmatpush1.msra.mxu0 0.0
    %2187 = vmatprep.subr.mxu0 0.0
    %2188 = vmatpush1.msra.mxu0 0.0
    %2189 = vmatprep.subr.mxu0 0.0
    %2190 = vmatpush1.msra.mxu0 0.0
    %2191 = vmatprep.subr.mxu0 0.0
    %2192 = vmatpush1.msra.mxu0 0.0
    %2193 = vmatprep.subr.mxu0 0.0
    %2194 = vmatpush1.msra.mxu0 0.0
    %2195 = vmatprep.subr.mxu0 0.0
    %2196 = vmatpush1.msra.mxu0 0.0
    %2197 = vmatprep.subr.mxu0 0.0
    %2198 = vmatpush1.msra.mxu0 0.0
    %2199 = vmatprep.subr.mxu0 0.0
    %2200 = vmatpush1.msra.mxu0 0.0
    %2201 = vmatprep.subr.mxu0 0.0
    %2202 = vmatpush1.msra.mxu0 0.0
    %2203 = vmatprep.subr.mxu0 0.0
    %2204 = vmatpush1.msra.mxu0 0.0
    %2205 = vmatprep.subr.mxu0 0.0
    %2206 = vmatpush1.msra.mxu0 0.0
    %2207 = vmatprep.subr.mxu0 0.0
    %2208 = vmatpush1.msra.mxu0 0.0
    %2209 = vmatprep.subr.mxu0 0.0
    %2210 = vmatpush1.msra.mxu0 0.0
    %2211 = vmatprep.mubr.f32.mxu0 0.0
    %2212 = vmatmul.mubr.f32.gmra.mrb[0].mxu0 %v2094
    %v2213 = vpop.f32.mrb[0].mxu0
    %v2214 = vadd.f32 0.0, %v2213
    %v2215 = vpop.f32.mrb[0].mxu0
    %v2216 = vadd.f32 0.0, %v2215
    %2217 = vdwg.mxu0
    %2218 = vmatprep.subr.mxu0 0.0
    %2219 = vmatpush1.msra.mxu0 %v2101
    %2220 = vmatprep.subr.mxu0 0.0
    %2221 = vmatpush1.msra.mxu0 %v2104
    %2222 = vmatprep.subr.mxu0 0.0
    %2223 = vmatpush1.msra.mxu0 %v2107
    %2224 = vmatprep.subr.mxu0 0.0
    %2225 = vmatpush1.msra.mxu0 %v2110
    %2226 = vmatprep.subr.mxu0 0.0
    %2227 = vmatpush1.msra.mxu0 %v2113
    %2228 = vmatprep.subr.mxu0 0.0
    %2229 = vmatpush1.msra.mxu0 %v2116
    %2230 = vmatprep.subr.mxu0 0.0
    %2231 = vmatpush1.msra.mxu0 %v2119
    %2232 = vmatprep.subr.mxu0 0.0
    %2233 = vmatpush1.msra.mxu0 %v2122
    %2234 = vmatprep.subr.mxu0 0.0
    %2235 = vmatpush1.msra.mxu0 %v2125
    %2236 = vmatprep.subr.mxu0 0.0
    %2237 = vmatpush1.msra.mxu0 %v2128
    %2238 = vmatprep.subr.mxu0 0.0
    %2239 = vmatpush1.msra.mxu0 %v2131
    %2240 = vmatprep.subr.mxu0 0.0
    %2241 = vmatpush1.msra.mxu0 %v2134
    %2242 = vmatprep.subr.mxu0 0.0
    %2243 = vmatpush1.msra.mxu0 %v2137
    %2244 = vmatprep.subr.mxu0 0.0
    %2245 = vmatpush1.msra.mxu0 %v2140
    %2246 = vmatprep.subr.mxu0 0.0
    %2247 = vmatpush1.msra.mxu0 %v2143
    %2248 = vmatprep.subr.mxu0 0.0
    %2249 = vmatpush1.msra.mxu0 %v2146
    %2250 = vmatprep.subr.mxu0 0.0
    %2251 = vmatpush1.msra.mxu0 0.0
    %2252 = vmatprep.subr.mxu0 0.0
    %2253 = vmatpush1.msra.mxu0 0.0
    %2254 = vmatprep.subr.mxu0 0.0
    %2255 = vmatpush1.msra.mxu0 0.0
    %2256 = vmatprep.subr.mxu0 0.0
    %2257 = vmatpush1.msra.mxu0 0.0
    %2258 = vmatprep.subr.mxu0 0.0
    %2259 = vmatpush1.msra.mxu0 0.0
    %2260 = vmatprep.subr.mxu0 0.0
    %2261 = vmatpush1.msra.mxu0 0.0
    %2262 = vmatprep.subr.mxu0 0.0
    %2263 = vmatpush1.msra.mxu0 0.0
    %2264 = vmatprep.subr.mxu0 0.0
    %2265 = vmatpush1.msra.mxu0 0.0
    %2266 = vmatprep.subr.mxu0 0.0
    %2267 = vmatpush1.msra.mxu0 0.0
    %2268 = vmatprep.subr.mxu0 0.0
    %2269 = vmatpush1.msra.mxu0 0.0
    %2270 = vmatprep.subr.mxu0 0.0
    %2271 = vmatpush1.msra.mxu0 0.0
    %2272 = vmatprep.subr.mxu0 0.0
    %2273 = vmatpush1.msra.mxu0 0.0
    %2274 = vmatprep.subr.mxu0 0.0
    %2275 = vmatpush1.msra.mxu0 0.0
    %2276 = vmatprep.subr.mxu0 0.0
    %2277 = vmatpush1.msra.mxu0 0.0
    %2278 = vmatprep.subr.mxu0 0.0
    %2279 = vmatpush1.msra.mxu0 0.0
    %2280 = vmatprep.subr.mxu0 0.0
    %2281 = vmatpush1.msra.mxu0 0.0
    %2282 = vmatprep.mubr.f32.mxu0 0.0
    %2283 = vmatmul.mubr.f32.gmra.mrb[0].mxu0 %v2094
    %v2284 = vpop.f32.mrb[0].mxu0
    %v2285 = vadd.f32 0.0, %v2284
    %v2286 = vpop.f32.mrb[0].mxu0
    %2287 = vdwg.mxu0
    %v2290 = vcombine.low %v2214, %v2216
    %v2292 = vunpack.c.l.s4 1983009808
    %v2293 = vunpack.c.0.s8 %v2292
    %v2294 = vlaneseq
    %v2295 = vshrl.u32 %v2294, 7
    %v2296 = vsub.s32 %v2293, %v2295
    %v2297 = vrot.slane %v2290, %v2296
    %v2299 = vadd.f32 %v2098, %v2297
    %v2300 = vxor.u32 %v2299, 2147483648
    %v2301 = vmul.f32 %v2300, 1.442695
    %v2302 = vpow.pop %v2301
    %v2303 = vadd.f32 %v2302, 1.0
    %v2304 = vrcp.pop %v2303
    %v2305 = vmul.f32 1.0, %v2304
    %v2306 = vadd.f32 %v2285, %v522
    %v2307 = vmul.f32 %v2305, %v2306
    %v2309 = vrot.slane %v2098, 4
    %v2311 = vadd.f32 %v2309, %v2307
    %v2312 = vtanh.pop %v2311
    %v2314 = vrot.slane %v2305, 2
    %v2316 = vsub.f32 1.0, %v2314
    %v2317 = vmul.f32 %v2316, %v2312
    %v2318 = vmul.f32 %v2314, %v2094
    %v2319 = vadd.f32 %v2317, %v2318
    %s2320 = scalar_lea.vmem [#allocation3], 14
    %2321 = vst [vmem:[%s2320] sm:$0x3] %v2319
    %v2322 = vld [vmem:[#allocation3] sm:$0x3]
    %v2323 = vld [vmem:[#allocation3 + $0x2] sm:$0x3]
    %v2324 = vld [vmem:[#allocation3 + $0x4] sm:$0x3]
    %v2325 = vld [vmem:[#allocation3 + $0x6] sm:$0x3]
    %v2326 = vld [vmem:[#allocation3 + $0x8] sm:$0x3]
    %v2327 = vld [vmem:[#allocation3 + $0xa] sm:$0x3]
    %v2328 = vld [vmem:[#allocation3 + $0xc] sm:$0x3]
    %v2329 = vld [vmem:[#allocation3 + $0xe] sm:$0x3]
    %s2330 = scalar_lea.vmem [#allocation5], 384
    %v2331 = vld [vmem:[%s2330] sm:$0xff]
    %v2332 = vld [vmem:[%s2330 + $0x8] sm:$0xff]
    %v2333 = vld [vmem:[%s2330 + $0x10] sm:$0xff]
    %v2334 = vld [vmem:[%s2330 + $0x18] sm:$0xff]
    %v2335 = vld [vmem:[%s2330 + $0x20] sm:$0xff]
    %v2336 = vld [vmem:[%s2330 + $0x28] sm:$0xff]
    %v2337 = vld [vmem:[%s2330 + $0x30] sm:$0xff]
    %v2338 = vld [vmem:[%s2330 + $0x38] sm:$0xff]
    %v2339 = vld [vmem:[%s2330 + $0x40] sm:$0xff]
    %v2340 = vld [vmem:[%s2330 + $0x48] sm:$0xff]
    %v2341 = vld [vmem:[%s2330 + $0x50] sm:$0xff]
    %v2342 = vld [vmem:[%s2330 + $0x58] sm:$0xff]
    %v2343 = vld [vmem:[%s2330 + $0x60] sm:$0xff]
    %v2344 = vld [vmem:[%s2330 + $0x68] sm:$0xff]
    %v2345 = vld [vmem:[%s2330 + $0x70] sm:$0xff]
    %v2346 = vld [vmem:[%s2330 + $0x78] sm:$0xff]
    %v2347 = vld [vmem:[%s2330 + $0x80] sm:$0xff]
    %v2348 = vld [vmem:[%s2330 + $0x88] sm:$0xff]
    %v2349 = vld [vmem:[%s2330 + $0x90] sm:$0xff]
    %v2350 = vld [vmem:[%s2330 + $0x98] sm:$0xff]
    %v2351 = vld [vmem:[%s2330 + $0xa0] sm:$0xff]
    %v2352 = vld [vmem:[%s2330 + $0xa8] sm:$0xff]
    %v2353 = vld [vmem:[%s2330 + $0xb0] sm:$0xff]
    %v2354 = vld [vmem:[%s2330 + $0xb8] sm:$0xff]
    %v2355 = vld [vmem:[%s2330 + $0xc0] sm:$0xff]
    %v2356 = vld [vmem:[%s2330 + $0xc8] sm:$0xff]
    %v2357 = vld [vmem:[%s2330 + $0xd0] sm:$0xff]
    %v2358 = vld [vmem:[%s2330 + $0xd8] sm:$0xff]
    %v2359 = vld [vmem:[%s2330 + $0xe0] sm:$0xff]
    %v2360 = vld [vmem:[%s2330 + $0xe8] sm:$0xff]
    %v2361 = vld [vmem:[%s2330 + $0xf0] sm:$0xff]
    %v2362 = vld [vmem:[%s2330 + $0xf8] sm:$0xff]
    %v2363 = vld [vmem:[%s2330 + $0x100] sm:$0xff]
    %v2364 = vld [vmem:[%s2330 + $0x108] sm:$0xff]
    %v2365 = vld [vmem:[%s2330 + $0x110] sm:$0xff]
    %v2366 = vld [vmem:[%s2330 + $0x118] sm:$0xff]
    %v2367 = vld [vmem:[%s2330 + $0x120] sm:$0xff]
    %v2368 = vld [vmem:[%s2330 + $0x128] sm:$0xff]
    %v2369 = vld [vmem:[%s2330 + $0x130] sm:$0xff]
    %v2370 = vld [vmem:[%s2330 + $0x138] sm:$0xff]
    %v2371 = vld [vmem:[%s2330 + $0x140] sm:$0xff]
    %v2372 = vld [vmem:[%s2330 + $0x148] sm:$0xff]
    %v2373 = vld [vmem:[%s2330 + $0x150] sm:$0xff]
    %v2374 = vld [vmem:[%s2330 + $0x158] sm:$0xff]
    %v2375 = vld [vmem:[%s2330 + $0x160] sm:$0xff]
    %v2376 = vld [vmem:[%s2330 + $0x168] sm:$0xff]
    %v2377 = vld [vmem:[%s2330 + $0x170] sm:$0xff]
    %v2378 = vld [vmem:[%s2330 + $0x178] sm:$0xff]
    %s2379 = scalar_lea.vmem %s5, 3
    %v2380 = vld [vmem:[%s2379] sm:$0x7]
    %v2382 = vlaneseq
    %v2383 = vshrl.u32 %v2382, 7
    %v2384 = vsub.s32 0, %v2383
    %v2385 = vrot.slane %v2380, %v2384
    %v2386 = vlaneseq
    %v2387 = vshrl.u32 %v2386, 7
    %v2388 = vsub.s32 1, %v2387
    %v2389 = vrot.slane %v2380, %v2388
    %v2390 = vlaneseq
    %v2391 = vshrl.u32 %v2390, 7
    %v2392 = vsub.s32 2, %v2391
    %v2393 = vrot.slane %v2380, %v2392
    %v2405 = vcombine.low %v2322, %v2323
    %v2406 = vcombine.low %v2324, %v2325
    %v2408 = vunpack.c.l.s4 1983009808
    %v2409 = vunpack.c.0.s8 %v2408
    %v2410 = vlaneseq
    %v2411 = vshrl.u32 %v2410, 7
    %v2412 = vsub.s32 %v2409, %v2411
    %v2413 = vrot.slane %v2405, %v2412
    %v2415 = vunpack.c.l.s4 1983009808
    %v2416 = vunpack.c.0.s8 %v2415
    %v2417 = vlaneseq
    %v2418 = vshrl.u32 %v2417, 7
    %v2419 = vsub.s32 %v2416, %v2418
    %v2420 = vrot.slane %v2406, %v2419
    %v2421 = vcombine.low %v2413, %v2420
    %v2422 = vcombine.low %v2326, %v2327
    %v2423 = vcombine.low %v2328, %v2329
    %v2425 = vunpack.c.l.s4 1983009808
    %v2426 = vunpack.c.0.s8 %v2425
    %v2427 = vlaneseq
    %v2428 = vshrl.u32 %v2427, 7
    %v2429 = vsub.s32 %v2426, %v2428
    %v2430 = vrot.slane %v2422, %v2429
    %v2432 = vunpack.c.l.s4 1983009808
    %v2433 = vunpack.c.0.s8 %v2432
    %v2434 = vlaneseq
    %v2435 = vshrl.u32 %v2434, 7
    %v2436 = vsub.s32 %v2433, %v2435
    %v2437 = vrot.slane %v2423, %v2436
    %v2438 = vcombine.low %v2430, %v2437
    %2441 = vmatprep.subr.mxu0 %v2332
    %2442 = vmatpush1.msra.mxu0 %v2331
    %2443 = vmatprep.subr.mxu0 %v2335
    %2444 = vmatpush1.msra.mxu0 %v2334
    %2445 = vmatprep.subr.mxu0 %v2338
    %2446 = vmatpush1.msra.mxu0 %v2337
    %2447 = vmatprep.subr.mxu0 %v2341
    %2448 = vmatpush1.msra.mxu0 %v2340
    %2449 = vmatprep.subr.mxu0 %v2344
    %2450 = vmatpush1.msra.mxu0 %v2343
    %2451 = vmatprep.subr.mxu0 %v2347
    %2452 = vmatpush1.msra.mxu0 %v2346
    %2453 = vmatprep.subr.mxu0 %v2350
    %2454 = vmatpush1.msra.mxu0 %v2349
    %2455 = vmatprep.subr.mxu0 %v2353
    %2456 = vmatpush1.msra.mxu0 %v2352
    %2457 = vmatprep.subr.mxu0 %v2356
    %2458 = vmatpush1.msra.mxu0 %v2355
    %2459 = vmatprep.subr.mxu0 %v2359
    %2460 = vmatpush1.msra.mxu0 %v2358
    %2461 = vmatprep.subr.mxu0 %v2362
    %2462 = vmatpush1.msra.mxu0 %v2361
    %2463 = vmatprep.subr.mxu0 %v2365
    %2464 = vmatpush1.msra.mxu0 %v2364
    %2465 = vmatprep.subr.mxu0 %v2368
    %2466 = vmatpush1.msra.mxu0 %v2367
    %2467 = vmatprep.subr.mxu0 %v2371
    %2468 = vmatpush1.msra.mxu0 %v2370
    %2469 = vmatprep.subr.mxu0 %v2374
    %2470 = vmatpush1.msra.mxu0 %v2373
    %2471 = vmatprep.subr.mxu0 %v2377
    %2472 = vmatpush1.msra.mxu0 %v2376
    %2473 = vmatprep.subr.mxu0 0.0
    %2474 = vmatpush1.msra.mxu0 0.0
    %2475 = vmatprep.subr.mxu0 0.0
    %2476 = vmatpush1.msra.mxu0 0.0
    %2477 = vmatprep.subr.mxu0 0.0
    %2478 = vmatpush1.msra.mxu0 0.0
    %2479 = vmatprep.subr.mxu0 0.0
    %2480 = vmatpush1.msra.mxu0 0.0
    %2481 = vmatprep.subr.mxu0 0.0
    %2482 = vmatpush1.msra.mxu0 0.0
    %2483 = vmatprep.subr.mxu0 0.0
    %2484 = vmatpush1.msra.mxu0 0.0
    %2485 = vmatprep.subr.mxu0 0.0
    %2486 = vmatpush1.msra.mxu0 0.0
    %2487 = vmatprep.subr.mxu0 0.0
    %2488 = vmatpush1.msra.mxu0 0.0
    %2489 = vmatprep.subr.mxu0 0.0
    %2490 = vmatpush1.msra.mxu0 0.0
    %2491 = vmatprep.subr.mxu0 0.0
    %2492 = vmatpush1.msra.mxu0 0.0
    %2493 = vmatprep.subr.mxu0 0.0
    %2494 = vmatpush1.msra.mxu0 0.0
    %2495 = vmatprep.subr.mxu0 0.0
    %2496 = vmatpush1.msra.mxu0 0.0
    %2497 = vmatprep.subr.mxu0 0.0
    %2498 = vmatpush1.msra.mxu0 0.0
    %2499 = vmatprep.subr.mxu0 0.0
    %2500 = vmatpush1.msra.mxu0 0.0
    %2501 = vmatprep.subr.mxu0 0.0
    %2502 = vmatpush1.msra.mxu0 0.0
    %2503 = vmatprep.subr.mxu0 0.0
    %2504 = vmatpush1.msra.mxu0 0.0
    %2505 = vmatprep.mubr.f32.mxu0 0.0
    %2506 = vmatmul.mubr.f32.gmra.mrb[0].mxu0 %v2421
    %v2507 = vpop.f32.mrb[0].mxu0
    %v2508 = vadd.f32 %v2385, %v2507
    %v2509 = vpop.f32.mrb[0].mxu0
    %v2510 = vadd.f32 %v2389, %v2509
    %2511 = vmatprep.mubr.f32.mxu0 0.0
    %2512 = vmatmul.mubr.f32.gmra.mrb[0].mxu0 %v2438
    %v2513 = vpop.f32.mrb[0].mxu0
    %v2514 = vadd.f32 %v2385, %v2513
    %v2515 = vpop.f32.mrb[0].mxu0
    %v2516 = vadd.f32 %v2389, %v2515
    %2517 = vdwg.mxu0
    %2518 = vmatprep.subr.mxu0 0.0
    %2519 = vmatpush1.msra.mxu0 %v2333
    %2520 = vmatprep.subr.mxu0 0.0
    %2521 = vmatpush1.msra.mxu0 %v2336
    %2522 = vmatprep.subr.mxu0 0.0
    %2523 = vmatpush1.msra.mxu0 %v2339
    %2524 = vmatprep.subr.mxu0 0.0
    %2525 = vmatpush1.msra.mxu0 %v2342
    %2526 = vmatprep.subr.mxu0 0.0
    %2527 = vmatpush1.msra.mxu0 %v2345
    %2528 = vmatprep.subr.mxu0 0.0
    %2529 = vmatpush1.msra.mxu0 %v2348
    %2530 = vmatprep.subr.mxu0 0.0
    %2531 = vmatpush1.msra.mxu0 %v2351
    %2532 = vmatprep.subr.mxu0 0.0
    %2533 = vmatpush1.msra.mxu0 %v2354
    %2534 = vmatprep.subr.mxu0 0.0
    %2535 = vmatpush1.msra.mxu0 %v2357
    %2536 = vmatprep.subr.mxu0 0.0
    %2537 = vmatpush1.msra.mxu0 %v2360
    %2538 = vmatprep.subr.mxu0 0.0
    %2539 = vmatpush1.msra.mxu0 %v2363
    %2540 = vmatprep.subr.mxu0 0.0
    %2541 = vmatpush1.msra.mxu0 %v2366
    %2542 = vmatprep.subr.mxu0 0.0
    %2543 = vmatpush1.msra.mxu0 %v2369
    %2544 = vmatprep.subr.mxu0 0.0
    %2545 = vmatpush1.msra.mxu0 %v2372
    %2546 = vmatprep.subr.mxu0 0.0
    %2547 = vmatpush1.msra.mxu0 %v2375
    %2548 = vmatprep.subr.mxu0 0.0
    %2549 = vmatpush1.msra.mxu0 %v2378
    %2550 = vmatprep.subr.mxu0 0.0
    %2551 = vmatpush1.msra.mxu0 0.0
    %2552 = vmatprep.subr.mxu0 0.0
    %2553 = vmatpush1.msra.mxu0 0.0
    %2554 = vmatprep.subr.mxu0 0.0
    %2555 = vmatpush1.msra.mxu0 0.0
    %2556 = vmatprep.subr.mxu0 0.0
    %2557 = vmatpush1.msra.mxu0 0.0
    %2558 = vmatprep.subr.mxu0 0.0
    %2559 = vmatpush1.msra.mxu0 0.0
    %2560 = vmatprep.subr.mxu0 0.0
    %2561 = vmatpush1.msra.mxu0 0.0
    %2562 = vmatprep.subr.mxu0 0.0
    %2563 = vmatpush1.msra.mxu0 0.0
    %2564 = vmatprep.subr.mxu0 0.0
    %2565 = vmatpush1.msra.mxu0 0.0
    %2566 = vmatprep.subr.mxu0 0.0
    %2567 = vmatpush1.msra.mxu0 0.0
    %2568 = vmatprep.subr.mxu0 0.0
    %2569 = vmatpush1.msra.mxu0 0.0
    %2570 = vmatprep.subr.mxu0 0.0
    %2571 = vmatpush1.msra.mxu0 0.0
    %2572 = vmatprep.subr.mxu0 0.0
    %2573 = vmatpush1.msra.mxu0 0.0
    %2574 = vmatprep.subr.mxu0 0.0
    %2575 = vmatpush1.msra.mxu0 0.0
    %2576 = vmatprep.subr.mxu0 0.0
    %2577 = vmatpush1.msra.mxu0 0.0
    %2578 = vmatprep.subr.mxu0 0.0
    %2579 = vmatpush1.msra.mxu0 0.0
    %2580 = vmatprep.subr.mxu0 0.0
    %2581 = vmatpush1.msra.mxu0 0.0
    %2582 = vmatprep.mubr.f32.mxu0 0.0
    %2583 = vmatmul.mubr.f32.gmra.mrb[0].mxu0 %v2421
    %v2584 = vpop.f32.mrb[0].mxu0
    %v2585 = vadd.f32 %v2393, %v2584
    %v2586 = vpop.f32.mrb[0].mxu0
    %2587 = vmatprep.mubr.f32.mxu0 0.0
    %2588 = vmatmul.mubr.f32.gmra.mrb[0].mxu0 %v2438
    %v2589 = vpop.f32.mrb[0].mxu0
    %v2590 = vadd.f32 %v2393, %v2589
    %v2591 = vpop.f32.mrb[0].mxu0
    %2592 = vdwg.mxu0
    %v2599 = vcombine.low %v2508, %v2510
    %v2600 = vcombine.high %v2508, %v2510
    %v2601 = vcombine.high %v2585, %v2585
    %v2603 = vunpack.c.l.s4 1983009808
    %v2604 = vunpack.c.0.s8 %v2603
    %v2605 = vlaneseq
    %v2606 = vshrl.u32 %v2605, 7
    %v2607 = vsub.s32 %v2604, %v2606
    %v2608 = vrot.slane %v2599, %v2607
    %v2610 = vunpack.c.l.s4 1983009808
    %v2611 = vunpack.c.0.s8 %v2610
    %v2612 = vlaneseq
    %v2613 = vshrl.u32 %v2612, 7
    %v2614 = vsub.s32 %v2611, %v2613
    %v2615 = vrot.slane %v2600, %v2614
    %v2617 = vunpack.c.l.s4 1983009808
    %v2618 = vunpack.c.0.s8 %v2617
    %v2619 = vlaneseq
    %v2620 = vshrl.u32 %v2619, 7
    %v2621 = vsub.s32 %v2618, %v2620
    %v2622 = vrot.slane %v2585, %v2621
    %v2624 = vunpack.c.l.s4 1983009808
    %v2625 = vunpack.c.0.s8 %v2624
    %v2626 = vlaneseq
    %v2627 = vshrl.u32 %v2626, 7
    %v2628 = vsub.s32 %v2625, %v2627
    %v2629 = vrot.slane %v2601, %v2628
    %v2630 = vcombine.low %v2608, %v2622
    %v2631 = vcombine.high %v2608, %v2622
    %v2632 = vcombine.low %v2615, %v2629
    %v2633 = vcombine.high %v2615, %v2629
    %v2634 = vcombine.low %v2514, %v2516
    %v2635 = vcombine.high %v2514, %v2516
    %v2636 = vcombine.high %v2590, %v2590
    %v2638 = vunpack.c.l.s4 1983009808
    %v2639 = vunpack.c.0.s8 %v2638
    %v2640 = vlaneseq
    %v2641 = vshrl.u32 %v2640, 7
    %v2642 = vsub.s32 %v2639, %v2641
    %v2643 = vrot.slane %v2634, %v2642
    %v2645 = vunpack.c.l.s4 1983009808
    %v2646 = vunpack.c.0.s8 %v2645
    %v2647 = vlaneseq
    %v2648 = vshrl.u32 %v2647, 7
    %v2649 = vsub.s32 %v2646, %v2648
    %v2650 = vrot.slane %v2635, %v2649
    %v2652 = vunpack.c.l.s4 1983009808
    %v2653 = vunpack.c.0.s8 %v2652
    %v2654 = vlaneseq
    %v2655 = vshrl.u32 %v2654, 7
    %v2656 = vsub.s32 %v2653, %v2655
    %v2657 = vrot.slane %v2590, %v2656
    %v2659 = vunpack.c.l.s4 1983009808
    %v2660 = vunpack.c.0.s8 %v2659
    %v2661 = vlaneseq
    %v2662 = vshrl.u32 %v2661, 7
    %v2663 = vsub.s32 %v2660, %v2662
    %v2664 = vrot.slane %v2636, %v2663
    %v2665 = vcombine.low %v2643, %v2657
    %v2666 = vcombine.high %v2643, %v2657
    %v2667 = vcombine.low %v2650, %v2664
    %v2668 = vcombine.high %v2650, %v2664
    %2677 = vst [vmem:[#allocation2] sm:$0x3f] %v2630
    %2678 = vst [vmem:[#allocation2 + $0x6] sm:$0x3f] %v2631
    %2679 = vst [vmem:[#allocation2 + $0xc] sm:$0x3f] %v2632
    %2680 = vst [vmem:[#allocation2 + $0x12] sm:$0x3f] %v2633
    %2681 = vst [vmem:[#allocation2 + $0x18] sm:$0x3f] %v2665
    %2682 = vst [vmem:[#allocation2 + $0x1e] sm:$0x3f] %v2666
    %2683 = vst [vmem:[#allocation2 + $0x24] sm:$0x3f] %v2667
    %2684 = vst [vmem:[#allocation2 + $0x2a] sm:$0x3f] %v2668
    %s2685 = scalar_lea.vmem %s6, 1
    %v2686 = vld [vmem:[%s2685] sm:$0x1]
    %v2688 = vlaneseq
    %v2689 = vshrl.u32 %v2688, 7
    %v2690 = vsub.s32 0, %v2689
    %v2691 = vrot.slane %v2686, %v2690
    %v2693 = vld [vmem:[#allocation2] sm:$0x3f]
    %s2694 = scalar_lea.vmem [#allocation8], 384
    %v2695 = vld [vmem:[%s2694] sm:$0xff]
    %v2696 = vld [vmem:[%s2694 + $0x8] sm:$0xff]
    %v2697 = vld [vmem:[%s2694 + $0x10] sm:$0xff]
    %v2698 = vld [vmem:[%s2694 + $0x18] sm:$0xff]
    %v2699 = vld [vmem:[%s2694 + $0x20] sm:$0xff]
    %v2700 = vld [vmem:[%s2694 + $0x28] sm:$0xff]
    %v2701 = vld [vmem:[%s2694 + $0x30] sm:$0xff]
    %v2702 = vld [vmem:[%s2694 + $0x38] sm:$0xff]
    %v2703 = vld [vmem:[%s2694 + $0x40] sm:$0xff]
    %v2704 = vld [vmem:[%s2694 + $0x48] sm:$0xff]
    %v2705 = vld [vmem:[%s2694 + $0x50] sm:$0xff]
    %v2706 = vld [vmem:[%s2694 + $0x58] sm:$0xff]
    %v2707 = vld [vmem:[%s2694 + $0x60] sm:$0xff]
    %v2708 = vld [vmem:[%s2694 + $0x68] sm:$0xff]
    %v2709 = vld [vmem:[%s2694 + $0x70] sm:$0xff]
    %v2710 = vld [vmem:[%s2694 + $0x78] sm:$0xff]
    %v2711 = vld [vmem:[%s2694 + $0x80] sm:$0xff]
    %v2712 = vld [vmem:[%s2694 + $0x88] sm:$0xff]
    %v2713 = vld [vmem:[%s2694 + $0x90] sm:$0xff]
    %v2714 = vld [vmem:[%s2694 + $0x98] sm:$0xff]
    %v2715 = vld [vmem:[%s2694 + $0xa0] sm:$0xff]
    %v2716 = vld [vmem:[%s2694 + $0xa8] sm:$0xff]
    %v2717 = vld [vmem:[%s2694 + $0xb0] sm:$0xff]
    %v2718 = vld [vmem:[%s2694 + $0xb8] sm:$0xff]
    %v2719 = vld [vmem:[%s2694 + $0xc0] sm:$0xff]
    %v2720 = vld [vmem:[%s2694 + $0xc8] sm:$0xff]
    %v2721 = vld [vmem:[%s2694 + $0xd0] sm:$0xff]
    %v2722 = vld [vmem:[%s2694 + $0xd8] sm:$0xff]
    %v2723 = vld [vmem:[%s2694 + $0xe0] sm:$0xff]
    %v2724 = vld [vmem:[%s2694 + $0xe8] sm:$0xff]
    %v2725 = vld [vmem:[%s2694 + $0xf0] sm:$0xff]
    %v2726 = vld [vmem:[%s2694 + $0xf8] sm:$0xff]
    %v2727 = vld [vmem:[%s2694 + $0x100] sm:$0xff]
    %v2728 = vld [vmem:[%s2694 + $0x108] sm:$0xff]
    %v2729 = vld [vmem:[%s2694 + $0x110] sm:$0xff]
    %v2730 = vld [vmem:[%s2694 + $0x118] sm:$0xff]
    %v2731 = vld [vmem:[%s2694 + $0x120] sm:$0xff]
    %v2732 = vld [vmem:[%s2694 + $0x128] sm:$0xff]
    %v2733 = vld [vmem:[%s2694 + $0x130] sm:$0xff]
    %v2734 = vld [vmem:[%s2694 + $0x138] sm:$0xff]
    %v2735 = vld [vmem:[%s2694 + $0x140] sm:$0xff]
    %v2736 = vld [vmem:[%s2694 + $0x148] sm:$0xff]
    %v2737 = vld [vmem:[%s2694 + $0x150] sm:$0xff]
    %v2738 = vld [vmem:[%s2694 + $0x158] sm:$0xff]
    %v2739 = vld [vmem:[%s2694 + $0x160] sm:$0xff]
    %v2740 = vld [vmem:[%s2694 + $0x168] sm:$0xff]
    %v2741 = vld [vmem:[%s2694 + $0x170] sm:$0xff]
    %v2742 = vld [vmem:[%s2694 + $0x178] sm:$0xff]
    %2743 = vmatprep.subr.mxu0 %v2696
    %2744 = vmatpush1.msra.mxu0 %v2695
    %2745 = vmatprep.subr.mxu0 %v2699
    %2746 = vmatpush1.msra.mxu0 %v2698
    %2747 = vmatprep.subr.mxu0 %v2702
    %2748 = vmatpush1.msra.mxu0 %v2701
    %2749 = vmatprep.subr.mxu0 %v2705
    %2750 = vmatpush1.msra.mxu0 %v2704
    %2751 = vmatprep.subr.mxu0 %v2708
    %2752 = vmatpush1.msra.mxu0 %v2707
    %2753 = vmatprep.subr.mxu0 %v2711
    %2754 = vmatpush1.msra.mxu0 %v2710
    %2755 = vmatprep.subr.mxu0 %v2714
    %2756 = vmatpush1.msra.mxu0 %v2713
    %2757 = vmatprep.subr.mxu0 %v2717
    %2758 = vmatpush1.msra.mxu0 %v2716
    %2759 = vmatprep.subr.mxu0 %v2720
    %2760 = vmatpush1.msra.mxu0 %v2719
    %2761 = vmatprep.subr.mxu0 %v2723
    %2762 = vmatpush1.msra.mxu0 %v2722
    %2763 = vmatprep.subr.mxu0 %v2726
    %2764 = vmatpush1.msra.mxu0 %v2725
    %2765 = vmatprep.subr.mxu0 %v2729
    %2766 = vmatpush1.msra.mxu0 %v2728
    %2767 = vmatprep.subr.mxu0 %v2732
    %2768 = vmatpush1.msra.mxu0 %v2731
    %2769 = vmatprep.subr.mxu0 %v2735
    %2770 = vmatpush1.msra.mxu0 %v2734
    %2771 = vmatprep.subr.mxu0 %v2738
    %2772 = vmatpush1.msra.mxu0 %v2737
    %2773 = vmatprep.subr.mxu0 %v2741
    %2774 = vmatpush1.msra.mxu0 %v2740
    %2775 = vmatprep.subr.mxu0 0.0
    %2776 = vmatpush1.msra.mxu0 0.0
    %2777 = vmatprep.subr.mxu0 0.0
    %2778 = vmatpush1.msra.mxu0 0.0
    %2779 = vmatprep.subr.mxu0 0.0
    %2780 = vmatpush1.msra.mxu0 0.0
    %2781 = vmatprep.subr.mxu0 0.0
    %2782 = vmatpush1.msra.mxu0 0.0
    %2783 = vmatprep.subr.mxu0 0.0
    %2784 = vmatpush1.msra.mxu0 0.0
    %2785 = vmatprep.subr.mxu0 0.0
    %2786 = vmatpush1.msra.mxu0 0.0
    %2787 = vmatprep.subr.mxu0 0.0
    %2788 = vmatpush1.msra.mxu0 0.0
    %2789 = vmatprep.subr.mxu0 0.0
    %2790 = vmatpush1.msra.mxu0 0.0
    %2791 = vmatprep.subr.mxu0 0.0
    %2792 = vmatpush1.msra.mxu0 0.0
    %2793 = vmatprep.subr.mxu0 0.0
    %2794 = vmatpush1.msra.mxu0 0.0
    %2795 = vmatprep.subr.mxu0 0.0
    %2796 = vmatpush1.msra.mxu0 0.0
    %2797 = vmatprep.subr.mxu0 0.0
    %2798 = vmatpush1.msra.mxu0 0.0
    %2799 = vmatprep.subr.mxu0 0.0
    %2800 = vmatpush1.msra.mxu0 0.0
    %2801 = vmatprep.subr.mxu0 0.0
    %2802 = vmatpush1.msra.mxu0 0.0
    %2803 = vmatprep.subr.mxu0 0.0
    %2804 = vmatpush1.msra.mxu0 0.0
    %2805 = vmatprep.subr.mxu0 0.0
    %2806 = vmatpush1.msra.mxu0 0.0
    %2807 = vmatprep.mubr.f32.mxu0 0.0
    %2808 = vmatmul.mubr.f32.gmra.mrb[0].mxu0 0.0
    %v2809 = vpop.f32.mrb[0].mxu0
    %v2810 = vadd.f32 0.0, %v2809
    %v2811 = vpop.f32.mrb[0].mxu0
    %v2812 = vadd.f32 0.0, %v2811
    %2813 = vdwg.mxu0
    %2814 = vmatprep.subr.mxu0 0.0
    %2815 = vmatpush1.msra.mxu0 %v2697
    %2816 = vmatprep.subr.mxu0 0.0
    %2817 = vmatpush1.msra.mxu0 %v2700
    %2818 = vmatprep.subr.mxu0 0.0
    %2819 = vmatpush1.msra.mxu0 %v2703
    %2820 = vmatprep.subr.mxu0 0.0
    %2821 = vmatpush1.msra.mxu0 %v2706
    %2822 = vmatprep.subr.mxu0 0.0
    %2823 = vmatpush1.msra.mxu0 %v2709
    %2824 = vmatprep.subr.mxu0 0.0
    %2825 = vmatpush1.msra.mxu0 %v2712
    %2826 = vmatprep.subr.mxu0 0.0
    %2827 = vmatpush1.msra.mxu0 %v2715
    %2828 = vmatprep.subr.mxu0 0.0
    %2829 = vmatpush1.msra.mxu0 %v2718
    %2830 = vmatprep.subr.mxu0 0.0
    %2831 = vmatpush1.msra.mxu0 %v2721
    %2832 = vmatprep.subr.mxu0 0.0
    %2833 = vmatpush1.msra.mxu0 %v2724
    %2834 = vmatprep.subr.mxu0 0.0
    %2835 = vmatpush1.msra.mxu0 %v2727
    %2836 = vmatprep.subr.mxu0 0.0
    %2837 = vmatpush1.msra.mxu0 %v2730
    %2838 = vmatprep.subr.mxu0 0.0
    %2839 = vmatpush1.msra.mxu0 %v2733
    %2840 = vmatprep.subr.mxu0 0.0
    %2841 = vmatpush1.msra.mxu0 %v2736
    %2842 = vmatprep.subr.mxu0 0.0
    %2843 = vmatpush1.msra.mxu0 %v2739
    %2844 = vmatprep.subr.mxu0 0.0
    %2845 = vmatpush1.msra.mxu0 %v2742
    %2846 = vmatprep.subr.mxu0 0.0
    %2847 = vmatpush1.msra.mxu0 0.0
    %2848 = vmatprep.subr.mxu0 0.0
    %2849 = vmatpush1.msra.mxu0 0.0
    %2850 = vmatprep.subr.mxu0 0.0
    %2851 = vmatpush1.msra.mxu0 0.0
    %2852 = vmatprep.subr.mxu0 0.0
    %2853 = vmatpush1.msra.mxu0 0.0
    %2854 = vmatprep.subr.mxu0 0.0
    %2855 = vmatpush1.msra.mxu0 0.0
    %2856 = vmatprep.subr.mxu0 0.0
    %2857 = vmatpush1.msra.mxu0 0.0
    %2858 = vmatprep.subr.mxu0 0.0
    %2859 = vmatpush1.msra.mxu0 0.0
    %2860 = vmatprep.subr.mxu0 0.0
    %2861 = vmatpush1.msra.mxu0 0.0
    %2862 = vmatprep.subr.mxu0 0.0
    %2863 = vmatpush1.msra.mxu0 0.0
    %2864 = vmatprep.subr.mxu0 0.0
    %2865 = vmatpush1.msra.mxu0 0.0
    %2866 = vmatprep.subr.mxu0 0.0
    %2867 = vmatpush1.msra.mxu0 0.0
    %2868 = vmatprep.subr.mxu0 0.0
    %2869 = vmatpush1.msra.mxu0 0.0
    %2870 = vmatprep.subr.mxu0 0.0
    %2871 = vmatpush1.msra.mxu0 0.0
    %2872 = vmatprep.subr.mxu0 0.0
    %2873 = vmatpush1.msra.mxu0 0.0
    %2874 = vmatprep.subr.mxu0 0.0
    %2875 = vmatpush1.msra.mxu0 0.0
    %2876 = vmatprep.subr.mxu0 0.0
    %2877 = vmatpush1.msra.mxu0 0.0
    %2878 = vmatprep.mubr.f32.mxu0 0.0
    %2879 = vmatmul.mubr.f32.gmra.mrb[0].mxu0 0.0
    %v2880 = vpop.f32.mrb[0].mxu0
    %v2881 = vadd.f32 0.0, %v2880
    %v2882 = vpop.f32.mrb[0].mxu0
    %2883 = vdwg.mxu0
    %v2886 = vcombine.low %v2810, %v2812
    %v2888 = vunpack.c.l.s4 1983009808
    %v2889 = vunpack.c.0.s8 %v2888
    %v2890 = vlaneseq
    %v2891 = vshrl.u32 %v2890, 7
    %v2892 = vsub.s32 %v2889, %v2891
    %v2893 = vrot.slane %v2886, %v2892
    %v2895 = vadd.f32 %v2693, %v2893
    %v2896 = vxor.u32 %v2895, 2147483648
    %v2897 = vmul.f32 %v2896, 1.442695
    %v2898 = vpow.pop %v2897
    %v2899 = vadd.f32 %v2898, 1.0
    %v2900 = vrcp.pop %v2899
    %v2901 = vmul.f32 1.0, %v2900
    %v2902 = vadd.f32 %v2881, %v2691
    %v2903 = vmul.f32 %v2901, %v2902
    %v2905 = vrot.slane %v2693, 4
    %v2907 = vadd.f32 %v2905, %v2903
    %v2908 = vtanh.pop %v2907
    %v2910 = vrot.slane %v2901, 2
    %v2912 = vsub.f32 1.0, %v2910
    %v2913 = vmul.f32 %v2912, %v2908
    %v2914 = vmul.f32 %v2910, 0.0
    %v2915 = vadd.f32 %v2913, %v2914
    %v2916 = vld [vmem:[%s747] sm:$0x3f]
    %2917 = vmatprep.subr.mxu0 %v2696
    %2918 = vmatpush1.msra.mxu0 %v2695
    %2919 = vmatprep.subr.mxu0 %v2699
    %2920 = vmatpush1.msra.mxu0 %v2698
    %2921 = vmatprep.subr.mxu0 %v2702
    %2922 = vmatpush1.msra.mxu0 %v2701
    %2923 = vmatprep.subr.mxu0 %v2705
    %2924 = vmatpush1.msra.mxu0 %v2704
    %2925 = vmatprep.subr.mxu0 %v2708
    %2926 = vmatpush1.msra.mxu0 %v2707
    %2927 = vmatprep.subr.mxu0 %v2711
    %2928 = vmatpush1.msra.mxu0 %v2710
    %2929 = vmatprep.subr.mxu0 %v2714
    %2930 = vmatpush1.msra.mxu0 %v2713
    %2931 = vmatprep.subr.mxu0 %v2717
    %2932 = vmatpush1.msra.mxu0 %v2716
    %2933 = vmatprep.subr.mxu0 %v2720
    %2934 = vmatpush1.msra.mxu0 %v2719
    %2935 = vmatprep.subr.mxu0 %v2723
    %2936 = vmatpush1.msra.mxu0 %v2722
    %2937 = vmatprep.subr.mxu0 %v2726
    %2938 = vmatpush1.msra.mxu0 %v2725
    %2939 = vmatprep.subr.mxu0 %v2729
    %2940 = vmatpush1.msra.mxu0 %v2728
    %2941 = vmatprep.subr.mxu0 %v2732
    %2942 = vmatpush1.msra.mxu0 %v2731
    %2943 = vmatprep.subr.mxu0 %v2735
    %2944 = vmatpush1.msra.mxu0 %v2734
    %2945 = vmatprep.subr.mxu0 %v2738
    %2946 = vmatpush1.msra.mxu0 %v2737
    %2947 = vmatprep.subr.mxu0 %v2741
    %2948 = vmatpush1.msra.mxu0 %v2740
    %2949 = vmatprep.subr.mxu0 0.0
    %2950 = vmatpush1.msra.mxu0 0.0
    %2951 = vmatprep.subr.mxu0 0.0
    %2952 = vmatpush1.msra.mxu0 0.0
    %2953 = vmatprep.subr.mxu0 0.0
    %2954 = vmatpush1.msra.mxu0 0.0
    %2955 = vmatprep.subr.mxu0 0.0
    %2956 = vmatpush1.msra.mxu0 0.0
    %2957 = vmatprep.subr.mxu0 0.0
    %2958 = vmatpush1.msra.mxu0 0.0
    %2959 = vmatprep.subr.mxu0 0.0
    %2960 = vmatpush1.msra.mxu0 0.0
    %2961 = vmatprep.subr.mxu0 0.0
    %2962 = vmatpush1.msra.mxu0 0.0
    %2963 = vmatprep.subr.mxu0 0.0
    %2964 = vmatpush1.msra.mxu0 0.0
    %2965 = vmatprep.subr.mxu0 0.0
    %2966 = vmatpush1.msra.mxu0 0.0
    %2967 = vmatprep.subr.mxu0 0.0
    %2968 = vmatpush1.msra.mxu0 0.0
    %2969 = vmatprep.subr.mxu0 0.0
    %2970 = vmatpush1.msra.mxu0 0.0
    %2971 = vmatprep.subr.mxu0 0.0
    %2972 = vmatpush1.msra.mxu0 0.0
    %2973 = vmatprep.subr.mxu0 0.0
    %2974 = vmatpush1.msra.mxu0 0.0
    %2975 = vmatprep.subr.mxu0 0.0
    %2976 = vmatpush1.msra.mxu0 0.0
    %2977 = vmatprep.subr.mxu0 0.0
    %2978 = vmatpush1.msra.mxu0 0.0
    %2979 = vmatprep.subr.mxu0 0.0
    %2980 = vmatpush1.msra.mxu0 0.0
    %2981 = vmatprep.mubr.f32.mxu0 0.0
    %2982 = vmatmul.mubr.f32.gmra.mrb[0].mxu0 %v2915
    %v2983 = vpop.f32.mrb[0].mxu0
    %v2984 = vadd.f32 0.0, %v2983
    %v2985 = vpop.f32.mrb[0].mxu0
    %v2986 = vadd.f32 0.0, %v2985
    %2987 = vdwg.mxu0
    %2988 = vmatprep.subr.mxu0 0.0
    %2989 = vmatpush1.msra.mxu0 %v2697
    %2990 = vmatprep.subr.mxu0 0.0
    %2991 = vmatpush1.msra.mxu0 %v2700
    %2992 = vmatprep.subr.mxu0 0.0
    %2993 = vmatpush1.msra.mxu0 %v2703
    %2994 = vmatprep.subr.mxu0 0.0
    %2995 = vmatpush1.msra.mxu0 %v2706
    %2996 = vmatprep.subr.mxu0 0.0
    %2997 = vmatpush1.msra.mxu0 %v2709
    %2998 = vmatprep.subr.mxu0 0.0
    %2999 = vmatpush1.msra.mxu0 %v2712
    %3000 = vmatprep.subr.mxu0 0.0
    %3001 = vmatpush1.msra.mxu0 %v2715
    %3002 = vmatprep.subr.mxu0 0.0
    %3003 = vmatpush1.msra.mxu0 %v2718
    %3004 = vmatprep.subr.mxu0 0.0
    %3005 = vmatpush1.msra.mxu0 %v2721
    %3006 = vmatprep.subr.mxu0 0.0
    %3007 = vmatpush1.msra.mxu0 %v2724
    %3008 = vmatprep.subr.mxu0 0.0
    %3009 = vmatpush1.msra.mxu0 %v2727
    %3010 = vmatprep.subr.mxu0 0.0
    %3011 = vmatpush1.msra.mxu0 %v2730
    %3012 = vmatprep.subr.mxu0 0.0
    %3013 = vmatpush1.msra.mxu0 %v2733
    %3014 = vmatprep.subr.mxu0 0.0
    %3015 = vmatpush1.msra.mxu0 %v2736
    %3016 = vmatprep.subr.mxu0 0.0
    %3017 = vmatpush1.msra.mxu0 %v2739
    %3018 = vmatprep.subr.mxu0 0.0
    %3019 = vmatpush1.msra.mxu0 %v2742
    %3020 = vmatprep.subr.mxu0 0.0
    %3021 = vmatpush1.msra.mxu0 0.0
    %3022 = vmatprep.subr.mxu0 0.0
    %3023 = vmatpush1.msra.mxu0 0.0
    %3024 = vmatprep.subr.mxu0 0.0
    %3025 = vmatpush1.msra.mxu0 0.0
    %3026 = vmatprep.subr.mxu0 0.0
    %3027 = vmatpush1.msra.mxu0 0.0
    %3028 = vmatprep.subr.mxu0 0.0
    %3029 = vmatpush1.msra.mxu0 0.0
    %3030 = vmatprep.subr.mxu0 0.0
    %3031 = vmatpush1.msra.mxu0 0.0
    %3032 = vmatprep.subr.mxu0 0.0
    %3033 = vmatpush1.msra.mxu0 0.0
    %3034 = vmatprep.subr.mxu0 0.0
    %3035 = vmatpush1.msra.mxu0 0.0
    %3036 = vmatprep.subr.mxu0 0.0
    %3037 = vmatpush1.msra.mxu0 0.0
    %3038 = vmatprep.subr.mxu0 0.0
    %3039 = vmatpush1.msra.mxu0 0.0
    %3040 = vmatprep.subr.mxu0 0.0
    %3041 = vmatpush1.msra.mxu0 0.0
    %3042 = vmatprep.subr.mxu0 0.0
    %3043 = vmatpush1.msra.mxu0 0.0
    %3044 = vmatprep.subr.mxu0 0.0
    %3045 = vmatpush1.msra.mxu0 0.0
    %3046 = vmatprep.subr.mxu0 0.0
    %3047 = vmatpush1.msra.mxu0 0.0
    %3048 = vmatprep.subr.mxu0 0.0
    %3049 = vmatpush1.msra.mxu0 0.0
    %3050 = vmatprep.subr.mxu0 0.0
    %3051 = vmatpush1.msra.mxu0 0.0
    %3052 = vmatprep.mubr.f32.mxu0 0.0
    %3053 = vmatmul.mubr.f32.gmra.mrb[0].mxu0 %v2915
    %v3054 = vpop.f32.mrb[0].mxu0
    %v3055 = vadd.f32 0.0, %v3054
    %v3056 = vpop.f32.mrb[0].mxu0
    %3057 = vdwg.mxu0
    %v3060 = vcombine.low %v2984, %v2986
    %v3062 = vunpack.c.l.s4 1983009808
    %v3063 = vunpack.c.0.s8 %v3062
    %v3064 = vlaneseq
    %v3065 = vshrl.u32 %v3064, 7
    %v3066 = vsub.s32 %v3063, %v3065
    %v3067 = vrot.slane %v3060, %v3066
    %v3069 = vadd.f32 %v2916, %v3067
    %v3070 = vxor.u32 %v3069, 2147483648
    %v3071 = vmul.f32 %v3070, 1.442695
    %v3072 = vpow.pop %v3071
    %v3073 = vadd.f32 %v3072, 1.0
    %v3074 = vrcp.pop %v3073
    %v3075 = vmul.f32 1.0, %v3074
    %v3076 = vadd.f32 %v3055, %v2691
    %v3077 = vmul.f32 %v3075, %v3076
    %v3079 = vrot.slane %v2916, 4
    %v3081 = vadd.f32 %v3079, %v3077
    %v3082 = vtanh.pop %v3081
    %v3084 = vrot.slane %v3075, 2
    %v3086 = vsub.f32 1.0, %v3084
    %v3087 = vmul.f32 %v3086, %v3082
    %v3088 = vmul.f32 %v3084, %v2915
    %v3089 = vadd.f32 %v3087, %v3088
    %v3090 = vld [vmem:[%s972] sm:$0x3f]
    %3091 = vmatprep.subr.mxu0 %v2696
    %3092 = vmatpush1.msra.mxu0 %v2695
    %3093 = vmatprep.subr.mxu0 %v2699
    %3094 = vmatpush1.msra.mxu0 %v2698
    %3095 = vmatprep.subr.mxu0 %v2702
    %3096 = vmatpush1.msra.mxu0 %v2701
    %3097 = vmatprep.subr.mxu0 %v2705
    %3098 = vmatpush1.msra.mxu0 %v2704
    %3099 = vmatprep.subr.mxu0 %v2708
    %3100 = vmatpush1.msra.mxu0 %v2707
    %3101 = vmatprep.subr.mxu0 %v2711
    %3102 = vmatpush1.msra.mxu0 %v2710
    %3103 = vmatprep.subr.mxu0 %v2714
    %3104 = vmatpush1.msra.mxu0 %v2713
    %3105 = vmatprep.subr.mxu0 %v2717
    %3106 = vmatpush1.msra.mxu0 %v2716
    %3107 = vmatprep.subr.mxu0 %v2720
    %3108 = vmatpush1.msra.mxu0 %v2719
    %3109 = vmatprep.subr.mxu0 %v2723
    %3110 = vmatpush1.msra.mxu0 %v2722
    %3111 = vmatprep.subr.mxu0 %v2726
    %3112 = vmatpush1.msra.mxu0 %v2725
    %3113 = vmatprep.subr.mxu0 %v2729
    %3114 = vmatpush1.msra.mxu0 %v2728
    %3115 = vmatprep.subr.mxu0 %v2732
    %3116 = vmatpush1.msra.mxu0 %v2731
    %3117 = vmatprep.subr.mxu0 %v2735
    %3118 = vmatpush1.msra.mxu0 %v2734
    %3119 = vmatprep.subr.mxu0 %v2738
    %3120 = vmatpush1.msra.mxu0 %v2737
    %3121 = vmatprep.subr.mxu0 %v2741
    %3122 = vmatpush1.msra.mxu0 %v2740
    %3123 = vmatprep.subr.mxu0 0.0
    %3124 = vmatpush1.msra.mxu0 0.0
    %3125 = vmatprep.subr.mxu0 0.0
    %3126 = vmatpush1.msra.mxu0 0.0
    %3127 = vmatprep.subr.mxu0 0.0
    %3128 = vmatpush1.msra.mxu0 0.0
    %3129 = vmatprep.subr.mxu0 0.0
    %3130 = vmatpush1.msra.mxu0 0.0
    %3131 = vmatprep.subr.mxu0 0.0
    %3132 = vmatpush1.msra.mxu0 0.0
    %3133 = vmatprep.subr.mxu0 0.0
    %3134 = vmatpush1.msra.mxu0 0.0
    %3135 = vmatprep.subr.mxu0 0.0
    %3136 = vmatpush1.msra.mxu0 0.0
    %3137 = vmatprep.subr.mxu0 0.0
    %3138 = vmatpush1.msra.mxu0 0.0
    %3139 = vmatprep.subr.mxu0 0.0
    %3140 = vmatpush1.msra.mxu0 0.0
    %3141 = vmatprep.subr.mxu0 0.0
    %3142 = vmatpush1.msra.mxu0 0.0
    %3143 = vmatprep.subr.mxu0 0.0
    %3144 = vmatpush1.msra.mxu0 0.0
    %3145 = vmatprep.subr.mxu0 0.0
    %3146 = vmatpush1.msra.mxu0 0.0
    %3147 = vmatprep.subr.mxu0 0.0
    %3148 = vmatpush1.msra.mxu0 0.0
    %3149 = vmatprep.subr.mxu0 0.0
    %3150 = vmatpush1.msra.mxu0 0.0
    %3151 = vmatprep.subr.mxu0 0.0
    %3152 = vmatpush1.msra.mxu0 0.0
    %3153 = vmatprep.subr.mxu0 0.0
    %3154 = vmatpush1.msra.mxu0 0.0
    %3155 = vmatprep.mubr.f32.mxu0 0.0
    %3156 = vmatmul.mubr.f32.gmra.mrb[0].mxu0 %v3089
    %v3157 = vpop.f32.mrb[0].mxu0
    %v3158 = vadd.f32 0.0, %v3157
    %v3159 = vpop.f32.mrb[0].mxu0
    %v3160 = vadd.f32 0.0, %v3159
    %3161 = vdwg.mxu0
    %3162 = vmatprep.subr.mxu0 0.0
    %3163 = vmatpush1.msra.mxu0 %v2697
    %3164 = vmatprep.subr.mxu0 0.0
    %3165 = vmatpush1.msra.mxu0 %v2700
    %3166 = vmatprep.subr.mxu0 0.0
    %3167 = vmatpush1.msra.mxu0 %v2703
    %3168 = vmatprep.subr.mxu0 0.0
    %3169 = vmatpush1.msra.mxu0 %v2706
    %3170 = vmatprep.subr.mxu0 0.0
    %3171 = vmatpush1.msra.mxu0 %v2709
    %3172 = vmatprep.subr.mxu0 0.0
    %3173 = vmatpush1.msra.mxu0 %v2712
    %3174 = vmatprep.subr.mxu0 0.0
    %3175 = vmatpush1.msra.mxu0 %v2715
    %3176 = vmatprep.subr.mxu0 0.0
    %3177 = vmatpush1.msra.mxu0 %v2718
    %3178 = vmatprep.subr.mxu0 0.0
    %3179 = vmatpush1.msra.mxu0 %v2721
    %3180 = vmatprep.subr.mxu0 0.0
    %3181 = vmatpush1.msra.mxu0 %v2724
    %3182 = vmatprep.subr.mxu0 0.0
    %3183 = vmatpush1.msra.mxu0 %v2727
    %3184 = vmatprep.subr.mxu0 0.0
    %3185 = vmatpush1.msra.mxu0 %v2730
    %3186 = vmatprep.subr.mxu0 0.0
    %3187 = vmatpush1.msra.mxu0 %v2733
    %3188 = vmatprep.subr.mxu0 0.0
    %3189 = vmatpush1.msra.mxu0 %v2736
    %3190 = vmatprep.subr.mxu0 0.0
    %3191 = vmatpush1.msra.mxu0 %v2739
    %3192 = vmatprep.subr.mxu0 0.0
    %3193 = vmatpush1.msra.mxu0 %v2742
    %3194 = vmatprep.subr.mxu0 0.0
    %3195 = vmatpush1.msra.mxu0 0.0
    %3196 = vmatprep.subr.mxu0 0.0
    %3197 = vmatpush1.msra.mxu0 0.0
    %3198 = vmatprep.subr.mxu0 0.0
    %3199 = vmatpush1.msra.mxu0 0.0
    %3200 = vmatprep.subr.mxu0 0.0
    %3201 = vmatpush1.msra.mxu0 0.0
    %3202 = vmatprep.subr.mxu0 0.0
    %3203 = vmatpush1.msra.mxu0 0.0
    %3204 = vmatprep.subr.mxu0 0.0
    %3205 = vmatpush1.msra.mxu0 0.0
    %3206 = vmatprep.subr.mxu0 0.0
    %3207 = vmatpush1.msra.mxu0 0.0
    %3208 = vmatprep.subr.mxu0 0.0
    %3209 = vmatpush1.msra.mxu0 0.0
    %3210 = vmatprep.subr.mxu0 0.0
    %3211 = vmatpush1.msra.mxu0 0.0
    %3212 = vmatprep.subr.mxu0 0.0
    %3213 = vmatpush1.msra.mxu0 0.0
    %3214 = vmatprep.subr.mxu0 0.0
    %3215 = vmatpush1.msra.mxu0 0.0
    %3216 = vmatprep.subr.mxu0 0.0
    %3217 = vmatpush1.msra.mxu0 0.0
    %3218 = vmatprep.subr.mxu0 0.0
    %3219 = vmatpush1.msra.mxu0 0.0
    %3220 = vmatprep.subr.mxu0 0.0
    %3221 = vmatpush1.msra.mxu0 0.0
    %3222 = vmatprep.subr.mxu0 0.0
    %3223 = vmatpush1.msra.mxu0 0.0
    %3224 = vmatprep.subr.mxu0 0.0
    %3225 = vmatpush1.msra.mxu0 0.0
    %3226 = vmatprep.mubr.f32.mxu0 0.0
    %3227 = vmatmul.mubr.f32.gmra.mrb[0].mxu0 %v3089
    %v3228 = vpop.f32.mrb[0].mxu0
    %v3229 = vadd.f32 0.0, %v3228
    %v3230 = vpop.f32.mrb[0].mxu0
    %3231 = vdwg.mxu0
    %v3234 = vcombine.low %v3158, %v3160
    %v3236 = vunpack.c.l.s4 1983009808
    %v3237 = vunpack.c.0.s8 %v3236
    %v3238 = vlaneseq
    %v3239 = vshrl.u32 %v3238, 7
    %v3240 = vsub.s32 %v3237, %v3239
    %v3241 = vrot.slane %v3234, %v3240
    %v3243 = vadd.f32 %v3090, %v3241
    %v3244 = vxor.u32 %v3243, 2147483648
    %v3245 = vmul.f32 %v3244, 1.442695
    %v3246 = vpow.pop %v3245
    %v3247 = vadd.f32 %v3246, 1.0
    %v3248 = vrcp.pop %v3247
    %v3249 = vmul.f32 1.0, %v3248
    %v3250 = vadd.f32 %v3229, %v2691
    %v3251 = vmul.f32 %v3249, %v3250
    %v3253 = vrot.slane %v3090, 4
    %v3255 = vadd.f32 %v3253, %v3251
    %v3256 = vtanh.pop %v3255
    %v3258 = vrot.slane %v3249, 2
    %v3260 = vsub.f32 1.0, %v3258
    %v3261 = vmul.f32 %v3260, %v3256
    %v3262 = vmul.f32 %v3258, %v3089
    %v3263 = vadd.f32 %v3261, %v3262
    %v3264 = vld [vmem:[%s1197] sm:$0x3f]
    %3265 = vmatprep.subr.mxu0 %v2696
    %3266 = vmatpush1.msra.mxu0 %v2695
    %3267 = vmatprep.subr.mxu0 %v2699
    %3268 = vmatpush1.msra.mxu0 %v2698
    %3269 = vmatprep.subr.mxu0 %v2702
    %3270 = vmatpush1.msra.mxu0 %v2701
    %3271 = vmatprep.subr.mxu0 %v2705
    %3272 = vmatpush1.msra.mxu0 %v2704
    %3273 = vmatprep.subr.mxu0 %v2708
    %3274 = vmatpush1.msra.mxu0 %v2707
    %3275 = vmatprep.subr.mxu0 %v2711
    %3276 = vmatpush1.msra.mxu0 %v2710
    %3277 = vmatprep.subr.mxu0 %v2714
    %3278 = vmatpush1.msra.mxu0 %v2713
    %3279 = vmatprep.subr.mxu0 %v2717
    %3280 = vmatpush1.msra.mxu0 %v2716
    %3281 = vmatprep.subr.mxu0 %v2720
    %3282 = vmatpush1.msra.mxu0 %v2719
    %3283 = vmatprep.subr.mxu0 %v2723
    %3284 = vmatpush1.msra.mxu0 %v2722
    %3285 = vmatprep.subr.mxu0 %v2726
    %3286 = vmatpush1.msra.mxu0 %v2725
    %3287 = vmatprep.subr.mxu0 %v2729
    %3288 = vmatpush1.msra.mxu0 %v2728
    %3289 = vmatprep.subr.mxu0 %v2732
    %3290 = vmatpush1.msra.mxu0 %v2731
    %3291 = vmatprep.subr.mxu0 %v2735
    %3292 = vmatpush1.msra.mxu0 %v2734
    %3293 = vmatprep.subr.mxu0 %v2738
    %3294 = vmatpush1.msra.mxu0 %v2737
    %3295 = vmatprep.subr.mxu0 %v2741
    %3296 = vmatpush1.msra.mxu0 %v2740
    %3297 = vmatprep.subr.mxu0 0.0
    %3298 = vmatpush1.msra.mxu0 0.0
    %3299 = vmatprep.subr.mxu0 0.0
    %3300 = vmatpush1.msra.mxu0 0.0
    %3301 = vmatprep.subr.mxu0 0.0
    %3302 = vmatpush1.msra.mxu0 0.0
    %3303 = vmatprep.subr.mxu0 0.0
    %3304 = vmatpush1.msra.mxu0 0.0
    %3305 = vmatprep.subr.mxu0 0.0
    %3306 = vmatpush1.msra.mxu0 0.0
    %3307 = vmatprep.subr.mxu0 0.0
    %3308 = vmatpush1.msra.mxu0 0.0
    %3309 = vmatprep.subr.mxu0 0.0
    %3310 = vmatpush1.msra.mxu0 0.0
    %3311 = vmatprep.subr.mxu0 0.0
    %3312 = vmatpush1.msra.mxu0 0.0
    %3313 = vmatprep.subr.mxu0 0.0
    %3314 = vmatpush1.msra.mxu0 0.0
    %3315 = vmatprep.subr.mxu0 0.0
    %3316 = vmatpush1.msra.mxu0 0.0
    %3317 = vmatprep.subr.mxu0 0.0
    %3318 = vmatpush1.msra.mxu0 0.0
    %3319 = vmatprep.subr.mxu0 0.0
    %3320 = vmatpush1.msra.mxu0 0.0
    %3321 = vmatprep.subr.mxu0 0.0
    %3322 = vmatpush1.msra.mxu0 0.0
    %3323 = vmatprep.subr.mxu0 0.0
    %3324 = vmatpush1.msra.mxu0 0.0
    %3325 = vmatprep.subr.mxu0 0.0
    %3326 = vmatpush1.msra.mxu0 0.0
    %3327 = vmatprep.subr.mxu0 0.0
    %3328 = vmatpush1.msra.mxu0 0.0
    %3329 = vmatprep.mubr.f32.mxu0 0.0
    %3330 = vmatmul.mubr.f32.gmra.mrb[0].mxu0 %v3263
    %v3331 = vpop.f32.mrb[0].mxu0
    %v3332 = vadd.f32 0.0, %v3331
    %v3333 = vpop.f32.mrb[0].mxu0
    %v3334 = vadd.f32 0.0, %v3333
    %3335 = vdwg.mxu0
    %3336 = vmatprep.subr.mxu0 0.0
    %3337 = vmatpush1.msra.mxu0 %v2697
    %3338 = vmatprep.subr.mxu0 0.0
    %3339 = vmatpush1.msra.mxu0 %v2700
    %3340 = vmatprep.subr.mxu0 0.0
    %3341 = vmatpush1.msra.mxu0 %v2703
    %3342 = vmatprep.subr.mxu0 0.0
    %3343 = vmatpush1.msra.mxu0 %v2706
    %3344 = vmatprep.subr.mxu0 0.0
    %3345 = vmatpush1.msra.mxu0 %v2709
    %3346 = vmatprep.subr.mxu0 0.0
    %3347 = vmatpush1.msra.mxu0 %v2712
    %3348 = vmatprep.subr.mxu0 0.0
    %3349 = vmatpush1.msra.mxu0 %v2715
    %3350 = vmatprep.subr.mxu0 0.0
    %3351 = vmatpush1.msra.mxu0 %v2718
    %3352 = vmatprep.subr.mxu0 0.0
    %3353 = vmatpush1.msra.mxu0 %v2721
    %3354 = vmatprep.subr.mxu0 0.0
    %3355 = vmatpush1.msra.mxu0 %v2724
    %3356 = vmatprep.subr.mxu0 0.0
    %3357 = vmatpush1.msra.mxu0 %v2727
    %3358 = vmatprep.subr.mxu0 0.0
    %3359 = vmatpush1.msra.mxu0 %v2730
    %3360 = vmatprep.subr.mxu0 0.0
    %3361 = vmatpush1.msra.mxu0 %v2733
    %3362 = vmatprep.subr.mxu0 0.0
    %3363 = vmatpush1.msra.mxu0 %v2736
    %3364 = vmatprep.subr.mxu0 0.0
    %3365 = vmatpush1.msra.mxu0 %v2739
    %3366 = vmatprep.subr.mxu0 0.0
    %3367 = vmatpush1.msra.mxu0 %v2742
    %3368 = vmatprep.subr.mxu0 0.0
    %3369 = vmatpush1.msra.mxu0 0.0
    %3370 = vmatprep.subr.mxu0 0.0
    %3371 = vmatpush1.msra.mxu0 0.0
    %3372 = vmatprep.subr.mxu0 0.0
    %3373 = vmatpush1.msra.mxu0 0.0
    %3374 = vmatprep.subr.mxu0 0.0
    %3375 = vmatpush1.msra.mxu0 0.0
    %3376 = vmatprep.subr.mxu0 0.0
    %3377 = vmatpush1.msra.mxu0 0.0
    %3378 = vmatprep.subr.mxu0 0.0
    %3379 = vmatpush1.msra.mxu0 0.0
    %3380 = vmatprep.subr.mxu0 0.0
    %3381 = vmatpush1.msra.mxu0 0.0
    %3382 = vmatprep.subr.mxu0 0.0
    %3383 = vmatpush1.msra.mxu0 0.0
    %3384 = vmatprep.subr.mxu0 0.0
    %3385 = vmatpush1.msra.mxu0 0.0
    %3386 = vmatprep.subr.mxu0 0.0
    %3387 = vmatpush1.msra.mxu0 0.0
    %3388 = vmatprep.subr.mxu0 0.0
    %3389 = vmatpush1.msra.mxu0 0.0
    %3390 = vmatprep.subr.mxu0 0.0
    %3391 = vmatpush1.msra.mxu0 0.0
    %3392 = vmatprep.subr.mxu0 0.0
    %3393 = vmatpush1.msra.mxu0 0.0
    %3394 = vmatprep.subr.mxu0 0.0
    %3395 = vmatpush1.msra.mxu0 0.0
    %3396 = vmatprep.subr.mxu0 0.0
    %3397 = vmatpush1.msra.mxu0 0.0
    %3398 = vmatprep.subr.mxu0 0.0
    %3399 = vmatpush1.msra.mxu0 0.0
    %3400 = vmatprep.mubr.f32.mxu0 0.0
    %3401 = vmatmul.mubr.f32.gmra.mrb[0].mxu0 %v3263
    %v3402 = vpop.f32.mrb[0].mxu0
    %v3403 = vadd.f32 0.0, %v3402
    %v3404 = vpop.f32.mrb[0].mxu0
    %3405 = vdwg.mxu0
    %v3408 = vcombine.low %v3332, %v3334
    %v3410 = vunpack.c.l.s4 1983009808
    %v3411 = vunpack.c.0.s8 %v3410
    %v3412 = vlaneseq
    %v3413 = vshrl.u32 %v3412, 7
    %v3414 = vsub.s32 %v3411, %v3413
    %v3415 = vrot.slane %v3408, %v3414
    %v3417 = vadd.f32 %v3264, %v3415
    %v3418 = vxor.u32 %v3417, 2147483648
    %v3419 = vmul.f32 %v3418, 1.442695
    %v3420 = vpow.pop %v3419
    %v3421 = vadd.f32 %v3420, 1.0
    %v3422 = vrcp.pop %v3421
    %v3423 = vmul.f32 1.0, %v3422
    %v3424 = vadd.f32 %v3403, %v2691
    %v3425 = vmul.f32 %v3423, %v3424
    %v3427 = vrot.slane %v3264, 4
    %v3429 = vadd.f32 %v3427, %v3425
    %v3430 = vtanh.pop %v3429
    %v3432 = vrot.slane %v3423, 2
    %v3434 = vsub.f32 1.0, %v3432
    %v3435 = vmul.f32 %v3434, %v3430
    %v3436 = vmul.f32 %v3432, %v3263
    %v3437 = vadd.f32 %v3435, %v3436
    %v3438 = vld [vmem:[%s1422] sm:$0x3f]
    %3439 = vmatprep.subr.mxu0 %v2696
    %3440 = vmatpush1.msra.mxu0 %v2695
    %3441 = vmatprep.subr.mxu0 %v2699
    %3442 = vmatpush1.msra.mxu0 %v2698
    %3443 = vmatprep.subr.mxu0 %v2702
    %3444 = vmatpush1.msra.mxu0 %v2701
    %3445 = vmatprep.subr.mxu0 %v2705
    %3446 = vmatpush1.msra.mxu0 %v2704
    %3447 = vmatprep.subr.mxu0 %v2708
    %3448 = vmatpush1.msra.mxu0 %v2707
    %3449 = vmatprep.subr.mxu0 %v2711
    %3450 = vmatpush1.msra.mxu0 %v2710
    %3451 = vmatprep.subr.mxu0 %v2714
    %3452 = vmatpush1.msra.mxu0 %v2713
    %3453 = vmatprep.subr.mxu0 %v2717
    %3454 = vmatpush1.msra.mxu0 %v2716
    %3455 = vmatprep.subr.mxu0 %v2720
    %3456 = vmatpush1.msra.mxu0 %v2719
    %3457 = vmatprep.subr.mxu0 %v2723
    %3458 = vmatpush1.msra.mxu0 %v2722
    %3459 = vmatprep.subr.mxu0 %v2726
    %3460 = vmatpush1.msra.mxu0 %v2725
    %3461 = vmatprep.subr.mxu0 %v2729
    %3462 = vmatpush1.msra.mxu0 %v2728
    %3463 = vmatprep.subr.mxu0 %v2732
    %3464 = vmatpush1.msra.mxu0 %v2731
    %3465 = vmatprep.subr.mxu0 %v2735
    %3466 = vmatpush1.msra.mxu0 %v2734
    %3467 = vmatprep.subr.mxu0 %v2738
    %3468 = vmatpush1.msra.mxu0 %v2737
    %3469 = vmatprep.subr.mxu0 %v2741
    %3470 = vmatpush1.msra.mxu0 %v2740
    %3471 = vmatprep.subr.mxu0 0.0
    %3472 = vmatpush1.msra.mxu0 0.0
    %3473 = vmatprep.subr.mxu0 0.0
    %3474 = vmatpush1.msra.mxu0 0.0
    %3475 = vmatprep.subr.mxu0 0.0
    %3476 = vmatpush1.msra.mxu0 0.0
    %3477 = vmatprep.subr.mxu0 0.0
    %3478 = vmatpush1.msra.mxu0 0.0
    %3479 = vmatprep.subr.mxu0 0.0
    %3480 = vmatpush1.msra.mxu0 0.0
    %3481 = vmatprep.subr.mxu0 0.0
    %3482 = vmatpush1.msra.mxu0 0.0
    %3483 = vmatprep.subr.mxu0 0.0
    %3484 = vmatpush1.msra.mxu0 0.0
    %3485 = vmatprep.subr.mxu0 0.0
    %3486 = vmatpush1.msra.mxu0 0.0
    %3487 = vmatprep.subr.mxu0 0.0
    %3488 = vmatpush1.msra.mxu0 0.0
    %3489 = vmatprep.subr.mxu0 0.0
    %3490 = vmatpush1.msra.mxu0 0.0
    %3491 = vmatprep.subr.mxu0 0.0
    %3492 = vmatpush1.msra.mxu0 0.0
    %3493 = vmatprep.subr.mxu0 0.0
    %3494 = vmatpush1.msra.mxu0 0.0
    %3495 = vmatprep.subr.mxu0 0.0
    %3496 = vmatpush1.msra.mxu0 0.0
    %3497 = vmatprep.subr.mxu0 0.0
    %3498 = vmatpush1.msra.mxu0 0.0
    %3499 = vmatprep.subr.mxu0 0.0
    %3500 = vmatpush1.msra.mxu0 0.0
    %3501 = vmatprep.subr.mxu0 0.0
    %3502 = vmatpush1.msra.mxu0 0.0
    %3503 = vmatprep.mubr.f32.mxu0 0.0
    %3504 = vmatmul.mubr.f32.gmra.mrb[0].mxu0 %v3437
    %v3505 = vpop.f32.mrb[0].mxu0
    %v3506 = vadd.f32 0.0, %v3505
    %v3507 = vpop.f32.mrb[0].mxu0
    %v3508 = vadd.f32 0.0, %v3507
    %3509 = vdwg.mxu0
    %3510 = vmatprep.subr.mxu0 0.0
    %3511 = vmatpush1.msra.mxu0 %v2697
    %3512 = vmatprep.subr.mxu0 0.0
    %3513 = vmatpush1.msra.mxu0 %v2700
    %3514 = vmatprep.subr.mxu0 0.0
    %3515 = vmatpush1.msra.mxu0 %v2703
    %3516 = vmatprep.subr.mxu0 0.0
    %3517 = vmatpush1.msra.mxu0 %v2706
    %3518 = vmatprep.subr.mxu0 0.0
    %3519 = vmatpush1.msra.mxu0 %v2709
    %3520 = vmatprep.subr.mxu0 0.0
    %3521 = vmatpush1.msra.mxu0 %v2712
    %3522 = vmatprep.subr.mxu0 0.0
    %3523 = vmatpush1.msra.mxu0 %v2715
    %3524 = vmatprep.subr.mxu0 0.0
    %3525 = vmatpush1.msra.mxu0 %v2718
    %3526 = vmatprep.subr.mxu0 0.0
    %3527 = vmatpush1.msra.mxu0 %v2721
    %3528 = vmatprep.subr.mxu0 0.0
    %3529 = vmatpush1.msra.mxu0 %v2724
    %3530 = vmatprep.subr.mxu0 0.0
    %3531 = vmatpush1.msra.mxu0 %v2727
    %3532 = vmatprep.subr.mxu0 0.0
    %3533 = vmatpush1.msra.mxu0 %v2730
    %3534 = vmatprep.subr.mxu0 0.0
    %3535 = vmatpush1.msra.mxu0 %v2733
    %3536 = vmatprep.subr.mxu0 0.0
    %3537 = vmatpush1.msra.mxu0 %v2736
    %3538 = vmatprep.subr.mxu0 0.0
    %3539 = vmatpush1.msra.mxu0 %v2739
    %3540 = vmatprep.subr.mxu0 0.0
    %3541 = vmatpush1.msra.mxu0 %v2742
    %3542 = vmatprep.subr.mxu0 0.0
    %3543 = vmatpush1.msra.mxu0 0.0
    %3544 = vmatprep.subr.mxu0 0.0
    %3545 = vmatpush1.msra.mxu0 0.0
    %3546 = vmatprep.subr.mxu0 0.0
    %3547 = vmatpush1.msra.mxu0 0.0
    %3548 = vmatprep.subr.mxu0 0.0
    %3549 = vmatpush1.msra.mxu0 0.0
    %3550 = vmatprep.subr.mxu0 0.0
    %3551 = vmatpush1.msra.mxu0 0.0
    %3552 = vmatprep.subr.mxu0 0.0
    %3553 = vmatpush1.msra.mxu0 0.0
    %3554 = vmatprep.subr.mxu0 0.0
    %3555 = vmatpush1.msra.mxu0 0.0
    %3556 = vmatprep.subr.mxu0 0.0
    %3557 = vmatpush1.msra.mxu0 0.0
    %3558 = vmatprep.subr.mxu0 0.0
    %3559 = vmatpush1.msra.mxu0 0.0
    %3560 = vmatprep.subr.mxu0 0.0
    %3561 = vmatpush1.msra.mxu0 0.0
    %3562 = vmatprep.subr.mxu0 0.0
    %3563 = vmatpush1.msra.mxu0 0.0
    %3564 = vmatprep.subr.mxu0 0.0
    %3565 = vmatpush1.msra.mxu0 0.0
    %3566 = vmatprep.subr.mxu0 0.0
    %3567 = vmatpush1.msra.mxu0 0.0
    %3568 = vmatprep.subr.mxu0 0.0
    %3569 = vmatpush1.msra.mxu0 0.0
    %3570 = vmatprep.subr.mxu0 0.0
    %3571 = vmatpush1.msra.mxu0 0.0
    %3572 = vmatprep.subr.mxu0 0.0
    %3573 = vmatpush1.msra.mxu0 0.0
    %3574 = vmatprep.mubr.f32.mxu0 0.0
    %3575 = vmatmul.mubr.f32.gmra.mrb[0].mxu0 %v3437
    %v3576 = vpop.f32.mrb[0].mxu0
    %v3577 = vadd.f32 0.0, %v3576
    %v3578 = vpop.f32.mrb[0].mxu0
    %3579 = vdwg.mxu0
    %v3582 = vcombine.low %v3506, %v3508
    %v3584 = vunpack.c.l.s4 1983009808
    %v3585 = vunpack.c.0.s8 %v3584
    %v3586 = vlaneseq
    %v3587 = vshrl.u32 %v3586, 7
    %v3588 = vsub.s32 %v3585, %v3587
    %v3589 = vrot.slane %v3582, %v3588
    %v3591 = vadd.f32 %v3438, %v3589
    %v3592 = vxor.u32 %v3591, 2147483648
    %v3593 = vmul.f32 %v3592, 1.442695
    %v3594 = vpow.pop %v3593
    %v3595 = vadd.f32 %v3594, 1.0
    %v3596 = vrcp.pop %v3595
    %v3597 = vmul.f32 1.0, %v3596
    %v3598 = vadd.f32 %v3577, %v2691
    %v3599 = vmul.f32 %v3597, %v3598
    %v3601 = vrot.slane %v3438, 4
    %v3603 = vadd.f32 %v3601, %v3599
    %v3604 = vtanh.pop %v3603
    %v3606 = vrot.slane %v3597, 2
    %v3608 = vsub.f32 1.0, %v3606
    %v3609 = vmul.f32 %v3608, %v3604
    %v3610 = vmul.f32 %v3606, %v3437
    %v3611 = vadd.f32 %v3609, %v3610
    %v3612 = vld [vmem:[%s1647] sm:$0x3f]
    %3613 = vmatprep.subr.mxu0 %v2696
    %3614 = vmatpush1.msra.mxu0 %v2695
    %3615 = vmatprep.subr.mxu0 %v2699
    %3616 = vmatpush1.msra.mxu0 %v2698
    %3617 = vmatprep.subr.mxu0 %v2702
    %3618 = vmatpush1.msra.mxu0 %v2701
    %3619 = vmatprep.subr.mxu0 %v2705
    %3620 = vmatpush1.msra.mxu0 %v2704
    %3621 = vmatprep.subr.mxu0 %v2708
    %3622 = vmatpush1.msra.mxu0 %v2707
    %3623 = vmatprep.subr.mxu0 %v2711
    %3624 = vmatpush1.msra.mxu0 %v2710
    %3625 = vmatprep.subr.mxu0 %v2714
    %3626 = vmatpush1.msra.mxu0 %v2713
    %3627 = vmatprep.subr.mxu0 %v2717
    %3628 = vmatpush1.msra.mxu0 %v2716
    %3629 = vmatprep.subr.mxu0 %v2720
    %3630 = vmatpush1.msra.mxu0 %v2719
    %3631 = vmatprep.subr.mxu0 %v2723
    %3632 = vmatpush1.msra.mxu0 %v2722
    %3633 = vmatprep.subr.mxu0 %v2726
    %3634 = vmatpush1.msra.mxu0 %v2725
    %3635 = vmatprep.subr.mxu0 %v2729
    %3636 = vmatpush1.msra.mxu0 %v2728
    %3637 = vmatprep.subr.mxu0 %v2732
    %3638 = vmatpush1.msra.mxu0 %v2731
    %3639 = vmatprep.subr.mxu0 %v2735
    %3640 = vmatpush1.msra.mxu0 %v2734
    %3641 = vmatprep.subr.mxu0 %v2738
    %3642 = vmatpush1.msra.mxu0 %v2737
    %3643 = vmatprep.subr.mxu0 %v2741
    %3644 = vmatpush1.msra.mxu0 %v2740
    %3645 = vmatprep.subr.mxu0 0.0
    %3646 = vmatpush1.msra.mxu0 0.0
    %3647 = vmatprep.subr.mxu0 0.0
    %3648 = vmatpush1.msra.mxu0 0.0
    %3649 = vmatprep.subr.mxu0 0.0
    %3650 = vmatpush1.msra.mxu0 0.0
    %3651 = vmatprep.subr.mxu0 0.0
    %3652 = vmatpush1.msra.mxu0 0.0
    %3653 = vmatprep.subr.mxu0 0.0
    %3654 = vmatpush1.msra.mxu0 0.0
    %3655 = vmatprep.subr.mxu0 0.0
    %3656 = vmatpush1.msra.mxu0 0.0
    %3657 = vmatprep.subr.mxu0 0.0
    %3658 = vmatpush1.msra.mxu0 0.0
    %3659 = vmatprep.subr.mxu0 0.0
    %3660 = vmatpush1.msra.mxu0 0.0
    %3661 = vmatprep.subr.mxu0 0.0
    %3662 = vmatpush1.msra.mxu0 0.0
    %3663 = vmatprep.subr.mxu0 0.0
    %3664 = vmatpush1.msra.mxu0 0.0
    %3665 = vmatprep.subr.mxu0 0.0
    %3666 = vmatpush1.msra.mxu0 0.0
    %3667 = vmatprep.subr.mxu0 0.0
    %3668 = vmatpush1.msra.mxu0 0.0
    %3669 = vmatprep.subr.mxu0 0.0
    %3670 = vmatpush1.msra.mxu0 0.0
    %3671 = vmatprep.subr.mxu0 0.0
    %3672 = vmatpush1.msra.mxu0 0.0
    %3673 = vmatprep.subr.mxu0 0.0
    %3674 = vmatpush1.msra.mxu0 0.0
    %3675 = vmatprep.subr.mxu0 0.0
    %3676 = vmatpush1.msra.mxu0 0.0
    %3677 = vmatprep.mubr.f32.mxu0 0.0
    %3678 = vmatmul.mubr.f32.gmra.mrb[0].mxu0 %v3611
    %v3679 = vpop.f32.mrb[0].mxu0
    %v3680 = vadd.f32 0.0, %v3679
    %v3681 = vpop.f32.mrb[0].mxu0
    %v3682 = vadd.f32 0.0, %v3681
    %3683 = vdwg.mxu0
    %3684 = vmatprep.subr.mxu0 0.0
    %3685 = vmatpush1.msra.mxu0 %v2697
    %3686 = vmatprep.subr.mxu0 0.0
    %3687 = vmatpush1.msra.mxu0 %v2700
    %3688 = vmatprep.subr.mxu0 0.0
    %3689 = vmatpush1.msra.mxu0 %v2703
    %3690 = vmatprep.subr.mxu0 0.0
    %3691 = vmatpush1.msra.mxu0 %v2706
    %3692 = vmatprep.subr.mxu0 0.0
    %3693 = vmatpush1.msra.mxu0 %v2709
    %3694 = vmatprep.subr.mxu0 0.0
    %3695 = vmatpush1.msra.mxu0 %v2712
    %3696 = vmatprep.subr.mxu0 0.0
    %3697 = vmatpush1.msra.mxu0 %v2715
    %3698 = vmatprep.subr.mxu0 0.0
    %3699 = vmatpush1.msra.mxu0 %v2718
    %3700 = vmatprep.subr.mxu0 0.0
    %3701 = vmatpush1.msra.mxu0 %v2721
    %3702 = vmatprep.subr.mxu0 0.0
    %3703 = vmatpush1.msra.mxu0 %v2724
    %3704 = vmatprep.subr.mxu0 0.0
    %3705 = vmatpush1.msra.mxu0 %v2727
    %3706 = vmatprep.subr.mxu0 0.0
    %3707 = vmatpush1.msra.mxu0 %v2730
    %3708 = vmatprep.subr.mxu0 0.0
    %3709 = vmatpush1.msra.mxu0 %v2733
    %3710 = vmatprep.subr.mxu0 0.0
    %3711 = vmatpush1.msra.mxu0 %v2736
    %3712 = vmatprep.subr.mxu0 0.0
    %3713 = vmatpush1.msra.mxu0 %v2739
    %3714 = vmatprep.subr.mxu0 0.0
    %3715 = vmatpush1.msra.mxu0 %v2742
    %3716 = vmatprep.subr.mxu0 0.0
    %3717 = vmatpush1.msra.mxu0 0.0
    %3718 = vmatprep.subr.mxu0 0.0
    %3719 = vmatpush1.msra.mxu0 0.0
    %3720 = vmatprep.subr.mxu0 0.0
    %3721 = vmatpush1.msra.mxu0 0.0
    %3722 = vmatprep.subr.mxu0 0.0
    %3723 = vmatpush1.msra.mxu0 0.0
    %3724 = vmatprep.subr.mxu0 0.0
    %3725 = vmatpush1.msra.mxu0 0.0
    %3726 = vmatprep.subr.mxu0 0.0
    %3727 = vmatpush1.msra.mxu0 0.0
    %3728 = vmatprep.subr.mxu0 0.0
    %3729 = vmatpush1.msra.mxu0 0.0
    %3730 = vmatprep.subr.mxu0 0.0
    %3731 = vmatpush1.msra.mxu0 0.0
    %3732 = vmatprep.subr.mxu0 0.0
    %3733 = vmatpush1.msra.mxu0 0.0
    %3734 = vmatprep.subr.mxu0 0.0
    %3735 = vmatpush1.msra.mxu0 0.0
    %3736 = vmatprep.subr.mxu0 0.0
    %3737 = vmatpush1.msra.mxu0 0.0
    %3738 = vmatprep.subr.mxu0 0.0
    %3739 = vmatpush1.msra.mxu0 0.0
    %3740 = vmatprep.subr.mxu0 0.0
    %3741 = vmatpush1.msra.mxu0 0.0
    %3742 = vmatprep.subr.mxu0 0.0
    %3743 = vmatpush1.msra.mxu0 0.0
    %3744 = vmatprep.subr.mxu0 0.0
    %3745 = vmatpush1.msra.mxu0 0.0
    %3746 = vmatprep.subr.mxu0 0.0
    %3747 = vmatpush1.msra.mxu0 0.0
    %3748 = vmatprep.mubr.f32.mxu0 0.0
    %3749 = vmatmul.mubr.f32.gmra.mrb[0].mxu0 %v3611
    %v3750 = vpop.f32.mrb[0].mxu0
    %v3751 = vadd.f32 0.0, %v3750
    %v3752 = vpop.f32.mrb[0].mxu0
    %3753 = vdwg.mxu0
    %v3756 = vcombine.low %v3680, %v3682
    %v3758 = vunpack.c.l.s4 1983009808
    %v3759 = vunpack.c.0.s8 %v3758
    %v3760 = vlaneseq
    %v3761 = vshrl.u32 %v3760, 7
    %v3762 = vsub.s32 %v3759, %v3761
    %v3763 = vrot.slane %v3756, %v3762
    %v3765 = vadd.f32 %v3612, %v3763
    %v3766 = vxor.u32 %v3765, 2147483648
    %v3767 = vmul.f32 %v3766, 1.442695
    %v3768 = vpow.pop %v3767
    %v3769 = vadd.f32 %v3768, 1.0
    %v3770 = vrcp.pop %v3769
    %v3771 = vmul.f32 1.0, %v3770
    %v3772 = vadd.f32 %v3751, %v2691
    %v3773 = vmul.f32 %v3771, %v3772
    %v3775 = vrot.slane %v3612, 4
    %v3777 = vadd.f32 %v3775, %v3773
    %v3778 = vtanh.pop %v3777
    %v3780 = vrot.slane %v3771, 2
    %v3782 = vsub.f32 1.0, %v3780
    %v3783 = vmul.f32 %v3782, %v3778
    %v3784 = vmul.f32 %v3780, %v3611
    %v3785 = vadd.f32 %v3783, %v3784
    %v3786 = vld [vmem:[%s1872] sm:$0x3f]
    %3787 = vmatprep.subr.mxu0 %v2696
    %3788 = vmatpush1.msra.mxu0 %v2695
    %3789 = vmatprep.subr.mxu0 %v2699
    %3790 = vmatpush1.msra.mxu0 %v2698
    %3791 = vmatprep.subr.mxu0 %v2702
    %3792 = vmatpush1.msra.mxu0 %v2701
    %3793 = vmatprep.subr.mxu0 %v2705
    %3794 = vmatpush1.msra.mxu0 %v2704
    %3795 = vmatprep.subr.mxu0 %v2708
    %3796 = vmatpush1.msra.mxu0 %v2707
    %3797 = vmatprep.subr.mxu0 %v2711
    %3798 = vmatpush1.msra.mxu0 %v2710
    %3799 = vmatprep.subr.mxu0 %v2714
    %3800 = vmatpush1.msra.mxu0 %v2713
    %3801 = vmatprep.subr.mxu0 %v2717
    %3802 = vmatpush1.msra.mxu0 %v2716
    %3803 = vmatprep.subr.mxu0 %v2720
    %3804 = vmatpush1.msra.mxu0 %v2719
    %3805 = vmatprep.subr.mxu0 %v2723
    %3806 = vmatpush1.msra.mxu0 %v2722
    %3807 = vmatprep.subr.mxu0 %v2726
    %3808 = vmatpush1.msra.mxu0 %v2725
    %3809 = vmatprep.subr.mxu0 %v2729
    %3810 = vmatpush1.msra.mxu0 %v2728
    %3811 = vmatprep.subr.mxu0 %v2732
    %3812 = vmatpush1.msra.mxu0 %v2731
    %3813 = vmatprep.subr.mxu0 %v2735
    %3814 = vmatpush1.msra.mxu0 %v2734
    %3815 = vmatprep.subr.mxu0 %v2738
    %3816 = vmatpush1.msra.mxu0 %v2737
    %3817 = vmatprep.subr.mxu0 %v2741
    %3818 = vmatpush1.msra.mxu0 %v2740
    %3819 = vmatprep.subr.mxu0 0.0
    %3820 = vmatpush1.msra.mxu0 0.0
    %3821 = vmatprep.subr.mxu0 0.0
    %3822 = vmatpush1.msra.mxu0 0.0
    %3823 = vmatprep.subr.mxu0 0.0
    %3824 = vmatpush1.msra.mxu0 0.0
    %3825 = vmatprep.subr.mxu0 0.0
    %3826 = vmatpush1.msra.mxu0 0.0
    %3827 = vmatprep.subr.mxu0 0.0
    %3828 = vmatpush1.msra.mxu0 0.0
    %3829 = vmatprep.subr.mxu0 0.0
    %3830 = vmatpush1.msra.mxu0 0.0
    %3831 = vmatprep.subr.mxu0 0.0
    %3832 = vmatpush1.msra.mxu0 0.0
    %3833 = vmatprep.subr.mxu0 0.0
    %3834 = vmatpush1.msra.mxu0 0.0
    %3835 = vmatprep.subr.mxu0 0.0
    %3836 = vmatpush1.msra.mxu0 0.0
    %3837 = vmatprep.subr.mxu0 0.0
    %3838 = vmatpush1.msra.mxu0 0.0
    %3839 = vmatprep.subr.mxu0 0.0
    %3840 = vmatpush1.msra.mxu0 0.0
    %3841 = vmatprep.subr.mxu0 0.0
    %3842 = vmatpush1.msra.mxu0 0.0
    %3843 = vmatprep.subr.mxu0 0.0
    %3844 = vmatpush1.msra.mxu0 0.0
    %3845 = vmatprep.subr.mxu0 0.0
    %3846 = vmatpush1.msra.mxu0 0.0
    %3847 = vmatprep.subr.mxu0 0.0
    %3848 = vmatpush1.msra.mxu0 0.0
    %3849 = vmatprep.subr.mxu0 0.0
    %3850 = vmatpush1.msra.mxu0 0.0
    %3851 = vmatprep.mubr.f32.mxu0 0.0
    %3852 = vmatmul.mubr.f32.gmra.mrb[0].mxu0 %v3785
    %v3853 = vpop.f32.mrb[0].mxu0
    %v3854 = vadd.f32 0.0, %v3853
    %v3855 = vpop.f32.mrb[0].mxu0
    %v3856 = vadd.f32 0.0, %v3855
    %3857 = vdwg.mxu0
    %3858 = vmatprep.subr.mxu0 0.0
    %3859 = vmatpush1.msra.mxu0 %v2697
    %3860 = vmatprep.subr.mxu0 0.0
    %3861 = vmatpush1.msra.mxu0 %v2700
    %3862 = vmatprep.subr.mxu0 0.0
    %3863 = vmatpush1.msra.mxu0 %v2703
    %3864 = vmatprep.subr.mxu0 0.0
    %3865 = vmatpush1.msra.mxu0 %v2706
    %3866 = vmatprep.subr.mxu0 0.0
    %3867 = vmatpush1.msra.mxu0 %v2709
    %3868 = vmatprep.subr.mxu0 0.0
    %3869 = vmatpush1.msra.mxu0 %v2712
    %3870 = vmatprep.subr.mxu0 0.0
    %3871 = vmatpush1.msra.mxu0 %v2715
    %3872 = vmatprep.subr.mxu0 0.0
    %3873 = vmatpush1.msra.mxu0 %v2718
    %3874 = vmatprep.subr.mxu0 0.0
    %3875 = vmatpush1.msra.mxu0 %v2721
    %3876 = vmatprep.subr.mxu0 0.0
    %3877 = vmatpush1.msra.mxu0 %v2724
    %3878 = vmatprep.subr.mxu0 0.0
    %3879 = vmatpush1.msra.mxu0 %v2727
    %3880 = vmatprep.subr.mxu0 0.0
    %3881 = vmatpush1.msra.mxu0 %v2730
    %3882 = vmatprep.subr.mxu0 0.0
    %3883 = vmatpush1.msra.mxu0 %v2733
    %3884 = vmatprep.subr.mxu0 0.0
    %3885 = vmatpush1.msra.mxu0 %v2736
    %3886 = vmatprep.subr.mxu0 0.0
    %3887 = vmatpush1.msra.mxu0 %v2739
    %3888 = vmatprep.subr.mxu0 0.0
    %3889 = vmatpush1.msra.mxu0 %v2742
    %3890 = vmatprep.subr.mxu0 0.0
    %3891 = vmatpush1.msra.mxu0 0.0
    %3892 = vmatprep.subr.mxu0 0.0
    %3893 = vmatpush1.msra.mxu0 0.0
    %3894 = vmatprep.subr.mxu0 0.0
    %3895 = vmatpush1.msra.mxu0 0.0
    %3896 = vmatprep.subr.mxu0 0.0
    %3897 = vmatpush1.msra.mxu0 0.0
    %3898 = vmatprep.subr.mxu0 0.0
    %3899 = vmatpush1.msra.mxu0 0.0
    %3900 = vmatprep.subr.mxu0 0.0
    %3901 = vmatpush1.msra.mxu0 0.0
    %3902 = vmatprep.subr.mxu0 0.0
    %3903 = vmatpush1.msra.mxu0 0.0
    %3904 = vmatprep.subr.mxu0 0.0
    %3905 = vmatpush1.msra.mxu0 0.0
    %3906 = vmatprep.subr.mxu0 0.0
    %3907 = vmatpush1.msra.mxu0 0.0
    %3908 = vmatprep.subr.mxu0 0.0
    %3909 = vmatpush1.msra.mxu0 0.0
    %3910 = vmatprep.subr.mxu0 0.0
    %3911 = vmatpush1.msra.mxu0 0.0
    %3912 = vmatprep.subr.mxu0 0.0
    %3913 = vmatpush1.msra.mxu0 0.0
    %3914 = vmatprep.subr.mxu0 0.0
    %3915 = vmatpush1.msra.mxu0 0.0
    %3916 = vmatprep.subr.mxu0 0.0
    %3917 = vmatpush1.msra.mxu0 0.0
    %3918 = vmatprep.subr.mxu0 0.0
    %3919 = vmatpush1.msra.mxu0 0.0
    %3920 = vmatprep.subr.mxu0 0.0
    %3921 = vmatpush1.msra.mxu0 0.0
    %3922 = vmatprep.mubr.f32.mxu0 0.0
    %3923 = vmatmul.mubr.f32.gmra.mrb[0].mxu0 %v3785
    %v3924 = vpop.f32.mrb[0].mxu0
    %v3925 = vadd.f32 0.0, %v3924
    %v3926 = vpop.f32.mrb[0].mxu0
    %3927 = vdwg.mxu0
    %v3930 = vcombine.low %v3854, %v3856
    %v3932 = vunpack.c.l.s4 1983009808
    %v3933 = vunpack.c.0.s8 %v3932
    %v3934 = vlaneseq
    %v3935 = vshrl.u32 %v3934, 7
    %v3936 = vsub.s32 %v3933, %v3935
    %v3937 = vrot.slane %v3930, %v3936
    %v3939 = vadd.f32 %v3786, %v3937
    %v3940 = vxor.u32 %v3939, 2147483648
    %v3941 = vmul.f32 %v3940, 1.442695
    %v3942 = vpow.pop %v3941
    %v3943 = vadd.f32 %v3942, 1.0
    %v3944 = vrcp.pop %v3943
    %v3945 = vmul.f32 1.0, %v3944
    %v3946 = vadd.f32 %v3925, %v2691
    %v3947 = vmul.f32 %v3945, %v3946
    %v3949 = vrot.slane %v3786, 4
    %v3951 = vadd.f32 %v3949, %v3947
    %v3952 = vtanh.pop %v3951
    %v3954 = vrot.slane %v3945, 2
    %v3956 = vsub.f32 1.0, %v3954
    %v3957 = vmul.f32 %v3956, %v3952
    %v3958 = vmul.f32 %v3954, %v3785
    %v3959 = vadd.f32 %v3957, %v3958
    %v3960 = vld [vmem:[%s2097] sm:$0x3f]
    %3961 = vmatprep.subr.mxu0 %v2696
    %3962 = vmatpush1.msra.mxu0 %v2695
    %3963 = vmatprep.subr.mxu0 %v2699
    %3964 = vmatpush1.msra.mxu0 %v2698
    %3965 = vmatprep.subr.mxu0 %v2702
    %3966 = vmatpush1.msra.mxu0 %v2701
    %3967 = vmatprep.subr.mxu0 %v2705
    %3968 = vmatpush1.msra.mxu0 %v2704
    %3969 = vmatprep.subr.mxu0 %v2708
    %3970 = vmatpush1.msra.mxu0 %v2707
    %3971 = vmatprep.subr.mxu0 %v2711
    %3972 = vmatpush1.msra.mxu0 %v2710
    %3973 = vmatprep.subr.mxu0 %v2714
    %3974 = vmatpush1.msra.mxu0 %v2713
    %3975 = vmatprep.subr.mxu0 %v2717
    %3976 = vmatpush1.msra.mxu0 %v2716
    %3977 = vmatprep.subr.mxu0 %v2720
    %3978 = vmatpush1.msra.mxu0 %v2719
    %3979 = vmatprep.subr.mxu0 %v2723
    %3980 = vmatpush1.msra.mxu0 %v2722
    %3981 = vmatprep.subr.mxu0 %v2726
    %3982 = vmatpush1.msra.mxu0 %v2725
    %3983 = vmatprep.subr.mxu0 %v2729
    %3984 = vmatpush1.msra.mxu0 %v2728
    %3985 = vmatprep.subr.mxu0 %v2732
    %3986 = vmatpush1.msra.mxu0 %v2731
    %3987 = vmatprep.subr.mxu0 %v2735
    %3988 = vmatpush1.msra.mxu0 %v2734
    %3989 = vmatprep.subr.mxu0 %v2738
    %3990 = vmatpush1.msra.mxu0 %v2737
    %3991 = vmatprep.subr.mxu0 %v2741
    %3992 = vmatpush1.msra.mxu0 %v2740
    %3993 = vmatprep.subr.mxu0 0.0
    %3994 = vmatpush1.msra.mxu0 0.0
    %3995 = vmatprep.subr.mxu0 0.0
    %3996 = vmatpush1.msra.mxu0 0.0
    %3997 = vmatprep.subr.mxu0 0.0
    %3998 = vmatpush1.msra.mxu0 0.0
    %3999 = vmatprep.subr.mxu0 0.0
    %4000 = vmatpush1.msra.mxu0 0.0
    %4001 = vmatprep.subr.mxu0 0.0
    %4002 = vmatpush1.msra.mxu0 0.0
    %4003 = vmatprep.subr.mxu0 0.0
    %4004 = vmatpush1.msra.mxu0 0.0
    %4005 = vmatprep.subr.mxu0 0.0
    %4006 = vmatpush1.msra.mxu0 0.0
    %4007 = vmatprep.subr.mxu0 0.0
    %4008 = vmatpush1.msra.mxu0 0.0
    %4009 = vmatprep.subr.mxu0 0.0
    %4010 = vmatpush1.msra.mxu0 0.0
    %4011 = vmatprep.subr.mxu0 0.0
    %4012 = vmatpush1.msra.mxu0 0.0
    %4013 = vmatprep.subr.mxu0 0.0
    %4014 = vmatpush1.msra.mxu0 0.0
    %4015 = vmatprep.subr.mxu0 0.0
    %4016 = vmatpush1.msra.mxu0 0.0
    %4017 = vmatprep.subr.mxu0 0.0
    %4018 = vmatpush1.msra.mxu0 0.0
    %4019 = vmatprep.subr.mxu0 0.0
    %4020 = vmatpush1.msra.mxu0 0.0
    %4021 = vmatprep.subr.mxu0 0.0
    %4022 = vmatpush1.msra.mxu0 0.0
    %4023 = vmatprep.subr.mxu0 0.0
    %4024 = vmatpush1.msra.mxu0 0.0
    %4025 = vmatprep.mubr.f32.mxu0 0.0
    %4026 = vmatmul.mubr.f32.gmra.mrb[0].mxu0 %v3959
    %v4027 = vpop.f32.mrb[0].mxu0
    %v4028 = vadd.f32 0.0, %v4027
    %v4029 = vpop.f32.mrb[0].mxu0
    %v4030 = vadd.f32 0.0, %v4029
    %4031 = vdwg.mxu0
    %4032 = vmatprep.subr.mxu0 0.0
    %4033 = vmatpush1.msra.mxu0 %v2697
    %4034 = vmatprep.subr.mxu0 0.0
    %4035 = vmatpush1.msra.mxu0 %v2700
    %4036 = vmatprep.subr.mxu0 0.0
    %4037 = vmatpush1.msra.mxu0 %v2703
    %4038 = vmatprep.subr.mxu0 0.0
    %4039 = vmatpush1.msra.mxu0 %v2706
    %4040 = vmatprep.subr.mxu0 0.0
    %4041 = vmatpush1.msra.mxu0 %v2709
    %4042 = vmatprep.subr.mxu0 0.0
    %4043 = vmatpush1.msra.mxu0 %v2712
    %4044 = vmatprep.subr.mxu0 0.0
    %4045 = vmatpush1.msra.mxu0 %v2715
    %4046 = vmatprep.subr.mxu0 0.0
    %4047 = vmatpush1.msra.mxu0 %v2718
    %4048 = vmatprep.subr.mxu0 0.0
    %4049 = vmatpush1.msra.mxu0 %v2721
    %4050 = vmatprep.subr.mxu0 0.0
    %4051 = vmatpush1.msra.mxu0 %v2724
    %4052 = vmatprep.subr.mxu0 0.0
    %4053 = vmatpush1.msra.mxu0 %v2727
    %4054 = vmatprep.subr.mxu0 0.0
    %4055 = vmatpush1.msra.mxu0 %v2730
    %4056 = vmatprep.subr.mxu0 0.0
    %4057 = vmatpush1.msra.mxu0 %v2733
    %4058 = vmatprep.subr.mxu0 0.0
    %4059 = vmatpush1.msra.mxu0 %v2736
    %4060 = vmatprep.subr.mxu0 0.0
    %4061 = vmatpush1.msra.mxu0 %v2739
    %4062 = vmatprep.subr.mxu0 0.0
    %4063 = vmatpush1.msra.mxu0 %v2742
    %4064 = vmatprep.subr.mxu0 0.0
    %4065 = vmatpush1.msra.mxu0 0.0
    %4066 = vmatprep.subr.mxu0 0.0
    %4067 = vmatpush1.msra.mxu0 0.0
    %4068 = vmatprep.subr.mxu0 0.0
    %4069 = vmatpush1.msra.mxu0 0.0
    %4070 = vmatprep.subr.mxu0 0.0
    %4071 = vmatpush1.msra.mxu0 0.0
    %4072 = vmatprep.subr.mxu0 0.0
    %4073 = vmatpush1.msra.mxu0 0.0
    %4074 = vmatprep.subr.mxu0 0.0
    %4075 = vmatpush1.msra.mxu0 0.0
    %4076 = vmatprep.subr.mxu0 0.0
    %4077 = vmatpush1.msra.mxu0 0.0
    %4078 = vmatprep.subr.mxu0 0.0
    %4079 = vmatpush1.msra.mxu0 0.0
    %4080 = vmatprep.subr.mxu0 0.0
    %4081 = vmatpush1.msra.mxu0 0.0
    %4082 = vmatprep.subr.mxu0 0.0
    %4083 = vmatpush1.msra.mxu0 0.0
    %4084 = vmatprep.subr.mxu0 0.0
    %4085 = vmatpush1.msra.mxu0 0.0
    %4086 = vmatprep.subr.mxu0 0.0
    %4087 = vmatpush1.msra.mxu0 0.0
    %4088 = vmatprep.subr.mxu0 0.0
    %4089 = vmatpush1.msra.mxu0 0.0
    %4090 = vmatprep.subr.mxu0 0.0
    %4091 = vmatpush1.msra.mxu0 0.0
    %4092 = vmatprep.subr.mxu0 0.0
    %4093 = vmatpush1.msra.mxu0 0.0
    %4094 = vmatprep.subr.mxu0 0.0
    %4095 = vmatpush1.msra.mxu0 0.0
    %4096 = vmatprep.mubr.f32.mxu0 0.0
    %4097 = vmatmul.mubr.f32.gmra.mrb[0].mxu0 %v3959
    %v4098 = vpop.f32.mrb[0].mxu0
    %v4099 = vadd.f32 0.0, %v4098
    %v4100 = vpop.f32.mrb[0].mxu0
    %4101 = vdwg.mxu0
    %v4104 = vcombine.low %v4028, %v4030
    %v4106 = vunpack.c.l.s4 1983009808
    %v4107 = vunpack.c.0.s8 %v4106
    %v4108 = vlaneseq
    %v4109 = vshrl.u32 %v4108, 7
    %v4110 = vsub.s32 %v4107, %v4109
    %v4111 = vrot.slane %v4104, %v4110
    %v4113 = vadd.f32 %v3960, %v4111
    %v4114 = vxor.u32 %v4113, 2147483648
    %v4115 = vmul.f32 %v4114, 1.442695
    %v4116 = vpow.pop %v4115
    %v4117 = vadd.f32 %v4116, 1.0
    %v4118 = vrcp.pop %v4117
    %v4119 = vmul.f32 1.0, %v4118
    %v4120 = vadd.f32 %v4099, %v2691
    %v4121 = vmul.f32 %v4119, %v4120
    %v4123 = vrot.slane %v3960, 4
    %v4125 = vadd.f32 %v4123, %v4121
    %v4126 = vtanh.pop %v4125
    %v4128 = vrot.slane %v4119, 2
    %v4130 = vsub.f32 1.0, %v4128
    %v4131 = vmul.f32 %v4130, %v4126
    %v4132 = vmul.f32 %v4128, %v3959
    %v4133 = vadd.f32 %v4131, %v4132
    %v4134 = vld [vmem:[%s7] sm:$0xff]
    %v4135 = vld [vmem:[%s7 + $0x8] sm:$0xff]
    %v4136 = vld [vmem:[%s7 + $0x10] sm:$0xff]
    %v4137 = vld [vmem:[%s7 + $0x18] sm:$0xff]
    %v4138 = vld [vmem:[%s7 + $0x20] sm:$0xff]
    %v4139 = vld [vmem:[%s7 + $0x28] sm:$0xff]
    %v4140 = vld [vmem:[%s7 + $0x30] sm:$0xff]
    %v4141 = vld [vmem:[%s7 + $0x38] sm:$0xff]
    %v4142 = vld [vmem:[%s7 + $0x40] sm:$0xff]
    %v4143 = vld [vmem:[%s7 + $0x48] sm:$0xff]
    %v4144 = vld [vmem:[%s7 + $0x50] sm:$0xff]
    %v4145 = vld [vmem:[%s7 + $0x58] sm:$0xff]
    %v4146 = vld [vmem:[%s7 + $0x60] sm:$0xff]
    %v4147 = vld [vmem:[%s7 + $0x68] sm:$0xff]
    %v4148 = vld [vmem:[%s7 + $0x70] sm:$0xff]
    %v4149 = vld [vmem:[%s7 + $0x78] sm:$0xff]
    %v4150 = vld [vmem:[#allocation4] sm:$0x1]
    %v4152 = vlaneseq
    %v4153 = vshrl.u32 %v4152, 7
    %v4154 = vsub.s32 0, %v4153
    %v4155 = vrot.slane %v4150, %v4154
    %4157 = vmatprep.subr.mxu0 0.0
    %4158 = vmatpush1.msra.mxu0 %v4134
    %4159 = vmatprep.subr.mxu0 0.0
    %4160 = vmatpush1.msra.mxu0 %v4135
    %4161 = vmatprep.subr.mxu0 0.0
    %4162 = vmatpush1.msra.mxu0 %v4136
    %4163 = vmatprep.subr.mxu0 0.0
    %4164 = vmatpush1.msra.mxu0 %v4137
    %4165 = vmatprep.subr.mxu0 0.0
    %4166 = vmatpush1.msra.mxu0 %v4138
    %4167 = vmatprep.subr.mxu0 0.0
    %4168 = vmatpush1.msra.mxu0 %v4139
    %4169 = vmatprep.subr.mxu0 0.0
    %4170 = vmatpush1.msra.mxu0 %v4140
    %4171 = vmatprep.subr.mxu0 0.0
    %4172 = vmatpush1.msra.mxu0 %v4141
    %4173 = vmatprep.subr.mxu0 0.0
    %4174 = vmatpush1.msra.mxu0 %v4142
    %4175 = vmatprep.subr.mxu0 0.0
    %4176 = vmatpush1.msra.mxu0 %v4143
    %4177 = vmatprep.subr.mxu0 0.0
    %4178 = vmatpush1.msra.mxu0 %v4144
    %4179 = vmatprep.subr.mxu0 0.0
    %4180 = vmatpush1.msra.mxu0 %v4145
    %4181 = vmatprep.subr.mxu0 0.0
    %4182 = vmatpush1.msra.mxu0 %v4146
    %4183 = vmatprep.subr.mxu0 0.0
    %4184 = vmatpush1.msra.mxu0 %v4147
    %4185 = vmatprep.subr.mxu0 0.0
    %4186 = vmatpush1.msra.mxu0 %v4148
    %4187 = vmatprep.subr.mxu0 0.0
    %4188 = vmatpush1.msra.mxu0 %v4149
    %4189 = vmatprep.subr.mxu0 0.0
    %4190 = vmatpush1.msra.mxu0 0.0
    %4191 = vmatprep.subr.mxu0 0.0
    %4192 = vmatpush1.msra.mxu0 0.0
    %4193 = vmatprep.subr.mxu0 0.0
    %4194 = vmatpush1.msra.mxu0 0.0
    %4195 = vmatprep.subr.mxu0 0.0
    %4196 = vmatpush1.msra.mxu0 0.0
    %4197 = vmatprep.subr.mxu0 0.0
    %4198 = vmatpush1.msra.mxu0 0.0
    %4199 = vmatprep.subr.mxu0 0.0
    %4200 = vmatpush1.msra.mxu0 0.0
    %4201 = vmatprep.subr.mxu0 0.0
    %4202 = vmatpush1.msra.mxu0 0.0
    %4203 = vmatprep.subr.mxu0 0.0
    %4204 = vmatpush1.msra.mxu0 0.0
    %4205 = vmatprep.subr.mxu0 0.0
    %4206 = vmatpush1.msra.mxu0 0.0
    %4207 = vmatprep.subr.mxu0 0.0
    %4208 = vmatpush1.msra.mxu0 0.0
    %4209 = vmatprep.subr.mxu0 0.0
    %4210 = vmatpush1.msra.mxu0 0.0
    %4211 = vmatprep.subr.mxu0 0.0
    %4212 = vmatpush1.msra.mxu0 0.0
    %4213 = vmatprep.subr.mxu0 0.0
    %4214 = vmatpush1.msra.mxu0 0.0
    %4215 = vmatprep.subr.mxu0 0.0
    %4216 = vmatpush1.msra.mxu0 0.0
    %4217 = vmatprep.subr.mxu0 0.0
    %4218 = vmatpush1.msra.mxu0 0.0
    %4219 = vmatprep.subr.mxu0 0.0
    %4220 = vmatpush1.msra.mxu0 0.0
    %4221 = vmatprep.mubr.f32.mxu0 0.0
    %4222 = vmatmul.mubr.f32.gmra.mrb[0].mxu0 %v4133
    %v4223 = vpop.f32.mrb[0].mxu0
    %v4224 = vadd.f32 %v4155, %v4223
    %v4225 = vpop.f32.mrb[0].mxu0
    %4226 = vdwg.mxu0
    %v4227 = vxor.u32 %v4224, 2147483648
    %v4228 = vmul.f32 %v4227, 1.442695
    %v4229 = vpow.pop %v4228
    %v4230 = vadd.f32 %v4229, 1.0
    %v4231 = vrcp.pop %v4230
    %v4232 = vmul.f32 1.0, %v4231
    %vm4233 = vcmask 1024
    %4234 = vst.msk [vmem:[%s9] sm:$0x3] %vm4233, %v4232
    %vm4235 = vcmask 254976
    %4236 = vst.msk [vmem:[#allocation10] sm:$0x3] %vm4235, %v4133
    // Predicated region
    $region46: #{tpu_custom_call.1} parent=1 // pred_check
      _
    $region47: #{tpu_custom_call.1} parent=1 // pred_check_branch
      %4238 = sbr.rel (0) target = $region49
    $region48: #{tpu_custom_call.1} parent=1 // pred_region
      _
    $region49: #{tpu_custom_call.1} parent=1 // pred_fallthru
      _
    // Predicated region
    $region50: #{tpu_custom_call.1} parent=1 // pred_check
      _
    $region51: #{tpu_custom_call.1} parent=1 // pred_check_branch
      %4240 = sbr.rel (0) target = $region53
    $region52: #{tpu_custom_call.1} parent=1 // pred_region
      %s4242 = ssub.s32 32, 32
      %4243 = vsyncadd [#allocation7], %s4242
      %s4245 = sshll.u32 [#allocation10], 4
      %s4246 = int_to_ptr.vmem [resolvable:$true] %s4245
      %4248 = dma.vmem_to_hbm [thread:$0]  %s4246, 32, %s10, [#allocation7]
    $region53: #{tpu_custom_call.1} parent=1 // pred_fallthru
      _
    // Predicated region
    $region54: #{tpu_custom_call.1} parent=1 // pred_check
      _
    $region55: #{tpu_custom_call.1} parent=1 // pred_check_branch
      %4250 = sbr.rel (0) target = $region57
    $region56: #{tpu_custom_call.1} parent=1 // pred_region
      _
    $region57: #{tpu_custom_call.1} parent=1 // pred_fallthru
      _
    // Predicated region
    $region58: #{tpu_custom_call.1} parent=1 // pred_check
      _
    $region59: #{tpu_custom_call.1} parent=1 // pred_check_branch
      %4252 = sbr.rel (0) target = $region61
    $region60: #{tpu_custom_call.1} parent=1 // pred_region
      %4253 = dma.done [#allocation7], 32
    $region61: #{tpu_custom_call.1} parent=1 // pred_fallthru
      _
    %4254 = vsyncpa [#allocation6], 1
    %4255 = vsyncpa [#allocation9], 1
    %4256 = vsyncpa [#allocation7], 1

</llo_original>
